<compile_context>
chip_gen: v5e
topology: v5e:2x2
jax: 0.10.0
libtpu: 0.0.40
codegen_flags: <defaults>
</compile_context>

<pallas_src>
import functools

import jax
import jax.numpy as jnp
from jax.experimental import pallas as pl
from jax.experimental.pallas import tpu as pltpu


# --------------------------------- kernels ------------------------------------


def conv3x3_bn_fused_kernel(xm_ref, xt_ref, xb_ref, sc_ref, sh_ref, w_ref,
                            out_ref, stats_ref, *, TH, W, C_in, C_out,
                            apply_affine, apply_relu):
    """3x3 conv (stride 1, zero pad 1) on a TH-row tile, with an optional per-channel
    affine (+ReLU) of the PREVIOUS layer's BN fused into the input path, plus per-tile
    BN partial stats for THIS layer's BN.

    xm_ref : (1, TH, W, C_in)  rows [h*TH, h*TH+TH) of the unpadded NHWC input
    xt_ref : (1, 1,  W, C_in)  row max(h*TH-1, 0)     (top halo; zero-masked at edge)
    xb_ref : (1, 1,  W, C_in)  row min(h*TH+TH, H-1)  (bottom halo; zero-masked at edge)
    sc_ref : (1, C_in) f32     fused input scale  (ignored if not apply_affine)
    sh_ref : (1, C_in) f32     fused input shift  (ignored if not apply_affine)
    w_ref  : (9*C_in, C_out)   taps flattened (ky, kx, ci) row-major, MXU dtype
    out    : (1, TH, W, C_out) conv output tile (storage dtype, no bias)
    stats  : (1, 1, 2, C_out)  per-tile [sum, sum_of_squares] per channel (f32)
    """
    h = pl.program_id(1)
    nh = pl.num_programs(1)

    # (TH+2)-row window: [halo_top, main, halo_bottom].
    z = jnp.concatenate([xt_ref[0], xm_ref[0], xb_ref[0]], axis=0)   # (TH+2, W, Cin)

    if apply_affine:
        zf = z.astype(jnp.float32) * sc_ref[0] + sh_ref[0]           # BN of prev layer
        if apply_relu:
            zf = jnp.maximum(zf, 0.0)
        z = zf.astype(w_ref.dtype)
    else:
        z = z.astype(w_ref.dtype)        # cast the UN-expanded tile, not the 9x patch

    # Zero the out-of-image halo rows (the conv's zero padding along H).
    ridx = jax.lax.broadcasted_iota(jnp.int32, (TH + 2, 1, 1), 0)
    row_ok = jnp.logical_and(jnp.logical_or(h > 0, ridx > 0),
                             jnp.logical_or(h < nh - 1, ridx < TH + 1))
    z = jnp.where(row_ok, z, jnp.zeros_like(z))

    # Column-shifted copies for the kx=0 / kx=2 taps (zero padding along W).
    cidx = jax.lax.broadcasted_iota(jnp.int32, (1, W, 1), 1)
    z_l = jnp.where(cidx >= 1, pltpu.roll(z, shift=1, axis=1), jnp.zeros_like(z))
    z_r = jnp.where(cidx <= W - 2, pltpu.roll(z, shift=W - 1, axis=1),
                    jnp.zeros_like(z))
    cols = (z_l, z, z_r)

    # im2col: 9 taps concatenated along the lane axis -> one fused MXU matmul.
    taps = [cols[kx][ky:ky + TH] for ky in range(3) for kx in range(3)]
    patch = jnp.concatenate(taps, axis=-1).reshape(TH * W, 9 * C_in)

    acc = jnp.dot(patch, w_ref[...], preferred_element_type=jnp.float32)

    out_ref[...] = acc.reshape(1, TH, W, C_out).astype(out_ref.dtype)

    ssum = jnp.sum(acc, axis=0, keepdims=True)            # (1, C_out)
    ssq = jnp.sum(acc * acc, axis=0, keepdims=True)       # (1, C_out)
    stats_ref[0, 0, :, :] = jnp.concatenate([ssum, ssq], axis=0)


def bn_act_kernel(y_ref, sc_ref, sh_ref, o_ref, *, relu):
    """Elementwise per-channel scale/shift (+ optional ReLU) on a big streaming tile."""
    z = y_ref[...].astype(jnp.float32) * sc_ref[0] + sh_ref[0]
    if relu:
        z = jnp.maximum(z, 0.0)
    o_ref[...] = z.astype(o_ref.dtype)


# ------------------------------ tiling heuristics ------------------------------


def _vmem_limit_bytes():
    """Generation-aware scoped VMEM limit (~48 MiB on v7x, ~96 MiB on v5e/v6e)."""
    cap = 64 << 20                      # conservative fallback if the query fails
    try:
        info = pltpu.get_tpu_info()
        cap = int(getattr(info, "vmem_capacity_bytes", cap))
    except Exception:
        pass
    return min((cap * 3) // 4, 112 << 20)


def _row_block_candidates(H):
    cands = [th for th in range(8, H + 1, 8) if H % th == 0]
    return cands if cands else [H]


def _pick_conv_row_block(N, H, W, C_in, C_out, store_bytes, compute_bytes, budget):
    """Largest row block whose working set fits, keeping >=2 parallel grid steps."""
    cands = _row_block_candidates(H)

    def need(th):
        in_tile = (th + 2) * W * C_in * store_bytes            # main window
        halo = 2 * W * C_in * store_bytes                      # two halo rows
        out_tile = th * W * C_out * store_bytes
        stats = 2 * C_out * 4
        weight = 9 * C_in * C_out * compute_bytes              # resident (const index)
        z_copies = 3 * (th + 2) * W * C_in * compute_bytes     # z, z_l, z_r
        patch = th * W * 9 * C_in * compute_bytes              # im2col patch
        acc = th * W * C_out * 4                               # f32 accumulator
        return (2 * (in_tile + halo + out_tile + stats)        # double-buffered I/O
                + weight + z_copies + patch + acc + (1 << 20))

    fits = [th for th in cands if need(th) <= budget] or [cands[0]]
    good = [th for th in fits if N * (H // th) >= 2]           # keep both v7x TCs busy
    return max(good) if good else max(fits)


def _pick_bn_row_block(N, H, W, C, store_bytes, budget):
    cands = _row_block_candidates(H)

    def need(rb):
        return 2 * rb * W * C * (store_bytes + 4) + (1 << 20)

    fits = [rb for rb in cands if need(rb) <= budget] or [cands[0]]
    good = [rb for rb in fits if N * (H // rb) >= 2]
    return max(good) if good else max(fits)


# --------------------------------- wrappers ------------------------------------


def _conv3x3_fused(x, sc, sh, w_flat, *, apply_affine, apply_relu, th,
                   out_dtype, compiler_params):
    """x: (N, H, W, C_in) NHWC;  w_flat: (9*C_in, C_out).  Returns (y, stats)."""
    N, H, W, C_in = x.shape
    C_out = w_flat.shape[-1]
    hb = H // th
    kernel = functools.partial(conv3x3_bn_fused_kernel, TH=th, W=W, C_in=C_in,
                               C_out=C_out, apply_affine=apply_affine,
                               apply_relu=apply_relu)
    return pl.pallas_call(
        kernel,
        grid=(N, hb),
        in_specs=[
            pl.BlockSpec((1, th, W, C_in), lambda n, h: (n, h, 0, 0)),
            pl.BlockSpec((1, 1, W, C_in),
                         lambda n, h: (n, jnp.maximum(h * th - 1, 0), 0, 0)),
            pl.BlockSpec((1, 1, W, C_in),
                         lambda n, h: (n, jnp.minimum(h * th + th, H - 1), 0, 0)),
            pl.BlockSpec((1, C_in), lambda n, h: (0, 0)),
            pl.BlockSpec((1, C_in), lambda n, h: (0, 0)),
            pl.BlockSpec((9 * C_in, C_out), lambda n, h: (0, 0)),
        ],
        out_specs=(
            pl.BlockSpec((1, th, W, C_out), lambda n, h: (n, h, 0, 0)),
            pl.BlockSpec((1, 1, 2, C_out), lambda n, h: (n, h, 0, 0)),
        ),
        out_shape=(
            jax.ShapeDtypeStruct((N, H, W, C_out), out_dtype),
            jax.ShapeDtypeStruct((N, hb, 2, C_out), jnp.float32),
        ),
        compiler_params=compiler_params,
    )(x, x, x, sc, sh, w_flat)


def _bn_apply(y, sc, sh, *, relu, rb, out_dtype, compiler_params):
    """y: (N, H, W, C);  sc/sh: (1, C) f32 per-channel coefficients."""
    N, H, W, C = y.shape
    hb = H // rb
    kernel = functools.partial(bn_act_kernel, relu=relu)
    return pl.pallas_call(
        kernel,
        grid=(N, hb),
        in_specs=[
            pl.BlockSpec((1, rb, W, C), lambda n, h: (n, h, 0, 0)),
            pl.BlockSpec((1, C), lambda n, h: (0, 0)),
            pl.BlockSpec((1, C), lambda n, h: (0, 0)),
        ],
        out_specs=pl.BlockSpec((1, rb, W, C), lambda n, h: (n, h, 0, 0)),
        out_shape=jax.ShapeDtypeStruct((N, H, W, C), out_dtype),
        compiler_params=compiler_params,
    )(y, sc, sh)


def bottleneck_forward(x_nchw, params, *, eps=1e-5, compute_dtype=jnp.bfloat16):
    """Pallas forward.  x_nchw: (N, C_in, H, W) f32 -> (N, C_out, H, W) f32.

    `compute_dtype` is both the MXU input dtype and the intermediate storage dtype
    (bf16 by default; f32 gives the exactness-check path).
    """
    # NCHW -> NHWC; cast fuses into the transpose so intermediates are already narrow.
    x = jnp.transpose(x_nchw, (0, 2, 3, 1)).astype(compute_dtype)
    N, H, W, C_in = x.shape
    C1 = params["w1"].shape[-1]
    C2 = params["w2"].shape[-1]

    vmem_limit = _vmem_limit_bytes()
    tile_budget = (vmem_limit * 9) // 10
    cparams = pltpu.CompilerParams(
        dimension_semantics=("parallel", "parallel"),
        vmem_limit_bytes=int(vmem_limit))

    cb = jnp.dtype(compute_dtype).itemsize
    sb = cb  # storage dtype == compute dtype

    # Hoisted once: (3,3,Ci,Co) HWIO -> (9*Ci, Co), cast for the MXU.
    w1 = params["w1"].reshape(9 * C_in, C1).astype(compute_dtype)
    w2 = params["w2"].reshape(9 * C1, C2).astype(compute_dtype)

    count = float(N * H * W)

    def bn_coeffs(stats, gamma, beta):
        s = jnp.sum(stats, axis=(0, 1))                 # reduce tiny per-tile partials
        mean = s[0] / count
        var = s[1] / count - mean * mean                # biased var (training-mode BN)
        scale = gamma * jax.lax.rsqrt(var + eps)
        shift = beta - mean * scale
        return scale.reshape(1, -1), shift.reshape(1, -1)

    # Layer 1: conv1 (+ BN1 partial stats).  Conv bias dropped: cancelled by batch BN.
    ones = jnp.ones((1, C_in), jnp.float32)             # placeholders (affine disabled)
    zeros = jnp.zeros((1, C_in), jnp.float32)
    th1 = _pick_conv_row_block(N, H, W, C_in, C1, sb, cb, tile_budget)
    y1, st1 = _conv3x3_fused(x, ones, zeros, w1, apply_affine=False,
                             apply_relu=False, th=th1, out_dtype=compute_dtype,
                             compiler_params=cparams)
    sc1, sh1 = bn_coeffs(st1, params["g1"], params["be1"])

    # Layer 2: BN1 + ReLU + zero-pad fused into conv2's input path (+ BN2 stats).
    th2 = _pick_conv_row_block(N, H, W, C1, C2, sb, cb, tile_budget)
    y2, st2 = _conv3x3_fused(y1, sc1, sh1, w2, apply_affine=True,
                             apply_relu=True, th=th2, out_dtype=compute_dtype,
                             compiler_params=cparams)
    sc2, sh2 = bn_coeffs(st2, params["g2"], params["be2"])

    # BN2 apply: pure elementwise streaming pass with the biggest block that fits.
    rb = _pick_bn_row_block(N, H, W, C2, sb, tile_budget)
    out = _bn_apply(y2, sc2, sh2, relu=False, rb=rb, out_dtype=jnp.float32,
                    compiler_params=cparams)

    return jnp.transpose(out, (0, 3, 1, 2))             # NHWC -> NCHW


# ----------------------------- reference & test --------------------------------


def bottleneck_reference(x_nchw, params, *, eps=1e-5, compute_dtype=jnp.float32,
                         use_bias=True):
    """Pure-JAX reference.  With compute_dtype=f32 / use_bias=True it is the PyTorch
    module (training-mode BN); with bf16 / use_bias=False it mirrors the kernel's
    quantization points for a tight bf16 check."""
    x = jnp.transpose(x_nchw, (0, 2, 3, 1)).astype(jnp.float32)

    def q(a):
        return a.astype(compute_dtype).astype(jnp.float32)

    def conv(a, w, b):
        y = jax.lax.conv_general_dilated(
            q(a), q(w), window_strides=(1, 1), padding=((1, 1), (1, 1)),
            dimension_numbers=("NHWC", "HWIO", "NHWC"))
        return y + b if use_bias else y

    def bn_stats(y):
        m = jnp.mean(y, axis=(0, 1, 2))
        v = jnp.mean(y * y, axis=(0, 1, 2)) - m * m
        return m, v

    y1 = conv(x, params["w1"], params["b1"])
    m1, v1 = bn_stats(y1)
    s1 = params["g1"] * jax.lax.rsqrt(v1 + eps)
    r1 = jnp.maximum(q(y1) * s1 + (params["be1"] - m1 * s1), 0.0)

    y2 = conv(r1, params["w2"], params["b2"])
    m2, v2 = bn_stats(y2)
    s2 = params["g2"] * jax.lax.rsqrt(v2 + eps)
    out = q(y2) * s2 + (params["be2"] - m2 * s2)
    return jnp.transpose(out, (0, 3, 1, 2))


def init_params(key, c_in, c_out):
    """Deterministic synthetic parameters (shapes from Bottleneck.__init__)."""
    ks = jax.random.split(key, 8)
    fan1 = 9 * c_in
    fan2 = 9 * c_out
    return {
        # conv weights in HWIO layout: (3, 3, C_in, C_out)
        "w1": jax.random.normal(ks[0], (3, 3, c_in, c_out), jnp.float32) / jnp.sqrt(fan1),
        "b1": jax.random.normal(ks[1], (c_out,), jnp.float32) * 0.05,
        "g1": 1.0 + 0.1 * jax.random.normal(ks[2], (c_out,), jnp.float32),
        "be1": 0.1 * jax.random.normal(ks[3], (c_out,), jnp.float32),
        "w2": jax.random.normal(ks[4], (3, 3, c_out, c_out), jnp.float32) / jnp.sqrt(fan2),
        "b2": jax.random.normal(ks[5], (c_out,), jnp.float32) * 0.05,
        "g2": 1.0 + 0.1 * jax.random.normal(ks[6], (c_out,), jnp.float32),
        "be2": 0.1 * jax.random.normal(ks[7], (c_out,), jnp.float32),
    }


if __name__ == "__main__":
    key = jax.random.PRNGKey(0)
    k_x, k_p = jax.random.split(key)

    N, C_IN, H, W = 2, 4, 16, 16
    C_OUT = 8

    x = jax.random.normal(k_x, (N, C_IN, H, W), jnp.float32)
    params = init_params(k_p, C_IN, C_OUT)

    fwd_f32 = jax.jit(functools.partial(bottleneck_forward, compute_dtype=jnp.float32))
    fwd_bf16 = jax.jit(functools.partial(bottleneck_forward, compute_dtype=jnp.bfloat16))

    out_f32 = jax.block_until_ready(fwd_f32(x, params))      # exactness-check path
    out_bf16 = jax.block_until_ready(fwd_bf16(x, params))    # default perf path

    ref = bottleneck_reference(x, params)                                      # the module
    ref_bf16 = bottleneck_reference(x, params, compute_dtype=jnp.bfloat16,     # kernel mirror
                                    use_bias=False)

    assert out_f32.shape == (N, C_OUT, H, W), out_f32.shape
    assert jnp.allclose(out_f32, ref, atol=1e-3, rtol=1e-3), \
        float(jnp.max(jnp.abs(out_f32 - ref)))
    # bf16 path vs a reference that mirrors the kernel's quantization points (tight).
    assert jnp.allclose(out_bf16, ref_bf16, atol=1e-2, rtol=1e-2), \
        float(jnp.max(jnp.abs(out_bf16 - ref_bf16)))

    print("KERNEL_OK")
</pallas_src>

<mosaic_0001>
module attributes {stable_mosaic.version = 11 : i64} {
  func.func @conv3x3_bn_fused_kernel(%arg0: i32, %arg1: i32, %arg2: memref<1x16x16x4xf32, #tpu.memory_space<vmem>>, %arg3: memref<1x1x16x4xf32, #tpu.memory_space<vmem>>, %arg4: memref<1x1x16x4xf32, #tpu.memory_space<vmem>>, %arg5: memref<1x4xf32, #tpu.memory_space<vmem>>, %arg6: memref<1x4xf32, #tpu.memory_space<vmem>>, %arg7: memref<36x8xf32, #tpu.memory_space<vmem>>, %arg8: memref<1x16x16x8xf32, #tpu.memory_space<vmem>>, %arg9: memref<1x1x2x8xf32, #tpu.memory_space<vmem>>) attributes {dimension_semantics = [#tpu.dimension_semantics<parallel>, #tpu.dimension_semantics<parallel>], iteration_bounds = array<i64: 2, 1>, scalar_prefetch = 0 : i64, scratch_operands = 0 : i64, tpu.core_type = #tpu.core_type<tc>, window_params = [{transform_indices = @transform_0, window_bounds = array<i64: 1, 16, 16, 4>}, {transform_indices = @transform_1, window_bounds = array<i64: 1, 1, 16, 4>}, {transform_indices = @transform_2, window_bounds = array<i64: 1, 1, 16, 4>}, {pipeline_mode = #tpu.pipeline_mode<synchronous>, transform_indices = @transform_3, window_bounds = array<i64: 1, 4>}, {pipeline_mode = #tpu.pipeline_mode<synchronous>, transform_indices = @transform_4, window_bounds = array<i64: 1, 4>}, {pipeline_mode = #tpu.pipeline_mode<synchronous>, transform_indices = @transform_5, window_bounds = array<i64: 36, 8>}, {transform_indices = @transform_6, window_bounds = array<i64: 1, 16, 16, 8>}, {transform_indices = @transform_7, window_bounds = array<i64: 1, 1, 2, 8>}]} {
    %c0 = arith.constant 0 : index
    %c0_0 = arith.constant 0 : index
    %c0_1 = arith.constant 0 : index
    %c0_2 = arith.constant 0 : index
    %0 = vector.load %arg3[%c0, %c0_0, %c0_1, %c0_2] : memref<1x1x16x4xf32, #tpu.memory_space<vmem>>, vector<1x1x16x4xf32>
    %1 = vector.shape_cast %0 : vector<1x1x16x4xf32> to vector<1x16x4xf32>
    %c0_3 = arith.constant 0 : index
    %c0_4 = arith.constant 0 : index
    %c0_5 = arith.constant 0 : index
    %c0_6 = arith.constant 0 : index
    %2 = vector.load %arg2[%c0_3, %c0_4, %c0_5, %c0_6] : memref<1x16x16x4xf32, #tpu.memory_space<vmem>>, vector<1x16x16x4xf32>
    %3 = vector.shape_cast %2 : vector<1x16x16x4xf32> to vector<16x16x4xf32>
    %c0_7 = arith.constant 0 : index
    %c0_8 = arith.constant 0 : index
    %c0_9 = arith.constant 0 : index
    %c0_10 = arith.constant 0 : index
    %4 = vector.load %arg4[%c0_7, %c0_8, %c0_9, %c0_10] : memref<1x1x16x4xf32, #tpu.memory_space<vmem>>, vector<1x1x16x4xf32>
    %5 = vector.shape_cast %4 : vector<1x1x16x4xf32> to vector<1x16x4xf32>
    %6 = tpu.concatenate %1, %3, %5 in 0 : vector<1x16x4xf32>, vector<16x16x4xf32>, vector<1x16x4xf32> -> vector<18x16x4xf32>
    %7 = tpu.iota {dimensions = array<i32: 0>} : vector<18x1x1xi32>
    %c0_i32 = arith.constant 0 : i32
    %8 = arith.cmpi sgt, %arg1, %c0_i32 : i32
    %c0_i32_11 = arith.constant 0 : i32
    %9 = vector.broadcast %c0_i32_11 : i32 to vector<18x1x1xi32>
    %10 = arith.cmpi sgt, %7, %9 : vector<18x1x1xi32>
    %11 = vector.broadcast %8 : i1 to vector<18x1x1xi1>
    %12 = arith.ori %11, %10 : vector<18x1x1xi1>
    %c0_i32_12 = arith.constant 0 : i32
    %13 = arith.cmpi slt, %arg1, %c0_i32_12 : i32
    %c17_i32 = arith.constant 17 : i32
    %14 = vector.broadcast %c17_i32 : i32 to vector<18x1x1xi32>
    %15 = arith.cmpi slt, %7, %14 : vector<18x1x1xi32>
    %16 = vector.broadcast %13 : i1 to vector<18x1x1xi1>
    %17 = arith.ori %16, %15 : vector<18x1x1xi1>
    %18 = arith.andi %12, %17 : vector<18x1x1xi1>
    %cst = arith.constant 0.000000e+00 : f32
    %19 = vector.broadcast %cst : f32 to vector<18x16x4xf32>
    %20 = vector.shape_cast %18 : vector<18x1x1xi1> to vector<18x1x1xi1>
    %21 = vector.broadcast %20 : vector<18x1x1xi1> to vector<18x16x4xi1>
    %22 = arith.select %21, %6, %19 : vector<18x16x4xi1>, vector<18x16x4xf32>
    %23 = tpu.iota {dimensions = array<i32: 1>} : vector<1x16x1xi32>
    %c1_i32 = arith.constant 1 : i32
    %24 = vector.broadcast %c1_i32 : i32 to vector<1x16x1xi32>
    %25 = arith.cmpi sge, %23, %24 : vector<1x16x1xi32>
    %c1_i32_13 = arith.constant 1 : i32
    %26 = tpu.dynamic_rotate %22 by %c1_i32_13 dim 1 : vector<18x16x4xf32>, i32 -> vector<18x16x4xf32>
    %cst_14 = arith.constant 0.000000e+00 : f32
    %27 = vector.broadcast %cst_14 : f32 to vector<18x16x4xf32>
    %28 = vector.shape_cast %25 : vector<1x16x1xi1> to vector<1x16x1xi1>
    %29 = vector.broadcast %28 : vector<1x16x1xi1> to vector<18x16x4xi1>
    %30 = arith.select %29, %26, %27 : vector<18x16x4xi1>, vector<18x16x4xf32>
    %c14_i32 = arith.constant 14 : i32
    %31 = vector.broadcast %c14_i32 : i32 to vector<1x16x1xi32>
    %32 = arith.cmpi sle, %23, %31 : vector<1x16x1xi32>
    %c15_i32 = arith.constant 15 : i32
    %33 = tpu.dynamic_rotate %22 by %c15_i32 dim 1 : vector<18x16x4xf32>, i32 -> vector<18x16x4xf32>
    %cst_15 = arith.constant 0.000000e+00 : f32
    %34 = vector.broadcast %cst_15 : f32 to vector<18x16x4xf32>
    %35 = vector.shape_cast %32 : vector<1x16x1xi1> to vector<1x16x1xi1>
    %36 = vector.broadcast %35 : vector<1x16x1xi1> to vector<18x16x4xi1>
    %37 = arith.select %36, %33, %34 : vector<18x16x4xi1>, vector<18x16x4xf32>
    %38 = vector.extract_strided_slice %30 {offsets = [0, 0, 0], sizes = [16, 16, 4], strides = [1, 1, 1]} : vector<18x16x4xf32> to vector<16x16x4xf32>
    %39 = vector.extract_strided_slice %22 {offsets = [0, 0, 0], sizes = [16, 16, 4], strides = [1, 1, 1]} : vector<18x16x4xf32> to vector<16x16x4xf32>
    %40 = vector.extract_strided_slice %37 {offsets = [0, 0, 0], sizes = [16, 16, 4], strides = [1, 1, 1]} : vector<18x16x4xf32> to vector<16x16x4xf32>
    %41 = vector.extract_strided_slice %30 {offsets = [1, 0, 0], sizes = [16, 16, 4], strides = [1, 1, 1]} : vector<18x16x4xf32> to vector<16x16x4xf32>
    %42 = vector.extract_strided_slice %22 {offsets = [1, 0, 0], sizes = [16, 16, 4], strides = [1, 1, 1]} : vector<18x16x4xf32> to vector<16x16x4xf32>
    %43 = vector.extract_strided_slice %37 {offsets = [1, 0, 0], sizes = [16, 16, 4], strides = [1, 1, 1]} : vector<18x16x4xf32> to vector<16x16x4xf32>
    %44 = vector.extract_strided_slice %30 {offsets = [2, 0, 0], sizes = [16, 16, 4], strides = [1, 1, 1]} : vector<18x16x4xf32> to vector<16x16x4xf32>
    %45 = vector.extract_strided_slice %22 {offsets = [2, 0, 0], sizes = [16, 16, 4], strides = [1, 1, 1]} : vector<18x16x4xf32> to vector<16x16x4xf32>
    %46 = vector.extract_strided_slice %37 {offsets = [2, 0, 0], sizes = [16, 16, 4], strides = [1, 1, 1]} : vector<18x16x4xf32> to vector<16x16x4xf32>
    %47 = tpu.concatenate %38, %39, %40, %41, %42, %43, %44, %45, %46 in 2 : vector<16x16x4xf32>, vector<16x16x4xf32>, vector<16x16x4xf32>, vector<16x16x4xf32>, vector<16x16x4xf32>, vector<16x16x4xf32>, vector<16x16x4xf32>, vector<16x16x4xf32>, vector<16x16x4xf32> -> vector<16x16x36xf32>
    %48 = vector.shape_cast %47 : vector<16x16x36xf32> to vector<256x36xf32>
    %c0_16 = arith.constant 0 : index
    %c0_17 = arith.constant 0 : index
    %49 = vector.load %arg7[%c0_16, %c0_17] : memref<36x8xf32, #tpu.memory_space<vmem>>, vector<36x8xf32>
    %cst_18 = arith.constant dense<0.000000e+00> : vector<256x8xf32>
    %50 = tpu.matmul %48, %49, %cst_18 {dimension_numbers = #tpu.dot_dimension_numbers<[1], [0], [0], [1], [0, 0, 1, 1], [], []>} : vector<256x36xf32>, vector<36x8xf32>, vector<256x8xf32> -> vector<256x8xf32>
    %51 = vector.shape_cast %50 : vector<256x8xf32> to vector<1x16x16x8xf32>
    %c0_19 = arith.constant 0 : index
    %c0_20 = arith.constant 0 : index
    %c0_21 = arith.constant 0 : index
    %c0_22 = arith.constant 0 : index
    %52 = vector.load %arg8[%c0_19, %c0_20, %c0_21, %c0_22] : memref<1x16x16x8xf32, #tpu.memory_space<vmem>>, vector<1x16x16x8xf32>
    tpu.vector_store %arg8[%c0_19, %c0_20, %c0_21, %c0_22], %51 {strides = array<i32>} : memref<1x16x16x8xf32, #tpu.memory_space<vmem>>, vector<1x16x16x8xf32>,
    %cst_23 = arith.constant dense<0.000000e+00> : vector<8xf32>
    %53 = vector.multi_reduction <add>, %50, %cst_23 [0] : vector<256x8xf32> to vector<8xf32>
    %54 = vector.shape_cast %53 : vector<8xf32> to vector<1x8xf32>
    %55 = arith.mulf %50, %50 : vector<256x8xf32>
    %cst_24 = arith.constant dense<0.000000e+00> : vector<8xf32>
    %56 = vector.multi_reduction <add>, %55, %cst_24 [0] : vector<256x8xf32> to vector<8xf32>
    %57 = vector.shape_cast %56 : vector<8xf32> to vector<1x8xf32>
    %58 = tpu.concatenate %54, %57 in 0 : vector<1x8xf32>, vector<1x8xf32> -> vector<2x8xf32>
    %c0_25 = arith.constant 0 : index
    %c0_26 = arith.constant 0 : index
    %c0_27 = arith.constant 0 : index
    %c0_28 = arith.constant 0 : index
    %59 = vector.load %arg9[%c0_25, %c0_26, %c0_27, %c0_28] : memref<1x1x2x8xf32, #tpu.memory_space<vmem>>, vector<1x1x2x8xf32>
    %60 = vector.shape_cast %59 : vector<1x1x2x8xf32> to vector<2x8xf32>
    %61 = vector.shape_cast %58 : vector<2x8xf32> to vector<1x1x2x8xf32>
    tpu.vector_store %arg9[%c0_25, %c0_26, %c0_27, %c0_28], %61 {strides = array<i32>} : memref<1x1x2x8xf32, #tpu.memory_space<vmem>>, vector<1x1x2x8xf32>,
    return
  }
  func.func @transform_0(%arg0: i32, %arg1: i32) -> (i32, i32, i32, i32) {
    %c0_i32 = arith.constant 0 : i32
    %c0_i32_0 = arith.constant 0 : i32
    %c0_i32_1 = arith.constant 0 : i32
    return %arg0, %arg1, %c0_i32, %c0_i32_0 : i32, i32, i32, i32
  }
  func.func @transform_1(%arg0: i32, %arg1: i32) -> (i32, i32, i32, i32) {
    %c16_i32 = arith.constant 16 : i32
    %0 = arith.muli %arg1, %c16_i32 : i32
    %c1_i32 = arith.constant 1 : i32
    %1 = arith.subi %0, %c1_i32 : i32
    %c0_i32 = arith.constant 0 : i32
    %2 = arith.maxsi %1, %c0_i32 : i32
    %c0_i32_0 = arith.constant 0 : i32
    %c0_i32_1 = arith.constant 0 : i32
    %c0_i32_2 = arith.constant 0 : i32
    return %arg0, %2, %c0_i32_0, %c0_i32_1 : i32, i32, i32, i32
  }
  func.func @transform_2(%arg0: i32, %arg1: i32) -> (i32, i32, i32, i32) {
    %c16_i32 = arith.constant 16 : i32
    %0 = arith.muli %arg1, %c16_i32 : i32
    %c16_i32_0 = arith.constant 16 : i32
    %1 = arith.addi %0, %c16_i32_0 : i32
    %c15_i32 = arith.constant 15 : i32
    %2 = arith.minsi %1, %c15_i32 : i32
    %c0_i32 = arith.constant 0 : i32
    %c0_i32_1 = arith.constant 0 : i32
    %c0_i32_2 = arith.constant 0 : i32
    return %arg0, %2, %c0_i32, %c0_i32_1 : i32, i32, i32, i32
  }
  func.func @transform_3(%arg0: i32, %arg1: i32) -> (i32, i32) {
    %c0_i32 = arith.constant 0 : i32
    %c0_i32_0 = arith.constant 0 : i32
    %c0_i32_1 = arith.constant 0 : i32
    return %c0_i32, %c0_i32_0 : i32, i32
  }
  func.func @transform_4(%arg0: i32, %arg1: i32) -> (i32, i32) {
    %c0_i32 = arith.constant 0 : i32
    %c0_i32_0 = arith.constant 0 : i32
    %c0_i32_1 = arith.constant 0 : i32
    return %c0_i32, %c0_i32_0 : i32, i32
  }
  func.func @transform_5(%arg0: i32, %arg1: i32) -> (i32, i32) {
    %c0_i32 = arith.constant 0 : i32
    %c0_i32_0 = arith.constant 0 : i32
    %c0_i32_1 = arith.constant 0 : i32
    return %c0_i32, %c0_i32_0 : i32, i32
  }
  func.func @transform_6(%arg0: i32, %arg1: i32) -> (i32, i32, i32, i32) {
    %c0_i32 = arith.constant 0 : i32
    %c0_i32_0 = arith.constant 0 : i32
    %c0_i32_1 = arith.constant 0 : i32
    return %arg0, %arg1, %c0_i32, %c0_i32_0 : i32, i32, i32, i32
  }
  func.func @transform_7(%arg0: i32, %arg1: i32) -> (i32, i32, i32, i32) {
    %c0_i32 = arith.constant 0 : i32
    %c0_i32_0 = arith.constant 0 : i32
    %c0_i32_1 = arith.constant 0 : i32
    return %arg0, %arg1, %c0_i32, %c0_i32_0 : i32, i32, i32, i32
  }
}

module attributes {stable_mosaic.version = 11 : i64} {
  func.func @bn_act_kernel(%arg0: i32, %arg1: i32, %arg2: memref<1x16x16x8xf32, #tpu.memory_space<vmem>>, %arg3: memref<1x8xf32, #tpu.memory_space<vmem>>, %arg4: memref<1x8xf32, #tpu.memory_space<vmem>>, %arg5: memref<1x16x16x8xf32, #tpu.memory_space<vmem>>) attributes {dimension_semantics = [#tpu.dimension_semantics<parallel>, #tpu.dimension_semantics<parallel>], iteration_bounds = array<i64: 2, 1>, scalar_prefetch = 0 : i64, scratch_operands = 0 : i64, tpu.core_type = #tpu.core_type<tc>, window_params = [{transform_indices = @transform_0, window_bounds = array<i64: 1, 16, 16, 8>}, {pipeline_mode = #tpu.pipeline_mode<synchronous>, transform_indices = @transform_1, window_bounds = array<i64: 1, 8>}, {pipeline_mode = #tpu.pipeline_mode<synchronous>, transform_indices = @transform_2, window_bounds = array<i64: 1, 8>}, {transform_indices = @transform_3, window_bounds = array<i64: 1, 16, 16, 8>}]} {
    %c0 = arith.constant 0 : index
    %c0_0 = arith.constant 0 : index
    %c0_1 = arith.constant 0 : index
    %c0_2 = arith.constant 0 : index
    %0 = vector.load %arg2[%c0, %c0_0, %c0_1, %c0_2] : memref<1x16x16x8xf32, #tpu.memory_space<vmem>>, vector<1x16x16x8xf32>
    %c0_3 = arith.constant 0 : index
    %c0_4 = arith.constant 0 : index
    %1 = vector.load %arg3[%c0_3, %c0_4] : memref<1x8xf32, #tpu.memory_space<vmem>>, vector<1x8xf32>
    %2 = vector.shape_cast %1 : vector<1x8xf32> to vector<8xf32>
    %3 = vector.shape_cast %2 : vector<8xf32> to vector<1x1x1x8xf32>
    %4 = vector.broadcast %3 : vector<1x1x1x8xf32> to vector<1x16x16x8xf32>
    %5 = arith.mulf %0, %4 : vector<1x16x16x8xf32>
    %c0_5 = arith.constant 0 : index
    %c0_6 = arith.constant 0 : index
    %6 = vector.load %arg4[%c0_5, %c0_6] : memref<1x8xf32, #tpu.memory_space<vmem>>, vector<1x8xf32>
    %7 = vector.shape_cast %6 : vector<1x8xf32> to vector<8xf32>
    %8 = vector.shape_cast %7 : vector<8xf32> to vector<1x1x1x8xf32>
    %9 = vector.broadcast %8 : vector<1x1x1x8xf32> to vector<1x16x16x8xf32>
    %10 = arith.addf %5, %9 : vector<1x16x16x8xf32>
    %c0_7 = arith.constant 0 : index
    %c0_8 = arith.constant 0 : index
    %c0_9 = arith.constant 0 : index
    %c0_10 = arith.constant 0 : index
    %11 = vector.load %arg5[%c0_7, %c0_8, %c0_9, %c0_10] : memref<1x16x16x8xf32, #tpu.memory_space<vmem>>, vector<1x16x16x8xf32>
    tpu.vector_store %arg5[%c0_7, %c0_8, %c0_9, %c0_10], %10 {strides = array<i32>} : memref<1x16x16x8xf32, #tpu.memory_space<vmem>>, vector<1x16x16x8xf32>,
    return
  }
  func.func @transform_0(%arg0: i32, %arg1: i32) -> (i32, i32, i32, i32) {
    %c0_i32 = arith.constant 0 : i32
    %c0_i32_0 = arith.constant 0 : i32
    %c0_i32_1 = arith.constant 0 : i32
    return %arg0, %arg1, %c0_i32, %c0_i32_0 : i32, i32, i32, i32
  }
  func.func @transform_1(%arg0: i32, %arg1: i32) -> (i32, i32) {
    %c0_i32 = arith.constant 0 : i32
    %c0_i32_0 = arith.constant 0 : i32
    %c0_i32_1 = arith.constant 0 : i32
    return %c0_i32, %c0_i32_0 : i32, i32
  }
  func.func @transform_2(%arg0: i32, %arg1: i32) -> (i32, i32) {
    %c0_i32 = arith.constant 0 : i32
    %c0_i32_0 = arith.constant 0 : i32
    %c0_i32_1 = arith.constant 0 : i32
    return %c0_i32, %c0_i32_0 : i32, i32
  }
  func.func @transform_3(%arg0: i32, %arg1: i32) -> (i32, i32, i32, i32) {
    %c0_i32 = arith.constant 0 : i32
    %c0_i32_0 = arith.constant 0 : i32
    %c0_i32_1 = arith.constant 0 : i32
    return %arg0, %arg1, %c0_i32, %c0_i32_0 : i32, i32, i32, i32
  }
}

module attributes {stable_mosaic.version = 11 : i64} {
  func.func @conv3x3_bn_fused_kernel(%arg0: i32, %arg1: i32, %arg2: memref<1x16x16x8xf32, #tpu.memory_space<vmem>>, %arg3: memref<1x1x16x8xf32, #tpu.memory_space<vmem>>, %arg4: memref<1x1x16x8xf32, #tpu.memory_space<vmem>>, %arg5: memref<1x8xf32, #tpu.memory_space<vmem>>, %arg6: memref<1x8xf32, #tpu.memory_space<vmem>>, %arg7: memref<72x8xf32, #tpu.memory_space<vmem>>, %arg8: memref<1x16x16x8xf32, #tpu.memory_space<vmem>>, %arg9: memref<1x1x2x8xf32, #tpu.memory_space<vmem>>) attributes {dimension_semantics = [#tpu.dimension_semantics<parallel>, #tpu.dimension_semantics<parallel>], iteration_bounds = array<i64: 2, 1>, scalar_prefetch = 0 : i64, scratch_operands = 0 : i64, tpu.core_type = #tpu.core_type<tc>, window_params = [{transform_indices = @transform_0, window_bounds = array<i64: 1, 16, 16, 8>}, {transform_indices = @transform_1, window_bounds = array<i64: 1, 1, 16, 8>}, {transform_indices = @transform_2, window_bounds = array<i64: 1, 1, 16, 8>}, {pipeline_mode = #tpu.pipeline_mode<synchronous>, transform_indices = @transform_3, window_bounds = array<i64: 1, 8>}, {pipeline_mode = #tpu.pipeline_mode<synchronous>, transform_indices = @transform_4, window_bounds = array<i64: 1, 8>}, {pipeline_mode = #tpu.pipeline_mode<synchronous>, transform_indices = @transform_5, window_bounds = array<i64: 72, 8>}, {transform_indices = @transform_6, window_bounds = array<i64: 1, 16, 16, 8>}, {transform_indices = @transform_7, window_bounds = array<i64: 1, 1, 2, 8>}]} {
    %c0 = arith.constant 0 : index
    %c0_0 = arith.constant 0 : index
    %c0_1 = arith.constant 0 : index
    %c0_2 = arith.constant 0 : index
    %0 = vector.load %arg3[%c0, %c0_0, %c0_1, %c0_2] : memref<1x1x16x8xf32, #tpu.memory_space<vmem>>, vector<1x1x16x8xf32>
    %1 = vector.shape_cast %0 : vector<1x1x16x8xf32> to vector<1x16x8xf32>
    %c0_3 = arith.constant 0 : index
    %c0_4 = arith.constant 0 : index
    %c0_5 = arith.constant 0 : index
    %c0_6 = arith.constant 0 : index
    %2 = vector.load %arg2[%c0_3, %c0_4, %c0_5, %c0_6] : memref<1x16x16x8xf32, #tpu.memory_space<vmem>>, vector<1x16x16x8xf32>
    %3 = vector.shape_cast %2 : vector<1x16x16x8xf32> to vector<16x16x8xf32>
    %c0_7 = arith.constant 0 : index
    %c0_8 = arith.constant 0 : index
    %c0_9 = arith.constant 0 : index
    %c0_10 = arith.constant 0 : index
    %4 = vector.load %arg4[%c0_7, %c0_8, %c0_9, %c0_10] : memref<1x1x16x8xf32, #tpu.memory_space<vmem>>, vector<1x1x16x8xf32>
    %5 = vector.shape_cast %4 : vector<1x1x16x8xf32> to vector<1x16x8xf32>
    %6 = tpu.concatenate %1, %3, %5 in 0 : vector<1x16x8xf32>, vector<16x16x8xf32>, vector<1x16x8xf32> -> vector<18x16x8xf32>
    %c0_11 = arith.constant 0 : index
    %c0_12 = arith.constant 0 : index
    %7 = vector.load %arg5[%c0_11, %c0_12] : memref<1x8xf32, #tpu.memory_space<vmem>>, vector<1x8xf32>
    %8 = vector.shape_cast %7 : vector<1x8xf32> to vector<8xf32>
    %9 = vector.shape_cast %8 : vector<8xf32> to vector<1x1x8xf32>
    %10 = vector.broadcast %9 : vector<1x1x8xf32> to vector<18x16x8xf32>
    %11 = arith.mulf %6, %10 : vector<18x16x8xf32>
    %c0_13 = arith.constant 0 : index
    %c0_14 = arith.constant 0 : index
    %12 = vector.load %arg6[%c0_13, %c0_14] : memref<1x8xf32, #tpu.memory_space<vmem>>, vector<1x8xf32>
    %13 = vector.shape_cast %12 : vector<1x8xf32> to vector<8xf32>
    %14 = vector.shape_cast %13 : vector<8xf32> to vector<1x1x8xf32>
    %15 = vector.broadcast %14 : vector<1x1x8xf32> to vector<18x16x8xf32>
    %16 = arith.addf %11, %15 : vector<18x16x8xf32>
    %cst = arith.constant 0.000000e+00 : f32
    %17 = vector.broadcast %cst : f32 to vector<18x16x8xf32>
    %18 = arith.maximumf %16, %17 : vector<18x16x8xf32>
    %19 = tpu.iota {dimensions = array<i32: 0>} : vector<18x1x1xi32>
    %c0_i32 = arith.constant 0 : i32
    %20 = arith.cmpi sgt, %arg1, %c0_i32 : i32
    %c0_i32_15 = arith.constant 0 : i32
    %21 = vector.broadcast %c0_i32_15 : i32 to vector<18x1x1xi32>
    %22 = arith.cmpi sgt, %19, %21 : vector<18x1x1xi32>
    %23 = vector.broadcast %20 : i1 to vector<18x1x1xi1>
    %24 = arith.ori %23, %22 : vector<18x1x1xi1>
    %c0_i32_16 = arith.constant 0 : i32
    %25 = arith.cmpi slt, %arg1, %c0_i32_16 : i32
    %c17_i32 = arith.constant 17 : i32
    %26 = vector.broadcast %c17_i32 : i32 to vector<18x1x1xi32>
    %27 = arith.cmpi slt, %19, %26 : vector<18x1x1xi32>
    %28 = vector.broadcast %25 : i1 to vector<18x1x1xi1>
    %29 = arith.ori %28, %27 : vector<18x1x1xi1>
    %30 = arith.andi %24, %29 : vector<18x1x1xi1>
    %cst_17 = arith.constant 0.000000e+00 : f32
    %31 = vector.broadcast %cst_17 : f32 to vector<18x16x8xf32>
    %32 = vector.shape_cast %30 : vector<18x1x1xi1> to vector<18x1x1xi1>
    %33 = vector.broadcast %32 : vector<18x1x1xi1> to vector<18x16x8xi1>
    %34 = arith.select %33, %18, %31 : vector<18x16x8xi1>, vector<18x16x8xf32>
    %35 = tpu.iota {dimensions = array<i32: 1>} : vector<1x16x1xi32>
    %c1_i32 = arith.constant 1 : i32
    %36 = vector.broadcast %c1_i32 : i32 to vector<1x16x1xi32>
    %37 = arith.cmpi sge, %35, %36 : vector<1x16x1xi32>
    %c1_i32_18 = arith.constant 1 : i32
    %38 = tpu.dynamic_rotate %34 by %c1_i32_18 dim 1 : vector<18x16x8xf32>, i32 -> vector<18x16x8xf32>
    %cst_19 = arith.constant 0.000000e+00 : f32
    %39 = vector.broadcast %cst_19 : f32 to vector<18x16x8xf32>
    %40 = vector.shape_cast %37 : vector<1x16x1xi1> to vector<1x16x1xi1>
    %41 = vector.broadcast %40 : vector<1x16x1xi1> to vector<18x16x8xi1>
    %42 = arith.select %41, %38, %39 : vector<18x16x8xi1>, vector<18x16x8xf32>
    %c14_i32 = arith.constant 14 : i32
    %43 = vector.broadcast %c14_i32 : i32 to vector<1x16x1xi32>
    %44 = arith.cmpi sle, %35, %43 : vector<1x16x1xi32>
    %c15_i32 = arith.constant 15 : i32
    %45 = tpu.dynamic_rotate %34 by %c15_i32 dim 1 : vector<18x16x8xf32>, i32 -> vector<18x16x8xf32>
    %cst_20 = arith.constant 0.000000e+00 : f32
    %46 = vector.broadcast %cst_20 : f32 to vector<18x16x8xf32>
    %47 = vector.shape_cast %44 : vector<1x16x1xi1> to vector<1x16x1xi1>
    %48 = vector.broadcast %47 : vector<1x16x1xi1> to vector<18x16x8xi1>
    %49 = arith.select %48, %45, %46 : vector<18x16x8xi1>, vector<18x16x8xf32>
    %50 = vector.extract_strided_slice %42 {offsets = [0, 0, 0], sizes = [16, 16, 8], strides = [1, 1, 1]} : vector<18x16x8xf32> to vector<16x16x8xf32>
    %51 = vector.extract_strided_slice %34 {offsets = [0, 0, 0], sizes = [16, 16, 8], strides = [1, 1, 1]} : vector<18x16x8xf32> to vector<16x16x8xf32>
    %52 = vector.extract_strided_slice %49 {offsets = [0, 0, 0], sizes = [16, 16, 8], strides = [1, 1, 1]} : vector<18x16x8xf32> to vector<16x16x8xf32>
    %53 = vector.extract_strided_slice %42 {offsets = [1, 0, 0], sizes = [16, 16, 8], strides = [1, 1, 1]} : vector<18x16x8xf32> to vector<16x16x8xf32>
    %54 = vector.extract_strided_slice %34 {offsets = [1, 0, 0], sizes = [16, 16, 8], strides = [1, 1, 1]} : vector<18x16x8xf32> to vector<16x16x8xf32>
    %55 = vector.extract_strided_slice %49 {offsets = [1, 0, 0], sizes = [16, 16, 8], strides = [1, 1, 1]} : vector<18x16x8xf32> to vector<16x16x8xf32>
    %56 = vector.extract_strided_slice %42 {offsets = [2, 0, 0], sizes = [16, 16, 8], strides = [1, 1, 1]} : vector<18x16x8xf32> to vector<16x16x8xf32>
    %57 = vector.extract_strided_slice %34 {offsets = [2, 0, 0], sizes = [16, 16, 8], strides = [1, 1, 1]} : vector<18x16x8xf32> to vector<16x16x8xf32>
    %58 = vector.extract_strided_slice %49 {offsets = [2, 0, 0], sizes = [16, 16, 8], strides = [1, 1, 1]} : vector<18x16x8xf32> to vector<16x16x8xf32>
    %59 = tpu.concatenate %50, %51, %52, %53, %54, %55, %56, %57, %58 in 2 : vector<16x16x8xf32>, vector<16x16x8xf32>, vector<16x16x8xf32>, vector<16x16x8xf32>, vector<16x16x8xf32>, vector<16x16x8xf32>, vector<16x16x8xf32>, vector<16x16x8xf32>, vector<16x16x8xf32> -> vector<16x16x72xf32>
    %60 = vector.shape_cast %59 : vector<16x16x72xf32> to vector<256x72xf32>
    %c0_21 = arith.constant 0 : index
    %c0_22 = arith.constant 0 : index
    %61 = vector.load %arg7[%c0_21, %c0_22] : memref<72x8xf32, #tpu.memory_space<vmem>>, vector<72x8xf32>
    %cst_23 = arith.constant dense<0.000000e+00> : vector<256x8xf32>
    %62 = tpu.matmul %60, %61, %cst_23 {dimension_numbers = #tpu.dot_dimension_numbers<[1], [0], [0], [1], [0, 0, 1, 1], [], []>} : vector<256x72xf32>, vector<72x8xf32>, vector<256x8xf32> -> vector<256x8xf32>
    %63 = vector.shape_cast %62 : vector<256x8xf32> to vector<1x16x16x8xf32>
    %c0_24 = arith.constant 0 : index
    %c0_25 = arith.constant 0 : index
    %c0_26 = arith.constant 0 : index
    %c0_27 = arith.constant 0 : index
    %64 = vector.load %arg8[%c0_24, %c0_25, %c0_26, %c0_27] : memref<1x16x16x8xf32, #tpu.memory_space<vmem>>, vector<1x16x16x8xf32>
    tpu.vector_store %arg8[%c0_24, %c0_25, %c0_26, %c0_27], %63 {strides = array<i32>} : memref<1x16x16x8xf32, #tpu.memory_space<vmem>>, vector<1x16x16x8xf32>,
    %cst_28 = arith.constant dense<0.000000e+00> : vector<8xf32>
    %65 = vector.multi_reduction <add>, %62, %cst_28 [0] : vector<256x8xf32> to vector<8xf32>
    %66 = vector.shape_cast %65 : vector<8xf32> to vector<1x8xf32>
    %67 = arith.mulf %62, %62 : vector<256x8xf32>
    %cst_29 = arith.constant dense<0.000000e+00> : vector<8xf32>
    %68 = vector.multi_reduction <add>, %67, %cst_29 [0] : vector<256x8xf32> to vector<8xf32>
    %69 = vector.shape_cast %68 : vector<8xf32> to vector<1x8xf32>
    %70 = tpu.concatenate %66, %69 in 0 : vector<1x8xf32>, vector<1x8xf32> -> vector<2x8xf32>
    %c0_30 = arith.constant 0 : index
    %c0_31 = arith.constant 0 : index
    %c0_32 = arith.constant 0 : index
    %c0_33 = arith.constant 0 : index
    %71 = vector.load %arg9[%c0_30, %c0_31, %c0_32, %c0_33] : memref<1x1x2x8xf32, #tpu.memory_space<vmem>>, vector<1x1x2x8xf32>
    %72 = vector.shape_cast %71 : vector<1x1x2x8xf32> to vector<2x8xf32>
    %73 = vector.shape_cast %70 : vector<2x8xf32> to vector<1x1x2x8xf32>
    tpu.vector_store %arg9[%c0_30, %c0_31, %c0_32, %c0_33], %73 {strides = array<i32>} : memref<1x1x2x8xf32, #tpu.memory_space<vmem>>, vector<1x1x2x8xf32>,
    return
  }
  func.func @transform_0(%arg0: i32, %arg1: i32) -> (i32, i32, i32, i32) {
    %c0_i32 = arith.constant 0 : i32
    %c0_i32_0 = arith.constant 0 : i32
    %c0_i32_1 = arith.constant 0 : i32
    return %arg0, %arg1, %c0_i32, %c0_i32_0 : i32, i32, i32, i32
  }
  func.func @transform_1(%arg0: i32, %arg1: i32) -> (i32, i32, i32, i32) {
    %c16_i32 = arith.constant 16 : i32
    %0 = arith.muli %arg1, %c16_i32 : i32
    %c1_i32 = arith.constant 1 : i32
    %1 = arith.subi %0, %c1_i32 : i32
    %c0_i32 = arith.constant 0 : i32
    %2 = arith.maxsi %1, %c0_i32 : i32
    %c0_i32_0 = arith.constant 0 : i32
    %c0_i32_1 = arith.constant 0 : i32
    %c0_i32_2 = arith.constant 0 : i32
    return %arg0, %2, %c0_i32_0, %c0_i32_1 : i32, i32, i32, i32
  }
  func.func @transform_2(%arg0: i32, %arg1: i32) -> (i32, i32, i32, i32) {
    %c16_i32 = arith.constant 16 : i32
    %0 = arith.muli %arg1, %c16_i32 : i32
    %c16_i32_0 = arith.constant 16 : i32
    %1 = arith.addi %0, %c16_i32_0 : i32
    %c15_i32 = arith.constant 15 : i32
    %2 = arith.minsi %1, %c15_i32 : i32
    %c0_i32 = arith.constant 0 : i32
    %c0_i32_1 = arith.constant 0 : i32
    %c0_i32_2 = arith.constant 0 : i32
    return %arg0, %2, %c0_i32, %c0_i32_1 : i32, i32, i32, i32
  }
  func.func @transform_3(%arg0: i32, %arg1: i32) -> (i32, i32) {
    %c0_i32 = arith.constant 0 : i32
    %c0_i32_0 = arith.constant 0 : i32
    %c0_i32_1 = arith.constant 0 : i32
    return %c0_i32, %c0_i32_0 : i32, i32
  }
  func.func @transform_4(%arg0: i32, %arg1: i32) -> (i32, i32) {
    %c0_i32 = arith.constant 0 : i32
    %c0_i32_0 = arith.constant 0 : i32
    %c0_i32_1 = arith.constant 0 : i32
    return %c0_i32, %c0_i32_0 : i32, i32
  }
  func.func @transform_5(%arg0: i32, %arg1: i32) -> (i32, i32) {
    %c0_i32 = arith.constant 0 : i32
    %c0_i32_0 = arith.constant 0 : i32
    %c0_i32_1 = arith.constant 0 : i32
    return %c0_i32, %c0_i32_0 : i32, i32
  }
  func.func @transform_6(%arg0: i32, %arg1: i32) -> (i32, i32, i32, i32) {
    %c0_i32 = arith.constant 0 : i32
    %c0_i32_0 = arith.constant 0 : i32
    %c0_i32_1 = arith.constant 0 : i32
    return %arg0, %arg1, %c0_i32, %c0_i32_0 : i32, i32, i32, i32
  }
  func.func @transform_7(%arg0: i32, %arg1: i32) -> (i32, i32, i32, i32) {
    %c0_i32 = arith.constant 0 : i32
    %c0_i32_0 = arith.constant 0 : i32
    %c0_i32_1 = arith.constant 0 : i32
    return %arg0, %arg1, %c0_i32, %c0_i32_0 : i32, i32, i32, i32
  }
}

</mosaic_0001>

<llo_original>
// kernel: bottleneck_forward.5
$region0: #{bottleneck_forward.5}
  #allocation0 [shape = 'u32[]', space=smem, size = 0x4, offset = 0x4, fixed_abs, tag = 'smem constant byte address 0x4 - core index']
  #allocation1 [shape = 'u32[72,128]{1,0:T(1,128)}', space=vmem, size = 0x9000, scoped, tag = 'internal scratch']
  %s0 = inlined_call_operand.vmem [shape: f32[2,16,16,8], index: 0, kind: input, shape index: {}]
  %s1 = inlined_call_operand.vmem [shape: f32[1,8], index: 1, kind: input, shape index: {}]
  %s2 = inlined_call_operand.vmem [shape: f32[1,8], index: 2, kind: input, shape index: {}]
  %s3 = inlined_call_operand.vmem [shape: f32[2,16,16,8], index: 3, kind: output, shape index: {}]
  %s4 = sld [smem:[#allocation0]]
  $region45: #{bottleneck_forward.5} parent=0
    _
  %s6 = ssub.s32 1, %s4
  %s7 = scalar_select 0, %s6, %s4
  loop: start=0, step=1, limit=4
  $region2: #{bottleneck_forward.5} parent=0 // loop_pre_header
    _
  $region3: #{bottleneck_forward.5} parent=0 // loop_header
    %s9 = sphi 0, %s13
    %p10 = scmp.ge.s32.totalorder %s9, 4
    %s16 = sphi 0, %s28
    %s17 = sphi 0, %s24
    %s18 = sphi 0, %s16
    %s19 = sphi 0, %s17
    %s20 = sphi 0, %s18
    %s21 = sphi 0, %s19
    %s33 = sphi 0, %s35
    %s36 = sphi 0, %s33
    %s37 = sphi 0, %s36
    %s53 = sphi 0, %s37
    %s57 = sphi 0, %s57
    %s59 = sphi 0, %s57
    %s60 = sphi 0, %s59
    %s74 = sphi 0, %s60
    %s78 = sphi 0, %s78
    %s80 = sphi 0, %s78
    %s81 = sphi 0, %s80
    %s95 = sphi 0, %s81
    %s103 = sphi 0, %s105
    %s106 = sphi 0, %s103
    %s107 = sphi 0, %s106
    %s123 = sphi 0, %s107
  $region4: #{bottleneck_forward.5} parent=0 // loop_header_branch
    %12 = sbr.rel (%p10) target = $region8
  $region5: #{bottleneck_forward.5} parent=0 // loop_body
    %s14 = ssub.s32 %s9, 1
    %s15 = ssub.s32 %s9, 2
    %s22 = sadd.s32 1, %s17
    %p23 = scmp.ge.s32.totalorder %s22, 1
    %s24 = scalar_select %p23, 0, %s22
    %s25 = sadd.s32 1, %s16
    %s26 = scalar_select %p23, %s25, %s16
    %p27 = scmp.ge.s32.totalorder %s26, 2
    %s28 = scalar_select %p27, 0, %s26
    %s29 = ssub.s32 %s16, %s28
    %s30 = ssub.s32 %s17, %s24
    %s31 = sor.u32 %s29, %s30
    %p32 = scmp.eq.s32.totalorder %s31, 0
    %s34 = sadd.s32 %s33, 1
    %s35 = scalar_select %p32, %s33, %s34
    %p38 = pneg %p32
    %p39 = scmp.eq.s32.totalorder %s9, 1
    %p40 = por %p38, %p39
    %p41 = scmp.ne.s32.totalorder %s33, %s36
    %p42 = scmp.eq.s32.totalorder %s9, 0
    %p43 = por %p41, %p42
    %p44 = scmp.ne.s32.totalorder %s33, %s36
    %p45 = scmp.eq.s32.totalorder %s14, 1
    %p46 = por %p44, %p45
    %p47 = scmp.ne.s32.totalorder %s36, %s37
    %p48 = scmp.eq.s32.totalorder %s14, 0
    %p49 = por %p47, %p48
    %p50 = scmp.ne.s32.totalorder %s36, %s37
    %p51 = scmp.eq.s32.totalorder %s15, 1
    %p52 = por %p50, %p51
    %p54 = scmp.ne.s32.totalorder %s37, %s53
    %p55 = scmp.eq.s32.totalorder %s15, 0
    %p56 = por %p54, %p55
    %s58 = sadd.s32 %s57, 1
    %p61 = scmp.eq.s32.totalorder %s9, 1
    %p62 = scmp.ne.s32.totalorder %s57, %s59
    %p63 = scmp.eq.s32.totalorder %s9, 0
    %p64 = por %p62, %p63
    %p65 = scmp.ne.s32.totalorder %s57, %s59
    %p66 = scmp.eq.s32.totalorder %s14, 1
    %p67 = por %p65, %p66
    %p68 = scmp.ne.s32.totalorder %s59, %s60
    %p69 = scmp.eq.s32.totalorder %s14, 0
    %p70 = por %p68, %p69
    %p71 = scmp.ne.s32.totalorder %s59, %s60
    %p72 = scmp.eq.s32.totalorder %s15, 1
    %p73 = por %p71, %p72
    %p75 = scmp.ne.s32.totalorder %s60, %s74
    %p76 = scmp.eq.s32.totalorder %s15, 0
    %p77 = por %p75, %p76
    %s79 = sadd.s32 %s78, 1
    %p82 = scmp.eq.s32.totalorder %s9, 1
    %p83 = scmp.ne.s32.totalorder %s78, %s80
    %p84 = scmp.eq.s32.totalorder %s9, 0
    %p85 = por %p83, %p84
    %p86 = scmp.ne.s32.totalorder %s78, %s80
    %p87 = scmp.eq.s32.totalorder %s14, 1
    %p88 = por %p86, %p87
    %p89 = scmp.ne.s32.totalorder %s80, %s81
    %p90 = scmp.eq.s32.totalorder %s14, 0
    %p91 = por %p89, %p90
    %p92 = scmp.ne.s32.totalorder %s80, %s81
    %p93 = scmp.eq.s32.totalorder %s15, 1
    %p94 = por %p92, %p93
    %p96 = scmp.ne.s32.totalorder %s81, %s95
    %p97 = scmp.eq.s32.totalorder %s15, 0
    %p98 = por %p96, %p97
    %s99 = ssub.s32 %s16, %s28
    %s100 = ssub.s32 %s17, %s24
    %s101 = sor.u32 %s99, %s100
    %p102 = scmp.eq.s32.totalorder %s101, 0
    %s104 = sadd.s32 %s103, 1
    %s105 = scalar_select %p102, %s103, %s104
    %p108 = pneg %p102
    %p109 = scmp.eq.s32.totalorder %s9, 1
    %p110 = por %p108, %p109
    %p111 = scmp.ne.s32.totalorder %s103, %s106
    %p112 = scmp.eq.s32.totalorder %s9, 0
    %p113 = por %p111, %p112
    %p114 = scmp.ne.s32.totalorder %s103, %s106
    %p115 = scmp.eq.s32.totalorder %s14, 1
    %p116 = por %p114, %p115
    %p117 = scmp.ne.s32.totalorder %s106, %s107
    %p118 = scmp.eq.s32.totalorder %s14, 0
    %p119 = por %p117, %p118
    %p120 = scmp.ne.s32.totalorder %s106, %s107
    %p121 = scmp.eq.s32.totalorder %s15, 1
    %p122 = por %p120, %p121
    %p124 = scmp.ne.s32.totalorder %s107, %s123
    %p125 = scmp.eq.s32.totalorder %s15, 0
    %p126 = por %p124, %p125
    %p127 = scmp.le.s32.totalorder 1, %s9
    %p128 = scmp.lt.s32.totalorder %s9, 3
    %p129 = pnand %p127, %p128
    %p130 = pneg %p129
    // Predicated region
    $region9: #{bottleneck_forward.5} parent=5 // pred_check
      _
    $region10: #{bottleneck_forward.5} parent=5 // pred_check_branch
      %132 = sbr.rel (%p129) target = $region12
    $region11: #{bottleneck_forward.5} parent=5 // pred_region
      %s133 = ssub.s32 %s9, 1
      // Predicated region
      $region13: #{bottleneck_forward.5} parent=11 // pred_check
        %p134 = pneg %p70
      $region14: #{bottleneck_forward.5} parent=11 // pred_check_branch
        %136 = sbr.rel (%p134) target = $region16
      $region15: #{bottleneck_forward.5} parent=11 // pred_region
        _
      $region16: #{bottleneck_forward.5} parent=11 // pred_fallthru
        _
      // Predicated region
      $region17: #{bottleneck_forward.5} parent=11 // pred_check
        %p137 = pneg %p91
      $region18: #{bottleneck_forward.5} parent=11 // pred_check_branch
        %139 = sbr.rel (%p137) target = $region20
      $region19: #{bottleneck_forward.5} parent=11 // pred_region
        _
      $region20: #{bottleneck_forward.5} parent=11 // pred_fallthru
        _
    $region12: #{bottleneck_forward.5} parent=5 // pred_fallthru
      _
    %p140 = scmp.lt.s32.totalorder %s9, 2
    // Predicated region
    $region21: #{bottleneck_forward.5} parent=5 // pred_check
      %p141 = pneg %p140
    $region22: #{bottleneck_forward.5} parent=5 // pred_check_branch
      %143 = sbr.rel (%p141) target = $region24
    $region23: #{bottleneck_forward.5} parent=5 // pred_region
      // Predicated region
      $region25: #{bottleneck_forward.5} parent=23 // pred_check
        %p144 = pneg %p43
      $region26: #{bottleneck_forward.5} parent=23 // pred_check_branch
        %146 = sbr.rel (%p144) target = $region28
      $region27: #{bottleneck_forward.5} parent=23 // pred_region
        %s147 = smul.u32 16, %s17
        %p148 = scmp.lt.s32.totalorder %s16, 1
        %s149 = scalar_select %p148, %s16, 1
        %p150 = scmp.lt.s32.totalorder %s147, 15
        %s151 = scalar_select %p150, %s147, 15
        %s152 = smul.addr %s151, 2
        %s153 = smul.addr %s149, 32
        %s154 = sadd.s32 %s152, %s153
        %s155 = smul.addr %s154, 8
        %s156 = scalar_lea.vmem %s0, %s155
        %s157 = smul.u32 16, %s17
      $region28: #{bottleneck_forward.5} parent=23 // pred_fallthru
        _
    $region24: #{bottleneck_forward.5} parent=5 // pred_fallthru
      _
    %p158 = scmp.le.s32.totalorder 1, %s9
    %p159 = scmp.lt.s32.totalorder %s9, 3
    %p160 = pnand %p158, %p159
    %p161 = pneg %p160
    // Predicated region
    $region29: #{bottleneck_forward.5} parent=5 // pred_check
      _
    $region30: #{bottleneck_forward.5} parent=5 // pred_check_branch
      %163 = sbr.rel (%p160) target = $region32
    $region31: #{bottleneck_forward.5} parent=5 // pred_region
      %s164 = ssub.s32 %s9, 1
      %s165 = smul.u32 16, %s19
      %p166 = scmp.lt.s32.totalorder %s18, 1
      %s167 = scalar_select %p166, %s18, 1
      %p168 = scmp.lt.s32.totalorder %s165, 15
      %s169 = scalar_select %p168, %s165, 15
      %s170 = smul.addr %s169, 2
      %s171 = smul.addr %s167, 32
      %s172 = sadd.s32 %s170, %s171
      %s173 = smul.addr %s172, 8
      %s174 = scalar_lea.vmem %s0, %s173
      %p175 = pneg %p49
      %p176 = pneg %p46
      %p177 = pneg %p70
      %p178 = pneg %p67
      %p179 = pneg %p91
      %p180 = pneg %p88
      %p181 = pneg %p119
      %p182 = pneg %p116
      %s183 = smul.u32 16, %s19
      %p184 = scmp.lt.s32.totalorder %s18, 1
      %s185 = scalar_select %p184, %s18, 1
      %p186 = scmp.lt.s32.totalorder %s183, 15
      %s187 = scalar_select %p186, %s183, 15
      %s188 = smul.addr %s187, 2
      %s189 = smul.addr %s185, 32
      %s190 = sadd.s32 %s188, %s189
      %s191 = smul.addr %s190, 8
      %s192 = scalar_lea.vmem %s3, %s191
      %s193 = smul.u32 16, %s19
      %p194 = scmp.lt.s32.totalorder %s18, 1
      %s195 = scalar_select %p194, %s18, 1
      %p196 = scmp.lt.s32.totalorder %s193, 15
      %s197 = scalar_select %p196, %s193, 15
      %s198 = smul.addr %s197, 2
      %s199 = smul.addr %s195, 32
      %s200 = sadd.s32 %s198, %s199
      %s201 = smul.addr %s200, 8
      %s202 = scalar_lea.vmem %s0, %s201
      %s203 = smul.u32 16, %s19
      %s204 = smul.u32 16, %s19
      %p205 = scmp.lt.s32.totalorder %s18, 1
      %s206 = scalar_select %p205, %s18, 1
      %p207 = scmp.lt.s32.totalorder %s204, 15
      %s208 = scalar_select %p207, %s204, 15
      %s209 = smul.addr %s208, 2
      %s210 = smul.addr %s206, 32
      %s211 = sadd.s32 %s209, %s210
      %s212 = smul.addr %s211, 8
      %s213 = scalar_lea.vmem %s3, %s212
      %s214 = smul.u32 16, %s19
      %v215 = vld [vmem:[%s202] sm:$0xff]
      %v216 = vld [vmem:[%s202 + $0x8] sm:$0xff]
      %v217 = vld [vmem:[%s202 + $0x10] sm:$0xff]
      %v218 = vld [vmem:[%s202 + $0x18] sm:$0xff]
      %v219 = vld [vmem:[%s202 + $0x20] sm:$0xff]
      %v220 = vld [vmem:[%s202 + $0x28] sm:$0xff]
      %v221 = vld [vmem:[%s202 + $0x30] sm:$0xff]
      %v222 = vld [vmem:[%s202 + $0x38] sm:$0xff]
      %v223 = vld [vmem:[%s202 + $0x40] sm:$0xff]
      %v224 = vld [vmem:[%s202 + $0x48] sm:$0xff]
      %v225 = vld [vmem:[%s202 + $0x50] sm:$0xff]
      %v226 = vld [vmem:[%s202 + $0x58] sm:$0xff]
      %v227 = vld [vmem:[%s202 + $0x60] sm:$0xff]
      %v228 = vld [vmem:[%s202 + $0x68] sm:$0xff]
      %v229 = vld [vmem:[%s202 + $0x70] sm:$0xff]
      %v230 = vld [vmem:[%s202 + $0x78] sm:$0xff]
      %v231 = vld [vmem:[%s202 + $0x80] sm:$0xff]
      %v232 = vld [vmem:[%s202 + $0x88] sm:$0xff]
      %v233 = vld [vmem:[%s202 + $0x90] sm:$0xff]
      %v234 = vld [vmem:[%s202 + $0x98] sm:$0xff]
      %v235 = vld [vmem:[%s202 + $0xa0] sm:$0xff]
      %v236 = vld [vmem:[%s202 + $0xa8] sm:$0xff]
      %v237 = vld [vmem:[%s202 + $0xb0] sm:$0xff]
      %v238 = vld [vmem:[%s202 + $0xb8] sm:$0xff]
      %v239 = vld [vmem:[%s202 + $0xc0] sm:$0xff]
      %v240 = vld [vmem:[%s202 + $0xc8] sm:$0xff]
      %v241 = vld [vmem:[%s202 + $0xd0] sm:$0xff]
      %v242 = vld [vmem:[%s202 + $0xd8] sm:$0xff]
      %v243 = vld [vmem:[%s202 + $0xe0] sm:$0xff]
      %v244 = vld [vmem:[%s202 + $0xe8] sm:$0xff]
      %v245 = vld [vmem:[%s202 + $0xf0] sm:$0xff]
      %v246 = vld [vmem:[%s202 + $0xf8] sm:$0xff]
      %v247 = vld [vmem:[%s1] sm:$0x1]
      %v249 = vperm.slane %v247, 0
      %v251 = vmul.f32 %v215, %v249
      %v252 = vmul.f32 %v216, %v249
      %v253 = vmul.f32 %v217, %v249
      %v254 = vmul.f32 %v218, %v249
      %v255 = vmul.f32 %v219, %v249
      %v256 = vmul.f32 %v220, %v249
      %v257 = vmul.f32 %v221, %v249
      %v258 = vmul.f32 %v222, %v249
      %v259 = vmul.f32 %v223, %v249
      %v260 = vmul.f32 %v224, %v249
      %v261 = vmul.f32 %v225, %v249
      %v262 = vmul.f32 %v226, %v249
      %v263 = vmul.f32 %v227, %v249
      %v264 = vmul.f32 %v228, %v249
      %v265 = vmul.f32 %v229, %v249
      %v266 = vmul.f32 %v230, %v249
      %v267 = vmul.f32 %v231, %v249
      %v268 = vmul.f32 %v232, %v249
      %v269 = vmul.f32 %v233, %v249
      %v270 = vmul.f32 %v234, %v249
      %v271 = vmul.f32 %v235, %v249
      %v272 = vmul.f32 %v236, %v249
      %v273 = vmul.f32 %v237, %v249
      %v274 = vmul.f32 %v238, %v249
      %v275 = vmul.f32 %v239, %v249
      %v276 = vmul.f32 %v240, %v249
      %v277 = vmul.f32 %v241, %v249
      %v278 = vmul.f32 %v242, %v249
      %v279 = vmul.f32 %v243, %v249
      %v280 = vmul.f32 %v244, %v249
      %v281 = vmul.f32 %v245, %v249
      %v282 = vmul.f32 %v246, %v249
      %v283 = vld [vmem:[%s2] sm:$0x1]
      %v285 = vperm.slane %v283, 0
      %v287 = vadd.f32 %v251, %v285
      %v288 = vadd.f32 %v252, %v285
      %v289 = vadd.f32 %v253, %v285
      %v290 = vadd.f32 %v254, %v285
      %v291 = vadd.f32 %v255, %v285
      %v292 = vadd.f32 %v256, %v285
      %v293 = vadd.f32 %v257, %v285
      %v294 = vadd.f32 %v258, %v285
      %v295 = vadd.f32 %v259, %v285
      %v296 = vadd.f32 %v260, %v285
      %v297 = vadd.f32 %v261, %v285
      %v298 = vadd.f32 %v262, %v285
      %v299 = vadd.f32 %v263, %v285
      %v300 = vadd.f32 %v264, %v285
      %v301 = vadd.f32 %v265, %v285
      %v302 = vadd.f32 %v266, %v285
      %v303 = vadd.f32 %v267, %v285
      %v304 = vadd.f32 %v268, %v285
      %v305 = vadd.f32 %v269, %v285
      %v306 = vadd.f32 %v270, %v285
      %v307 = vadd.f32 %v271, %v285
      %v308 = vadd.f32 %v272, %v285
      %v309 = vadd.f32 %v273, %v285
      %v310 = vadd.f32 %v274, %v285
      %v311 = vadd.f32 %v275, %v285
      %v312 = vadd.f32 %v276, %v285
      %v313 = vadd.f32 %v277, %v285
      %v314 = vadd.f32 %v278, %v285
      %v315 = vadd.f32 %v279, %v285
      %v316 = vadd.f32 %v280, %v285
      %v317 = vadd.f32 %v281, %v285
      %v318 = vadd.f32 %v282, %v285
      %vm319 = vcmask 64512
      %320 = vst.msk [vmem:[%s213] sm:$0xff] %vm319, %v287
      %321 = vst.msk [vmem:[%s213 + $0x8] sm:$0xff] %vm319, %v288
      %322 = vst.msk [vmem:[%s213 + $0x10] sm:$0xff] %vm319, %v289
      %323 = vst.msk [vmem:[%s213 + $0x18] sm:$0xff] %vm319, %v290
      %324 = vst.msk [vmem:[%s213 + $0x20] sm:$0xff] %vm319, %v291
      %325 = vst.msk [vmem:[%s213 + $0x28] sm:$0xff] %vm319, %v292
      %326 = vst.msk [vmem:[%s213 + $0x30] sm:$0xff] %vm319, %v293
      %327 = vst.msk [vmem:[%s213 + $0x38] sm:$0xff] %vm319, %v294
      %328 = vst.msk [vmem:[%s213 + $0x40] sm:$0xff] %vm319, %v295
      %329 = vst.msk [vmem:[%s213 + $0x48] sm:$0xff] %vm319, %v296
      %330 = vst.msk [vmem:[%s213 + $0x50] sm:$0xff] %vm319, %v297
      %331 = vst.msk [vmem:[%s213 + $0x58] sm:$0xff] %vm319, %v298
      %332 = vst.msk [vmem:[%s213 + $0x60] sm:$0xff] %vm319, %v299
      %333 = vst.msk [vmem:[%s213 + $0x68] sm:$0xff] %vm319, %v300
      %334 = vst.msk [vmem:[%s213 + $0x70] sm:$0xff] %vm319, %v301
      %335 = vst.msk [vmem:[%s213 + $0x78] sm:$0xff] %vm319, %v302
      %336 = vst.msk [vmem:[%s213 + $0x80] sm:$0xff] %vm319, %v303
      %337 = vst.msk [vmem:[%s213 + $0x88] sm:$0xff] %vm319, %v304
      %338 = vst.msk [vmem:[%s213 + $0x90] sm:$0xff] %vm319, %v305
      %339 = vst.msk [vmem:[%s213 + $0x98] sm:$0xff] %vm319, %v306
      %340 = vst.msk [vmem:[%s213 + $0xa0] sm:$0xff] %vm319, %v307
      %341 = vst.msk [vmem:[%s213 + $0xa8] sm:$0xff] %vm319, %v308
      %342 = vst.msk [vmem:[%s213 + $0xb0] sm:$0xff] %vm319, %v309
      %343 = vst.msk [vmem:[%s213 + $0xb8] sm:$0xff] %vm319, %v310
      %344 = vst.msk [vmem:[%s213 + $0xc0] sm:$0xff] %vm319, %v311
      %345 = vst.msk [vmem:[%s213 + $0xc8] sm:$0xff] %vm319, %v312
      %346 = vst.msk [vmem:[%s213 + $0xd0] sm:$0xff] %vm319, %v313
      %347 = vst.msk [vmem:[%s213 + $0xd8] sm:$0xff] %vm319, %v314
      %348 = vst.msk [vmem:[%s213 + $0xe0] sm:$0xff] %vm319, %v315
      %349 = vst.msk [vmem:[%s213 + $0xe8] sm:$0xff] %vm319, %v316
      %350 = vst.msk [vmem:[%s213 + $0xf0] sm:$0xff] %vm319, %v317
      %351 = vst.msk [vmem:[%s213 + $0xf8] sm:$0xff] %vm319, %v318
      %s352 = smul.u32 16, %s19
      %p353 = scmp.lt.s32.totalorder %s18, 1
      %s354 = scalar_select %p353, %s18, 1
      %p355 = scmp.lt.s32.totalorder %s352, 15
      %s356 = scalar_select %p355, %s352, 15
      %s357 = smul.addr %s356, 2
      %s358 = smul.addr %s354, 32
      %s359 = sadd.s32 %s357, %s358
      %s360 = smul.addr %s359, 8
      %s361 = scalar_lea.vmem %s3, %s360
      // Predicated region
      $region33: #{bottleneck_forward.5} parent=31 // pred_check
        %p362 = pneg %p116
      $region34: #{bottleneck_forward.5} parent=31 // pred_check_branch
        %364 = sbr.rel (%p362) target = $region36
      $region35: #{bottleneck_forward.5} parent=31 // pred_region
        %s365 = smul.u32 16, %s19
      $region36: #{bottleneck_forward.5} parent=31 // pred_fallthru
        _
    $region32: #{bottleneck_forward.5} parent=5 // pred_fallthru
      _
    %p366 = scmp.le.s32.totalorder 2, %s9
    // Predicated region
    $region37: #{bottleneck_forward.5} parent=5 // pred_check
      %p367 = pneg %p366
    $region38: #{bottleneck_forward.5} parent=5 // pred_check_branch
      %369 = sbr.rel (%p367) target = $region40
    $region39: #{bottleneck_forward.5} parent=5 // pred_region
      %s370 = ssub.s32 %s9, 2
      // Predicated region
      $region41: #{bottleneck_forward.5} parent=39 // pred_check
        %p371 = pneg %p122
      $region42: #{bottleneck_forward.5} parent=39 // pred_check_branch
        %373 = sbr.rel (%p371) target = $region44
      $region43: #{bottleneck_forward.5} parent=39 // pred_region
        %s374 = smul.u32 16, %s21
        %p375 = scmp.lt.s32.totalorder %s20, 1
        %s376 = scalar_select %p375, %s20, 1
        %p377 = scmp.lt.s32.totalorder %s374, 15
        %s378 = scalar_select %p377, %s374, 15
        %s379 = smul.addr %s378, 2
        %s380 = smul.addr %s376, 32
        %s381 = sadd.s32 %s379, %s380
        %s382 = smul.addr %s381, 8
        %s383 = scalar_lea.vmem %s3, %s382
      $region44: #{bottleneck_forward.5} parent=39 // pred_fallthru
        _
    $region40: #{bottleneck_forward.5} parent=5 // pred_fallthru
      _
  $region6: #{bottleneck_forward.5} parent=0 // loop_footer
    %s13 = sadd.s32 1, %s9
  $region7: #{bottleneck_forward.5} parent=0 // loop_footer_branch
    %8 = sbr.rel target = $region3
  $region8: #{bottleneck_forward.5} parent=0 // loop_exit
    _

// kernel: bottleneck_forward.3
$region0: #{bottleneck_forward.3}
  #allocation0 [shape = 'u32[]', space=smem, size = 0x4, offset = 0x4, fixed_abs, tag = 'smem constant byte address 0x4 - core index']
  #allocation1 [shape = 'u32[72,128]{1,0:T(1,128)}', space=vmem, size = 0x9000, scoped, tag = 'internal scratch']
  %s0 = inlined_call_operand.vmem [shape: f32[2,16,16,4], index: 0, kind: input, shape index: {}, may-alias: {0,1,2}]
  %s1 = inlined_call_operand.vmem [shape: f32[2,16,16,4], index: 1, kind: input, shape index: {}, may-alias: {0,1,2}]
  %s2 = inlined_call_operand.vmem [shape: f32[2,16,16,4], index: 2, kind: input, shape index: {}, may-alias: {0,1,2}]
  %s3 = inlined_call_operand.vmem [shape: f32[1,4], index: 3, kind: input, shape index: {}]
  %s4 = inlined_call_operand.vmem [shape: f32[1,4], index: 4, kind: input, shape index: {}]
  %s5 = inlined_call_operand.vmem [shape: f32[36,8], index: 5, kind: input, shape index: {}]
  %s6 = inlined_call_operand.vmem [shape: f32[2,16,16,8], index: 6, kind: output, shape index: {0}]
  %s7 = inlined_call_operand.vmem [shape: f32[2,1,2,8], index: 7, kind: output, shape index: {1}]
  %8 = xla_tuple %s6, %s7
  %s9 = sld [smem:[#allocation0]]
  $region65: #{bottleneck_forward.3} parent=0
    _
  %s11 = ssub.s32 1, %s9
  %s12 = scalar_select 0, %s11, %s9
  loop: start=0, step=1, limit=4
  $region2: #{bottleneck_forward.3} parent=0 // loop_pre_header
    _
  $region3: #{bottleneck_forward.3} parent=0 // loop_header
    %s14 = sphi 0, %s18
    %p15 = scmp.ge.s32.totalorder %s14, 4
    %s21 = sphi 0, %s33
    %s22 = sphi 0, %s29
    %s23 = sphi 0, %s21
    %s24 = sphi 0, %s22
    %s25 = sphi 0, %s23
    %s26 = sphi 0, %s24
    %s38 = sphi 0, %s40
    %s41 = sphi 0, %s38
    %s42 = sphi 0, %s41
    %s58 = sphi 0, %s42
    %s74 = sphi 0, %s76
    %s77 = sphi 0, %s74
    %s78 = sphi 0, %s77
    %s94 = sphi 0, %s78
    %s110 = sphi 0, %s112
    %s113 = sphi 0, %s110
    %s114 = sphi 0, %s113
    %s130 = sphi 0, %s114
    %s134 = sphi 0, %s134
    %s136 = sphi 0, %s134
    %s137 = sphi 0, %s136
    %s151 = sphi 0, %s137
    %s155 = sphi 0, %s155
    %s157 = sphi 0, %s155
    %s158 = sphi 0, %s157
    %s172 = sphi 0, %s158
    %s176 = sphi 0, %s176
    %s178 = sphi 0, %s176
    %s179 = sphi 0, %s178
    %s193 = sphi 0, %s179
    %s201 = sphi 0, %s203
    %s204 = sphi 0, %s201
    %s205 = sphi 0, %s204
    %s221 = sphi 0, %s205
    %s229 = sphi 0, %s231
    %s232 = sphi 0, %s229
    %s233 = sphi 0, %s232
    %s249 = sphi 0, %s233
  $region4: #{bottleneck_forward.3} parent=0 // loop_header_branch
    %17 = sbr.rel (%p15) target = $region8
  $region5: #{bottleneck_forward.3} parent=0 // loop_body
    %s19 = ssub.s32 %s14, 1
    %s20 = ssub.s32 %s14, 2
    %s27 = sadd.s32 1, %s22
    %p28 = scmp.ge.s32.totalorder %s27, 1
    %s29 = scalar_select %p28, 0, %s27
    %s30 = sadd.s32 1, %s21
    %s31 = scalar_select %p28, %s30, %s21
    %p32 = scmp.ge.s32.totalorder %s31, 2
    %s33 = scalar_select %p32, 0, %s31
    %s34 = ssub.s32 %s21, %s33
    %s35 = ssub.s32 %s22, %s29
    %s36 = sor.u32 %s34, %s35
    %p37 = scmp.eq.s32.totalorder %s36, 0
    %s39 = sadd.s32 %s38, 1
    %s40 = scalar_select %p37, %s38, %s39
    %p43 = pneg %p37
    %p44 = scmp.eq.s32.totalorder %s14, 1
    %p45 = por %p43, %p44
    %p46 = scmp.ne.s32.totalorder %s38, %s41
    %p47 = scmp.eq.s32.totalorder %s14, 0
    %p48 = por %p46, %p47
    %p49 = scmp.ne.s32.totalorder %s38, %s41
    %p50 = scmp.eq.s32.totalorder %s19, 1
    %p51 = por %p49, %p50
    %p52 = scmp.ne.s32.totalorder %s41, %s42
    %p53 = scmp.eq.s32.totalorder %s19, 0
    %p54 = por %p52, %p53
    %p55 = scmp.ne.s32.totalorder %s41, %s42
    %p56 = scmp.eq.s32.totalorder %s20, 1
    %p57 = por %p55, %p56
    %p59 = scmp.ne.s32.totalorder %s42, %s58
    %p60 = scmp.eq.s32.totalorder %s20, 0
    %p61 = por %p59, %p60
    %s62 = smul.u32 %s22, 16
    %s63 = ssub.s32 %s62, 1
    %p64 = scmp.gt.s32.totalorder %s63, 0
    %s65 = scalar_select %p64, %s63, 0
    %s66 = smul.u32 %s29, 16
    %s67 = ssub.s32 %s66, 1
    %p68 = scmp.gt.s32.totalorder %s67, 0
    %s69 = scalar_select %p68, %s67, 0
    %s70 = ssub.s32 %s21, %s33
    %s71 = ssub.s32 %s65, %s69
    %s72 = sor.u32 %s70, %s71
    %p73 = scmp.eq.s32.totalorder %s72, 0
    %s75 = sadd.s32 %s74, 1
    %s76 = scalar_select %p73, %s74, %s75
    %p79 = pneg %p73
    %p80 = scmp.eq.s32.totalorder %s14, 1
    %p81 = por %p79, %p80
    %p82 = scmp.ne.s32.totalorder %s74, %s77
    %p83 = scmp.eq.s32.totalorder %s14, 0
    %p84 = por %p82, %p83
    %p85 = scmp.ne.s32.totalorder %s74, %s77
    %p86 = scmp.eq.s32.totalorder %s19, 1
    %p87 = por %p85, %p86
    %p88 = scmp.ne.s32.totalorder %s77, %s78
    %p89 = scmp.eq.s32.totalorder %s19, 0
    %p90 = por %p88, %p89
    %p91 = scmp.ne.s32.totalorder %s77, %s78
    %p92 = scmp.eq.s32.totalorder %s20, 1
    %p93 = por %p91, %p92
    %p95 = scmp.ne.s32.totalorder %s78, %s94
    %p96 = scmp.eq.s32.totalorder %s20, 0
    %p97 = por %p95, %p96
    %s98 = smul.u32 %s22, 16
    %s99 = sadd.s32 %s98, 16
    %p100 = scmp.lt.s32.totalorder %s99, 15
    %s101 = scalar_select %p100, %s99, 15
    %s102 = smul.u32 %s29, 16
    %s103 = sadd.s32 %s102, 16
    %p104 = scmp.lt.s32.totalorder %s103, 15
    %s105 = scalar_select %p104, %s103, 15
    %s106 = ssub.s32 %s21, %s33
    %s107 = ssub.s32 %s101, %s105
    %s108 = sor.u32 %s106, %s107
    %p109 = scmp.eq.s32.totalorder %s108, 0
    %s111 = sadd.s32 %s110, 1
    %s112 = scalar_select %p109, %s110, %s111
    %p115 = pneg %p109
    %p116 = scmp.eq.s32.totalorder %s14, 1
    %p117 = por %p115, %p116
    %p118 = scmp.ne.s32.totalorder %s110, %s113
    %p119 = scmp.eq.s32.totalorder %s14, 0
    %p120 = por %p118, %p119
    %p121 = scmp.ne.s32.totalorder %s110, %s113
    %p122 = scmp.eq.s32.totalorder %s19, 1
    %p123 = por %p121, %p122
    %p124 = scmp.ne.s32.totalorder %s113, %s114
    %p125 = scmp.eq.s32.totalorder %s19, 0
    %p126 = por %p124, %p125
    %p127 = scmp.ne.s32.totalorder %s113, %s114
    %p128 = scmp.eq.s32.totalorder %s20, 1
    %p129 = por %p127, %p128
    %p131 = scmp.ne.s32.totalorder %s114, %s130
    %p132 = scmp.eq.s32.totalorder %s20, 0
    %p133 = por %p131, %p132
    %s135 = sadd.s32 %s134, 1
    %p138 = scmp.eq.s32.totalorder %s14, 1
    %p139 = scmp.ne.s32.totalorder %s134, %s136
    %p140 = scmp.eq.s32.totalorder %s14, 0
    %p141 = por %p139, %p140
    %p142 = scmp.ne.s32.totalorder %s134, %s136
    %p143 = scmp.eq.s32.totalorder %s19, 1
    %p144 = por %p142, %p143
    %p145 = scmp.ne.s32.totalorder %s136, %s137
    %p146 = scmp.eq.s32.totalorder %s19, 0
    %p147 = por %p145, %p146
    %p148 = scmp.ne.s32.totalorder %s136, %s137
    %p149 = scmp.eq.s32.totalorder %s20, 1
    %p150 = por %p148, %p149
    %p152 = scmp.ne.s32.totalorder %s137, %s151
    %p153 = scmp.eq.s32.totalorder %s20, 0
    %p154 = por %p152, %p153
    %s156 = sadd.s32 %s155, 1
    %p159 = scmp.eq.s32.totalorder %s14, 1
    %p160 = scmp.ne.s32.totalorder %s155, %s157
    %p161 = scmp.eq.s32.totalorder %s14, 0
    %p162 = por %p160, %p161
    %p163 = scmp.ne.s32.totalorder %s155, %s157
    %p164 = scmp.eq.s32.totalorder %s19, 1
    %p165 = por %p163, %p164
    %p166 = scmp.ne.s32.totalorder %s157, %s158
    %p167 = scmp.eq.s32.totalorder %s19, 0
    %p168 = por %p166, %p167
    %p169 = scmp.ne.s32.totalorder %s157, %s158
    %p170 = scmp.eq.s32.totalorder %s20, 1
    %p171 = por %p169, %p170
    %p173 = scmp.ne.s32.totalorder %s158, %s172
    %p174 = scmp.eq.s32.totalorder %s20, 0
    %p175 = por %p173, %p174
    %s177 = sadd.s32 %s176, 1
    %p180 = scmp.eq.s32.totalorder %s14, 1
    %p181 = scmp.ne.s32.totalorder %s176, %s178
    %p182 = scmp.eq.s32.totalorder %s14, 0
    %p183 = por %p181, %p182
    %p184 = scmp.ne.s32.totalorder %s176, %s178
    %p185 = scmp.eq.s32.totalorder %s19, 1
    %p186 = por %p184, %p185
    %p187 = scmp.ne.s32.totalorder %s178, %s179
    %p188 = scmp.eq.s32.totalorder %s19, 0
    %p189 = por %p187, %p188
    %p190 = scmp.ne.s32.totalorder %s178, %s179
    %p191 = scmp.eq.s32.totalorder %s20, 1
    %p192 = por %p190, %p191
    %p194 = scmp.ne.s32.totalorder %s179, %s193
    %p195 = scmp.eq.s32.totalorder %s20, 0
    %p196 = por %p194, %p195
    %s197 = ssub.s32 %s21, %s33
    %s198 = ssub.s32 %s22, %s29
    %s199 = sor.u32 %s197, %s198
    %p200 = scmp.eq.s32.totalorder %s199, 0
    %s202 = sadd.s32 %s201, 1
    %s203 = scalar_select %p200, %s201, %s202
    %p206 = pneg %p200
    %p207 = scmp.eq.s32.totalorder %s14, 1
    %p208 = por %p206, %p207
    %p209 = scmp.ne.s32.totalorder %s201, %s204
    %p210 = scmp.eq.s32.totalorder %s14, 0
    %p211 = por %p209, %p210
    %p212 = scmp.ne.s32.totalorder %s201, %s204
    %p213 = scmp.eq.s32.totalorder %s19, 1
    %p214 = por %p212, %p213
    %p215 = scmp.ne.s32.totalorder %s204, %s205
    %p216 = scmp.eq.s32.totalorder %s19, 0
    %p217 = por %p215, %p216
    %p218 = scmp.ne.s32.totalorder %s204, %s205
    %p219 = scmp.eq.s32.totalorder %s20, 1
    %p220 = por %p218, %p219
    %p222 = scmp.ne.s32.totalorder %s205, %s221
    %p223 = scmp.eq.s32.totalorder %s20, 0
    %p224 = por %p222, %p223
    %s225 = ssub.s32 %s21, %s33
    %s226 = ssub.s32 %s22, %s29
    %s227 = sor.u32 %s225, %s226
    %p228 = scmp.eq.s32.totalorder %s227, 0
    %s230 = sadd.s32 %s229, 1
    %s231 = scalar_select %p228, %s229, %s230
    %p234 = pneg %p228
    %p235 = scmp.eq.s32.totalorder %s14, 1
    %p236 = por %p234, %p235
    %p237 = scmp.ne.s32.totalorder %s229, %s232
    %p238 = scmp.eq.s32.totalorder %s14, 0
    %p239 = por %p237, %p238
    %p240 = scmp.ne.s32.totalorder %s229, %s232
    %p241 = scmp.eq.s32.totalorder %s19, 1
    %p242 = por %p240, %p241
    %p243 = scmp.ne.s32.totalorder %s232, %s233
    %p244 = scmp.eq.s32.totalorder %s19, 0
    %p245 = por %p243, %p244
    %p246 = scmp.ne.s32.totalorder %s232, %s233
    %p247 = scmp.eq.s32.totalorder %s20, 1
    %p248 = por %p246, %p247
    %p250 = scmp.ne.s32.totalorder %s233, %s249
    %p251 = scmp.eq.s32.totalorder %s20, 0
    %p252 = por %p250, %p251
    %p253 = scmp.le.s32.totalorder 1, %s14
    %p254 = scmp.lt.s32.totalorder %s14, 3
    %p255 = pnand %p253, %p254
    %p256 = pneg %p255
    // Predicated region
    $region9: #{bottleneck_forward.3} parent=5 // pred_check
      _
    $region10: #{bottleneck_forward.3} parent=5 // pred_check_branch
      %258 = sbr.rel (%p255) target = $region12
    $region11: #{bottleneck_forward.3} parent=5 // pred_region
      %s259 = ssub.s32 %s14, 1
      // Predicated region
      $region13: #{bottleneck_forward.3} parent=11 // pred_check
        %p260 = pneg %p147
      $region14: #{bottleneck_forward.3} parent=11 // pred_check_branch
        %262 = sbr.rel (%p260) target = $region16
      $region15: #{bottleneck_forward.3} parent=11 // pred_region
        _
      $region16: #{bottleneck_forward.3} parent=11 // pred_fallthru
        _
      // Predicated region
      $region17: #{bottleneck_forward.3} parent=11 // pred_check
        %p263 = pneg %p168
      $region18: #{bottleneck_forward.3} parent=11 // pred_check_branch
        %265 = sbr.rel (%p263) target = $region20
      $region19: #{bottleneck_forward.3} parent=11 // pred_region
        _
      $region20: #{bottleneck_forward.3} parent=11 // pred_fallthru
        _
      // Predicated region
      $region21: #{bottleneck_forward.3} parent=11 // pred_check
        %p266 = pneg %p189
      $region22: #{bottleneck_forward.3} parent=11 // pred_check_branch
        %268 = sbr.rel (%p266) target = $region24
      $region23: #{bottleneck_forward.3} parent=11 // pred_region
        _
      $region24: #{bottleneck_forward.3} parent=11 // pred_fallthru
        _
    $region12: #{bottleneck_forward.3} parent=5 // pred_fallthru
      _
    %p269 = scmp.lt.s32.totalorder %s14, 2
    // Predicated region
    $region25: #{bottleneck_forward.3} parent=5 // pred_check
      %p270 = pneg %p269
    $region26: #{bottleneck_forward.3} parent=5 // pred_check_branch
      %272 = sbr.rel (%p270) target = $region28
    $region27: #{bottleneck_forward.3} parent=5 // pred_region
      // Predicated region
      $region29: #{bottleneck_forward.3} parent=27 // pred_check
        %p273 = pneg %p48
      $region30: #{bottleneck_forward.3} parent=27 // pred_check_branch
        %275 = sbr.rel (%p273) target = $region32
      $region31: #{bottleneck_forward.3} parent=27 // pred_region
        %s276 = smul.u32 16, %s22
        %p277 = scmp.lt.s32.totalorder %s21, 1
        %s278 = scalar_select %p277, %s21, 1
        %p279 = scmp.lt.s32.totalorder %s276, 15
        %s280 = scalar_select %p279, %s276, 15
        %s281 = smul.addr %s280, 2
        %s282 = smul.addr %s278, 32
        %s283 = sadd.s32 %s281, %s282
        %s284 = smul.addr %s283, 8
        %s285 = scalar_lea.vmem %s0, %s284
        %s286 = smul.u32 16, %s22
      $region32: #{bottleneck_forward.3} parent=27 // pred_fallthru
        _
      // Predicated region
      $region33: #{bottleneck_forward.3} parent=27 // pred_check
        %p287 = pneg %p84
      $region34: #{bottleneck_forward.3} parent=27 // pred_check_branch
        %289 = sbr.rel (%p287) target = $region36
      $region35: #{bottleneck_forward.3} parent=27 // pred_region
        %s290 = smul.u32 %s22, 16
        %s291 = ssub.s32 %s290, 1
        %p292 = scmp.gt.s32.totalorder %s291, 0
        %s293 = scalar_select %p292, %s291, 0
        %p294 = scmp.lt.s32.totalorder %s21, 1
        %s295 = scalar_select %p294, %s21, 1
        %p296 = scmp.lt.s32.totalorder %s293, 15
        %s297 = scalar_select %p296, %s293, 15
        %s298 = smul.addr %s297, 2
        %s299 = smul.addr %s295, 32
        %s300 = sadd.s32 %s298, %s299
        %s301 = smul.addr %s300, 8
        %s302 = scalar_lea.vmem %s1, %s301
        %s303 = smul.u32 %s22, 16
        %s304 = ssub.s32 %s303, 1
        %p305 = scmp.gt.s32.totalorder %s304, 0
        %s306 = scalar_select %p305, %s304, 0
      $region36: #{bottleneck_forward.3} parent=27 // pred_fallthru
        _
      // Predicated region
      $region37: #{bottleneck_forward.3} parent=27 // pred_check
        %p307 = pneg %p120
      $region38: #{bottleneck_forward.3} parent=27 // pred_check_branch
        %309 = sbr.rel (%p307) target = $region40
      $region39: #{bottleneck_forward.3} parent=27 // pred_region
        %s310 = smul.u32 %s22, 16
        %s311 = sadd.s32 %s310, 16
        %p312 = scmp.lt.s32.totalorder %s311, 15
        %s313 = scalar_select %p312, %s311, 15
        %p314 = scmp.lt.s32.totalorder %s21, 1
        %s315 = scalar_select %p314, %s21, 1
        %p316 = scmp.lt.s32.totalorder %s313, 15
        %s317 = scalar_select %p316, %s313, 15
        %s318 = smul.addr %s317, 2
        %s319 = smul.addr %s315, 32
        %s320 = sadd.s32 %s318, %s319
        %s321 = smul.addr %s320, 8
        %s322 = scalar_lea.vmem %s2, %s321
        %s323 = smul.u32 %s22, 16
        %s324 = sadd.s32 %s323, 16
        %p325 = scmp.lt.s32.totalorder %s324, 15
        %s326 = scalar_select %p325, %s324, 15
      $region40: #{bottleneck_forward.3} parent=27 // pred_fallthru
        _
    $region28: #{bottleneck_forward.3} parent=5 // pred_fallthru
      _
    %p327 = scmp.le.s32.totalorder 1, %s14
    %p328 = scmp.lt.s32.totalorder %s14, 3
    %p329 = pnand %p327, %p328
    %p330 = pneg %p329
    // Predicated region
    $region41: #{bottleneck_forward.3} parent=5 // pred_check
      _
    $region42: #{bottleneck_forward.3} parent=5 // pred_check_branch
      %332 = sbr.rel (%p329) target = $region44
    $region43: #{bottleneck_forward.3} parent=5 // pred_region
      %s333 = ssub.s32 %s14, 1
      %s334 = smul.u32 16, %s24
      %p335 = scmp.lt.s32.totalorder %s23, 1
      %s336 = scalar_select %p335, %s23, 1
      %p337 = scmp.lt.s32.totalorder %s334, 15
      %s338 = scalar_select %p337, %s334, 15
      %s339 = smul.addr %s338, 2
      %s340 = smul.addr %s336, 32
      %s341 = sadd.s32 %s339, %s340
      %s342 = smul.addr %s341, 8
      %s343 = scalar_lea.vmem %s0, %s342
      %p344 = pneg %p54
      %p345 = pneg %p51
      %s346 = smul.u32 %s24, 16
      %s347 = ssub.s32 %s346, 1
      %p348 = scmp.gt.s32.totalorder %s347, 0
      %s349 = scalar_select %p348, %s347, 0
      %p350 = scmp.lt.s32.totalorder %s23, 1
      %s351 = scalar_select %p350, %s23, 1
      %p352 = scmp.lt.s32.totalorder %s349, 15
      %s353 = scalar_select %p352, %s349, 15
      %s354 = smul.addr %s353, 2
      %s355 = smul.addr %s351, 32
      %s356 = sadd.s32 %s354, %s355
      %s357 = smul.addr %s356, 8
      %s358 = scalar_lea.vmem %s1, %s357
      %p359 = pneg %p90
      %p360 = pneg %p87
      %s361 = smul.u32 %s24, 16
      %s362 = sadd.s32 %s361, 16
      %p363 = scmp.lt.s32.totalorder %s362, 15
      %s364 = scalar_select %p363, %s362, 15
      %p365 = scmp.lt.s32.totalorder %s23, 1
      %s366 = scalar_select %p365, %s23, 1
      %p367 = scmp.lt.s32.totalorder %s364, 15
      %s368 = scalar_select %p367, %s364, 15
      %s369 = smul.addr %s368, 2
      %s370 = smul.addr %s366, 32
      %s371 = sadd.s32 %s369, %s370
      %s372 = smul.addr %s371, 8
      %s373 = scalar_lea.vmem %s2, %s372
      %p374 = pneg %p126
      %p375 = pneg %p123
      %p376 = pneg %p147
      %p377 = pneg %p144
      %p378 = pneg %p168
      %p379 = pneg %p165
      %p380 = pneg %p189
      %p381 = pneg %p186
      %p382 = pneg %p217
      %p383 = pneg %p214
      %s384 = smul.u32 16, %s24
      %p385 = scmp.lt.s32.totalorder %s23, 1
      %s386 = scalar_select %p385, %s23, 1
      %p387 = scmp.lt.s32.totalorder %s384, 15
      %s388 = scalar_select %p387, %s384, 15
      %s389 = smul.addr %s388, 2
      %s390 = smul.addr %s386, 32
      %s391 = sadd.s32 %s389, %s390
      %s392 = smul.addr %s391, 8
      %s393 = scalar_lea.vmem %s6, %s392
      %p394 = pneg %p245
      %p395 = pneg %p242
      %p396 = scmp.lt.s32.totalorder %s23, 1
      %s397 = scalar_select %p396, %s23, 1
      %p398 = scmp.lt.s32.totalorder %s24, 0
      %s399 = scalar_select %p398, %s24, 0
      %s400 = sadd.s32 %s399, %s397
      %s401 = smul.addr %s400, 2
      %s402 = scalar_lea.vmem %s7, %s401
      %s403 = smul.u32 16, %s24
      %p404 = scmp.lt.s32.totalorder %s23, 1
      %s405 = scalar_select %p404, %s23, 1
      %p406 = scmp.lt.s32.totalorder %s403, 15
      %s407 = scalar_select %p406, %s403, 15
      %s408 = smul.addr %s407, 2
      %s409 = smul.addr %s405, 32
      %s410 = sadd.s32 %s408, %s409
      %s411 = smul.addr %s410, 8
      %s412 = scalar_lea.vmem %s0, %s411
      %s413 = smul.u32 16, %s24
      %s414 = smul.u32 %s24, 16
      %s415 = ssub.s32 %s414, 1
      %p416 = scmp.gt.s32.totalorder %s415, 0
      %s417 = scalar_select %p416, %s415, 0
      %p418 = scmp.lt.s32.totalorder %s23, 1
      %s419 = scalar_select %p418, %s23, 1
      %p420 = scmp.lt.s32.totalorder %s417, 15
      %s421 = scalar_select %p420, %s417, 15
      %s422 = smul.addr %s421, 2
      %s423 = smul.addr %s419, 32
      %s424 = sadd.s32 %s422, %s423
      %s425 = smul.addr %s424, 8
      %s426 = scalar_lea.vmem %s1, %s425
      %s427 = smul.u32 %s24, 16
      %s428 = ssub.s32 %s427, 1
      %p429 = scmp.gt.s32.totalorder %s428, 0
      %s430 = scalar_select %p429, %s428, 0
      %s431 = smul.u32 %s24, 16
      %s432 = sadd.s32 %s431, 16
      %p433 = scmp.lt.s32.totalorder %s432, 15
      %s434 = scalar_select %p433, %s432, 15
      %p435 = scmp.lt.s32.totalorder %s23, 1
      %s436 = scalar_select %p435, %s23, 1
      %p437 = scmp.lt.s32.totalorder %s434, 15
      %s438 = scalar_select %p437, %s434, 15
      %s439 = smul.addr %s438, 2
      %s440 = smul.addr %s436, 32
      %s441 = sadd.s32 %s439, %s440
      %s442 = smul.addr %s441, 8
      %s443 = scalar_lea.vmem %s2, %s442
      %s444 = smul.u32 %s24, 16
      %s445 = sadd.s32 %s444, 16
      %p446 = scmp.lt.s32.totalorder %s445, 15
      %s447 = scalar_select %p446, %s445, 15
      %s448 = smul.u32 16, %s24
      %p449 = scmp.lt.s32.totalorder %s23, 1
      %s450 = scalar_select %p449, %s23, 1
      %p451 = scmp.lt.s32.totalorder %s448, 15
      %s452 = scalar_select %p451, %s448, 15
      %s453 = smul.addr %s452, 2
      %s454 = smul.addr %s450, 32
      %s455 = sadd.s32 %s453, %s454
      %s456 = smul.addr %s455, 8
      %s457 = scalar_lea.vmem %s6, %s456
      %s458 = smul.u32 16, %s24
      %p459 = scmp.lt.s32.totalorder %s23, 1
      %s460 = scalar_select %p459, %s23, 1
      %p461 = scmp.lt.s32.totalorder %s24, 0
      %s462 = scalar_select %p461, %s24, 0
      %s463 = sadd.s32 %s462, %s460
      %s464 = smul.addr %s463, 2
      %s465 = scalar_lea.vmem %s7, %s464
      %v466 = vld [vmem:[%s426] sm:$0xff]
      %v467 = vld [vmem:[%s426 + $0x8] sm:$0xff]
      %v468 = vld [vmem:[%s412] sm:$0xff]
      %v469 = vld [vmem:[%s412 + $0x8] sm:$0xff]
      %v470 = vld [vmem:[%s412 + $0x10] sm:$0xff]
      %v471 = vld [vmem:[%s412 + $0x18] sm:$0xff]
      %v472 = vld [vmem:[%s412 + $0x20] sm:$0xff]
      %v473 = vld [vmem:[%s412 + $0x28] sm:$0xff]
      %v474 = vld [vmem:[%s412 + $0x30] sm:$0xff]
      %v475 = vld [vmem:[%s412 + $0x38] sm:$0xff]
      %v476 = vld [vmem:[%s412 + $0x40] sm:$0xff]
      %v477 = vld [vmem:[%s412 + $0x48] sm:$0xff]
      %v478 = vld [vmem:[%s412 + $0x50] sm:$0xff]
      %v479 = vld [vmem:[%s412 + $0x58] sm:$0xff]
      %v480 = vld [vmem:[%s412 + $0x60] sm:$0xff]
      %v481 = vld [vmem:[%s412 + $0x68] sm:$0xff]
      %v482 = vld [vmem:[%s412 + $0x70] sm:$0xff]
      %v483 = vld [vmem:[%s412 + $0x78] sm:$0xff]
      %v484 = vld [vmem:[%s412 + $0x80] sm:$0xff]
      %v485 = vld [vmem:[%s412 + $0x88] sm:$0xff]
      %v486 = vld [vmem:[%s412 + $0x90] sm:$0xff]
      %v487 = vld [vmem:[%s412 + $0x98] sm:$0xff]
      %v488 = vld [vmem:[%s412 + $0xa0] sm:$0xff]
      %v489 = vld [vmem:[%s412 + $0xa8] sm:$0xff]
      %v490 = vld [vmem:[%s412 + $0xb0] sm:$0xff]
      %v491 = vld [vmem:[%s412 + $0xb8] sm:$0xff]
      %v492 = vld [vmem:[%s412 + $0xc0] sm:$0xff]
      %v493 = vld [vmem:[%s412 + $0xc8] sm:$0xff]
      %v494 = vld [vmem:[%s412 + $0xd0] sm:$0xff]
      %v495 = vld [vmem:[%s412 + $0xd8] sm:$0xff]
      %v496 = vld [vmem:[%s412 + $0xe0] sm:$0xff]
      %v497 = vld [vmem:[%s412 + $0xe8] sm:$0xff]
      %v498 = vld [vmem:[%s412 + $0xf0] sm:$0xff]
      %v499 = vld [vmem:[%s412 + $0xf8] sm:$0xff]
      %v500 = vld [vmem:[%s443] sm:$0xff]
      %v501 = vld [vmem:[%s443 + $0x8] sm:$0xff]
      %p502 = scmp.gt.s32.totalorder %s24, 0
      %s503 = scalar_select %p502, 1, 0
      %v504 = vstv %s503
      %vm505 = vcmp.eq.s32.totalorder %v504, 1
      %p506 = scmp.lt.s32.totalorder %s24, 0
      %s507 = scalar_select %p506, 1, 0
      %v508 = vstv %s507
      %vm509 = vcmp.eq.s32.totalorder %v508, 1
      %v510 = vsel %vm505, 1, 0
      %v511 = vsel %vm509, 1, 0
      %vm512 = vcmp.eq.s32.totalorder %v510, 1
      %vm513 = vcmp.eq.s32.totalorder %v511, 1
      %v514 = vsel %vm512, %v466, 0.0
      %v515 = vsel %vm512, %v467, 0.0
      %v516 = vsel 1, %v468, 0.0
      %v517 = vsel 1, %v469, 0.0
      %v518 = vsel 1, %v470, 0.0
      %v519 = vsel 1, %v471, 0.0
      %v520 = vsel 1, %v472, 0.0
      %v521 = vsel 1, %v473, 0.0
      %v522 = vsel 1, %v474, 0.0
      %v523 = vsel 1, %v475, 0.0
      %v524 = vsel 1, %v476, 0.0
      %v525 = vsel 1, %v477, 0.0
      %v526 = vsel 1, %v478, 0.0
      %v527 = vsel 1, %v479, 0.0
      %v528 = vsel 1, %v480, 0.0
      %v529 = vsel 1, %v481, 0.0
      %v530 = vsel 1, %v482, 0.0
      %v531 = vsel 1, %v483, 0.0
      %v532 = vsel 1, %v484, 0.0
      %v533 = vsel 1, %v485, 0.0
      %v534 = vsel 1, %v486, 0.0
      %v535 = vsel 1, %v487, 0.0
      %v536 = vsel 1, %v488, 0.0
      %v537 = vsel 1, %v489, 0.0
      %v538 = vsel 1, %v490, 0.0
      %v539 = vsel 1, %v491, 0.0
      %v540 = vsel 1, %v492, 0.0
      %v541 = vsel 1, %v493, 0.0
      %v542 = vsel 1, %v494, 0.0
      %v543 = vsel 1, %v495, 0.0
      %v544 = vsel 1, %v496, 0.0
      %v545 = vsel 1, %v497, 0.0
      %v546 = vsel 1, %v498, 0.0
      %v547 = vsel 1, %v499, 0.0
      %v548 = vsel %vm513, %v500, 0.0
      %v549 = vsel %vm513, %v501, 0.0
      %v550 = vlaneseq
      %v551 = vshrl.u32 %v550, 7
      %v552 = vadd.s32 %v551, 8
      %vm553 = vcmp.ge.s32.totalorder %v551, 1
      %vm554 = vcmp.ge.s32.totalorder %v552, 1
      %v555 = vrot.slane %v514, 7
      %v556 = vrot.slane %v516, 7
      %v557 = vrot.slane %v518, 7
      %v558 = vrot.slane %v520, 7
      %v559 = vrot.slane %v522, 7
      %v560 = vrot.slane %v524, 7
      %v561 = vrot.slane %v526, 7
      %v562 = vrot.slane %v528, 7
      %v563 = vrot.slane %v530, 7
      %v564 = vrot.slane %v532, 7
      %v565 = vrot.slane %v534, 7
      %v566 = vrot.slane %v536, 7
      %v567 = vrot.slane %v538, 7
      %v568 = vrot.slane %v540, 7
      %v569 = vrot.slane %v542, 7
      %v570 = vrot.slane %v544, 7
      %v571 = vrot.slane %v546, 7
      %v572 = vrot.slane %v548, 7
      %v573 = vrot.slane %v515, 7
      %v574 = vrot.slane %v517, 7
      %v575 = vrot.slane %v519, 7
      %v576 = vrot.slane %v521, 7
      %v577 = vrot.slane %v523, 7
      %v578 = vrot.slane %v525, 7
      %v579 = vrot.slane %v527, 7
      %v580 = vrot.slane %v529, 7
      %v581 = vrot.slane %v531, 7
      %v582 = vrot.slane %v533, 7
      %v583 = vrot.slane %v535, 7
      %v584 = vrot.slane %v537, 7
      %v585 = vrot.slane %v539, 7
      %v586 = vrot.slane %v541, 7
      %v587 = vrot.slane %v543, 7
      %v588 = vrot.slane %v545, 7
      %v589 = vrot.slane %v547, 7
      %v590 = vrot.slane %v549, 7
      %vm591 = vcmp.lt.s32.totalorder %v551, 1
      %v592 = vsel %vm591, %v555, %v573
      %v593 = vsel %vm591, %v556, %v574
      %v594 = vsel %vm591, %v557, %v575
      %v595 = vsel %vm591, %v558, %v576
      %v596 = vsel %vm591, %v559, %v577
      %v597 = vsel %vm591, %v560, %v578
      %v598 = vsel %vm591, %v561, %v579
      %v599 = vsel %vm591, %v562, %v580
      %v600 = vsel %vm591, %v563, %v581
      %v601 = vsel %vm591, %v564, %v582
      %v602 = vsel %vm591, %v565, %v583
      %v603 = vsel %vm591, %v566, %v584
      %v604 = vsel %vm591, %v567, %v585
      %v605 = vsel %vm591, %v568, %v586
      %v606 = vsel %vm591, %v569, %v587
      %v607 = vsel %vm591, %v570, %v588
      %v608 = vsel %vm591, %v571, %v589
      %v609 = vsel %vm591, %v572, %v590
      %v610 = vsel %vm591, %v573, %v555
      %v611 = vsel %vm591, %v574, %v556
      %v612 = vsel %vm591, %v575, %v557
      %v613 = vsel %vm591, %v576, %v558
      %v614 = vsel %vm591, %v577, %v559
      %v615 = vsel %vm591, %v578, %v560
      %v616 = vsel %vm591, %v579, %v561
      %v617 = vsel %vm591, %v580, %v562
      %v618 = vsel %vm591, %v581, %v563
      %v619 = vsel %vm591, %v582, %v564
      %v620 = vsel %vm591, %v583, %v565
      %v621 = vsel %vm591, %v584, %v566
      %v622 = vsel %vm591, %v585, %v567
      %v623 = vsel %vm591, %v586, %v568
      %v624 = vsel %vm591, %v587, %v569
      %v625 = vsel %vm591, %v588, %v570
      %v626 = vsel %vm591, %v589, %v571
      %v627 = vsel %vm591, %v590, %v572
      %v628 = vsel %vm553, 1, 0
      %v629 = vsel %vm554, 1, 0
      %vm630 = vcmp.eq.s32.totalorder %v628, 1
      %vm631 = vcmp.eq.s32.totalorder %v629, 1
      %v632 = vsel %vm630, %v610, 0.0
      %v633 = vsel %vm631, %v592, 0.0
      %v634 = vsel %vm630, %v611, 0.0
      %v635 = vsel %vm631, %v593, 0.0
      %v636 = vsel %vm630, %v612, 0.0
      %v637 = vsel %vm631, %v594, 0.0
      %v638 = vsel %vm630, %v613, 0.0
      %v639 = vsel %vm631, %v595, 0.0
      %v640 = vsel %vm630, %v614, 0.0
      %v641 = vsel %vm631, %v596, 0.0
      %v642 = vsel %vm630, %v615, 0.0
      %v643 = vsel %vm631, %v597, 0.0
      %v644 = vsel %vm630, %v616, 0.0
      %v645 = vsel %vm631, %v598, 0.0
      %v646 = vsel %vm630, %v617, 0.0
      %v647 = vsel %vm631, %v599, 0.0
      %v648 = vsel %vm630, %v618, 0.0
      %v649 = vsel %vm631, %v600, 0.0
      %v650 = vsel %vm630, %v619, 0.0
      %v651 = vsel %vm631, %v601, 0.0
      %v652 = vsel %vm630, %v620, 0.0
      %v653 = vsel %vm631, %v602, 0.0
      %v654 = vsel %vm630, %v621, 0.0
      %v655 = vsel %vm631, %v603, 0.0
      %v656 = vsel %vm630, %v622, 0.0
      %v657 = vsel %vm631, %v604, 0.0
      %v658 = vsel %vm630, %v623, 0.0
      %v659 = vsel %vm631, %v605, 0.0
      %v660 = vsel %vm630, %v624, 0.0
      %v661 = vsel %vm631, %v606, 0.0
      %v662 = vsel %vm630, %v625, 0.0
      %v663 = vsel %vm631, %v607, 0.0
      %v664 = vsel %vm630, %v626, 0.0
      %v665 = vsel %vm631, %v608, 0.0
      %v666 = vsel %vm630, %v627, 0.0
      %v667 = vsel %vm631, %v609, 0.0
      %vm668 = vcmp.le.s32.totalorder %v551, 14
      %vm669 = vcmp.le.s32.totalorder %v552, 14
      %v670 = vrot.slane %v514, 1
      %v671 = vrot.slane %v516, 1
      %v672 = vrot.slane %v518, 1
      %v673 = vrot.slane %v520, 1
      %v674 = vrot.slane %v522, 1
      %v675 = vrot.slane %v524, 1
      %v676 = vrot.slane %v526, 1
      %v677 = vrot.slane %v528, 1
      %v678 = vrot.slane %v530, 1
      %v679 = vrot.slane %v532, 1
      %v680 = vrot.slane %v534, 1
      %v681 = vrot.slane %v536, 1
      %v682 = vrot.slane %v538, 1
      %v683 = vrot.slane %v540, 1
      %v684 = vrot.slane %v542, 1
      %v685 = vrot.slane %v544, 1
      %v686 = vrot.slane %v546, 1
      %v687 = vrot.slane %v548, 1
      %v688 = vrot.slane %v515, 1
      %v689 = vrot.slane %v517, 1
      %v690 = vrot.slane %v519, 1
      %v691 = vrot.slane %v521, 1
      %v692 = vrot.slane %v523, 1
      %v693 = vrot.slane %v525, 1
      %v694 = vrot.slane %v527, 1
      %v695 = vrot.slane %v529, 1
      %v696 = vrot.slane %v531, 1
      %v697 = vrot.slane %v533, 1
      %v698 = vrot.slane %v535, 1
      %v699 = vrot.slane %v537, 1
      %v700 = vrot.slane %v539, 1
      %v701 = vrot.slane %v541, 1
      %v702 = vrot.slane %v543, 1
      %v703 = vrot.slane %v545, 1
      %v704 = vrot.slane %v547, 1
      %v705 = vrot.slane %v549, 1
      %vm706 = vcmp.lt.s32.totalorder %v551, 7
      %v707 = vsel %vm706, %v670, %v688
      %v708 = vsel %vm706, %v671, %v689
      %v709 = vsel %vm706, %v672, %v690
      %v710 = vsel %vm706, %v673, %v691
      %v711 = vsel %vm706, %v674, %v692
      %v712 = vsel %vm706, %v675, %v693
      %v713 = vsel %vm706, %v676, %v694
      %v714 = vsel %vm706, %v677, %v695
      %v715 = vsel %vm706, %v678, %v696
      %v716 = vsel %vm706, %v679, %v697
      %v717 = vsel %vm706, %v680, %v698
      %v718 = vsel %vm706, %v681, %v699
      %v719 = vsel %vm706, %v682, %v700
      %v720 = vsel %vm706, %v683, %v701
      %v721 = vsel %vm706, %v684, %v702
      %v722 = vsel %vm706, %v685, %v703
      %v723 = vsel %vm706, %v686, %v704
      %v724 = vsel %vm706, %v687, %v705
      %v725 = vsel %vm706, %v688, %v670
      %v726 = vsel %vm706, %v689, %v671
      %v727 = vsel %vm706, %v690, %v672
      %v728 = vsel %vm706, %v691, %v673
      %v729 = vsel %vm706, %v692, %v674
      %v730 = vsel %vm706, %v693, %v675
      %v731 = vsel %vm706, %v694, %v676
      %v732 = vsel %vm706, %v695, %v677
      %v733 = vsel %vm706, %v696, %v678
      %v734 = vsel %vm706, %v697, %v679
      %v735 = vsel %vm706, %v698, %v680
      %v736 = vsel %vm706, %v699, %v681
      %v737 = vsel %vm706, %v700, %v682
      %v738 = vsel %vm706, %v701, %v683
      %v739 = vsel %vm706, %v702, %v684
      %v740 = vsel %vm706, %v703, %v685
      %v741 = vsel %vm706, %v704, %v686
      %v742 = vsel %vm706, %v705, %v687
      %v743 = vsel %vm668, 1, 0
      %v744 = vsel %vm669, 1, 0
      %vm745 = vcmp.eq.s32.totalorder %v743, 1
      %vm746 = vcmp.eq.s32.totalorder %v744, 1
      %v747 = vsel %vm745, %v707, 0.0
      %v748 = vsel %vm746, %v725, 0.0
      %v749 = vsel %vm745, %v708, 0.0
      %v750 = vsel %vm746, %v726, 0.0
      %v751 = vsel %vm745, %v709, 0.0
      %v752 = vsel %vm746, %v727, 0.0
      %v753 = vsel %vm745, %v710, 0.0
      %v754 = vsel %vm746, %v728, 0.0
      %v755 = vsel %vm745, %v711, 0.0
      %v756 = vsel %vm746, %v729, 0.0
      %v757 = vsel %vm745, %v712, 0.0
      %v758 = vsel %vm746, %v730, 0.0
      %v759 = vsel %vm745, %v713, 0.0
      %v760 = vsel %vm746, %v731, 0.0
      %v761 = vsel %vm745, %v714, 0.0
      %v762 = vsel %vm746, %v732, 0.0
      %v763 = vsel %vm745, %v715, 0.0
      %v764 = vsel %vm746, %v733, 0.0
      %v765 = vsel %vm745, %v716, 0.0
      %v766 = vsel %vm746, %v734, 0.0
      %v767 = vsel %vm745, %v717, 0.0
      %v768 = vsel %vm746, %v735, 0.0
      %v769 = vsel %vm745, %v718, 0.0
      %v770 = vsel %vm746, %v736, 0.0
      %v771 = vsel %vm745, %v719, 0.0
      %v772 = vsel %vm746, %v737, 0.0
      %v773 = vsel %vm745, %v720, 0.0
      %v774 = vsel %vm746, %v738, 0.0
      %v775 = vsel %vm745, %v721, 0.0
      %v776 = vsel %vm746, %v739, 0.0
      %v777 = vsel %vm745, %v722, 0.0
      %v778 = vsel %vm746, %v740, 0.0
      %v779 = vsel %vm745, %v723, 0.0
      %v780 = vsel %vm746, %v741, 0.0
      %v781 = vsel %vm745, %v724, 0.0
      %v782 = vsel %vm746, %v742, 0.0
      %815 = vrot.lane.b32.xlu0 %v514, 4
      %v816 = vpop.permute.xlu0 %815
      %817 = vrot.lane.b32.xlu0 %v515, 4
      %v818 = vpop.permute.xlu0 %817
      %819 = vrot.lane.b32.xlu0 %v516, 4
      %v820 = vpop.permute.xlu0 %819
      %821 = vrot.lane.b32.xlu0 %v517, 4
      %v822 = vpop.permute.xlu0 %821
      %823 = vrot.lane.b32.xlu0 %v518, 4
      %v824 = vpop.permute.xlu0 %823
      %825 = vrot.lane.b32.xlu0 %v519, 4
      %v826 = vpop.permute.xlu0 %825
      %827 = vrot.lane.b32.xlu0 %v520, 4
      %v828 = vpop.permute.xlu0 %827
      %829 = vrot.lane.b32.xlu0 %v521, 4
      %v830 = vpop.permute.xlu0 %829
      %831 = vrot.lane.b32.xlu0 %v522, 4
      %v832 = vpop.permute.xlu0 %831
      %833 = vrot.lane.b32.xlu0 %v523, 4
      %v834 = vpop.permute.xlu0 %833
      %835 = vrot.lane.b32.xlu0 %v524, 4
      %v836 = vpop.permute.xlu0 %835
      %837 = vrot.lane.b32.xlu0 %v525, 4
      %v838 = vpop.permute.xlu0 %837
      %839 = vrot.lane.b32.xlu0 %v526, 4
      %v840 = vpop.permute.xlu0 %839
      %841 = vrot.lane.b32.xlu0 %v527, 4
      %v842 = vpop.permute.xlu0 %841
      %843 = vrot.lane.b32.xlu0 %v528, 4
      %v844 = vpop.permute.xlu0 %843
      %845 = vrot.lane.b32.xlu0 %v529, 4
      %v846 = vpop.permute.xlu0 %845
      %847 = vrot.lane.b32.xlu0 %v530, 4
      %v848 = vpop.permute.xlu0 %847
      %849 = vrot.lane.b32.xlu0 %v531, 4
      %v850 = vpop.permute.xlu0 %849
      %851 = vrot.lane.b32.xlu0 %v532, 4
      %v852 = vpop.permute.xlu0 %851
      %853 = vrot.lane.b32.xlu0 %v533, 4
      %v854 = vpop.permute.xlu0 %853
      %855 = vrot.lane.b32.xlu0 %v534, 4
      %v856 = vpop.permute.xlu0 %855
      %857 = vrot.lane.b32.xlu0 %v535, 4
      %v858 = vpop.permute.xlu0 %857
      %859 = vrot.lane.b32.xlu0 %v536, 4
      %v860 = vpop.permute.xlu0 %859
      %861 = vrot.lane.b32.xlu0 %v537, 4
      %v862 = vpop.permute.xlu0 %861
      %863 = vrot.lane.b32.xlu0 %v538, 4
      %v864 = vpop.permute.xlu0 %863
      %865 = vrot.lane.b32.xlu0 %v539, 4
      %v866 = vpop.permute.xlu0 %865
      %867 = vrot.lane.b32.xlu0 %v540, 4
      %v868 = vpop.permute.xlu0 %867
      %869 = vrot.lane.b32.xlu0 %v541, 4
      %v870 = vpop.permute.xlu0 %869
      %871 = vrot.lane.b32.xlu0 %v542, 4
      %v872 = vpop.permute.xlu0 %871
      %873 = vrot.lane.b32.xlu0 %v543, 4
      %v874 = vpop.permute.xlu0 %873
      %875 = vrot.lane.b32.xlu0 %v544, 4
      %v876 = vpop.permute.xlu0 %875
      %877 = vrot.lane.b32.xlu0 %v545, 4
      %v878 = vpop.permute.xlu0 %877
      %943 = vrot.lane.b32.xlu0 %v747, 8
      %v944 = vpop.permute.xlu0 %943
      %945 = vrot.lane.b32.xlu0 %v748, 8
      %v946 = vpop.permute.xlu0 %945
      %947 = vrot.lane.b32.xlu0 %v749, 8
      %v948 = vpop.permute.xlu0 %947
      %949 = vrot.lane.b32.xlu0 %v750, 8
      %v950 = vpop.permute.xlu0 %949
      %951 = vrot.lane.b32.xlu0 %v751, 8
      %v952 = vpop.permute.xlu0 %951
      %953 = vrot.lane.b32.xlu0 %v752, 8
      %v954 = vpop.permute.xlu0 %953
      %955 = vrot.lane.b32.xlu0 %v753, 8
      %v956 = vpop.permute.xlu0 %955
      %957 = vrot.lane.b32.xlu0 %v754, 8
      %v958 = vpop.permute.xlu0 %957
      %959 = vrot.lane.b32.xlu0 %v755, 8
      %v960 = vpop.permute.xlu0 %959
      %961 = vrot.lane.b32.xlu0 %v756, 8
      %v962 = vpop.permute.xlu0 %961
      %963 = vrot.lane.b32.xlu0 %v757, 8
      %v964 = vpop.permute.xlu0 %963
      %965 = vrot.lane.b32.xlu0 %v758, 8
      %v966 = vpop.permute.xlu0 %965
      %967 = vrot.lane.b32.xlu0 %v759, 8
      %v968 = vpop.permute.xlu0 %967
      %969 = vrot.lane.b32.xlu0 %v760, 8
      %v970 = vpop.permute.xlu0 %969
      %971 = vrot.lane.b32.xlu0 %v761, 8
      %v972 = vpop.permute.xlu0 %971
      %973 = vrot.lane.b32.xlu0 %v762, 8
      %v974 = vpop.permute.xlu0 %973
      %975 = vrot.lane.b32.xlu0 %v763, 8
      %v976 = vpop.permute.xlu0 %975
      %977 = vrot.lane.b32.xlu0 %v764, 8
      %v978 = vpop.permute.xlu0 %977
      %979 = vrot.lane.b32.xlu0 %v765, 8
      %v980 = vpop.permute.xlu0 %979
      %981 = vrot.lane.b32.xlu0 %v766, 8
      %v982 = vpop.permute.xlu0 %981
      %983 = vrot.lane.b32.xlu0 %v767, 8
      %v984 = vpop.permute.xlu0 %983
      %985 = vrot.lane.b32.xlu0 %v768, 8
      %v986 = vpop.permute.xlu0 %985
      %987 = vrot.lane.b32.xlu0 %v769, 8
      %v988 = vpop.permute.xlu0 %987
      %989 = vrot.lane.b32.xlu0 %v770, 8
      %v990 = vpop.permute.xlu0 %989
      %991 = vrot.lane.b32.xlu0 %v771, 8
      %v992 = vpop.permute.xlu0 %991
      %993 = vrot.lane.b32.xlu0 %v772, 8
      %v994 = vpop.permute.xlu0 %993
      %995 = vrot.lane.b32.xlu0 %v773, 8
      %v996 = vpop.permute.xlu0 %995
      %997 = vrot.lane.b32.xlu0 %v774, 8
      %v998 = vpop.permute.xlu0 %997
      %999 = vrot.lane.b32.xlu0 %v775, 8
      %v1000 = vpop.permute.xlu0 %999
      %1001 = vrot.lane.b32.xlu0 %v776, 8
      %v1002 = vpop.permute.xlu0 %1001
      %1003 = vrot.lane.b32.xlu0 %v777, 8
      %v1004 = vpop.permute.xlu0 %1003
      %1005 = vrot.lane.b32.xlu0 %v778, 8
      %v1006 = vpop.permute.xlu0 %1005
      %1071 = vrot.lane.b32.xlu0 %v634, 12
      %v1072 = vpop.permute.xlu0 %1071
      %1073 = vrot.lane.b32.xlu0 %v635, 12
      %v1074 = vpop.permute.xlu0 %1073
      %1075 = vrot.lane.b32.xlu0 %v636, 12
      %v1076 = vpop.permute.xlu0 %1075
      %1077 = vrot.lane.b32.xlu0 %v637, 12
      %v1078 = vpop.permute.xlu0 %1077
      %1079 = vrot.lane.b32.xlu0 %v638, 12
      %v1080 = vpop.permute.xlu0 %1079
      %1081 = vrot.lane.b32.xlu0 %v639, 12
      %v1082 = vpop.permute.xlu0 %1081
      %1083 = vrot.lane.b32.xlu0 %v640, 12
      %v1084 = vpop.permute.xlu0 %1083
      %1085 = vrot.lane.b32.xlu0 %v641, 12
      %v1086 = vpop.permute.xlu0 %1085
      %1087 = vrot.lane.b32.xlu0 %v642, 12
      %v1088 = vpop.permute.xlu0 %1087
      %1089 = vrot.lane.b32.xlu0 %v643, 12
      %v1090 = vpop.permute.xlu0 %1089
      %1091 = vrot.lane.b32.xlu0 %v644, 12
      %v1092 = vpop.permute.xlu0 %1091
      %1093 = vrot.lane.b32.xlu0 %v645, 12
      %v1094 = vpop.permute.xlu0 %1093
      %1095 = vrot.lane.b32.xlu0 %v646, 12
      %v1096 = vpop.permute.xlu0 %1095
      %1097 = vrot.lane.b32.xlu0 %v647, 12
      %v1098 = vpop.permute.xlu0 %1097
      %1099 = vrot.lane.b32.xlu0 %v648, 12
      %v1100 = vpop.permute.xlu0 %1099
      %1101 = vrot.lane.b32.xlu0 %v649, 12
      %v1102 = vpop.permute.xlu0 %1101
      %1103 = vrot.lane.b32.xlu0 %v650, 12
      %v1104 = vpop.permute.xlu0 %1103
      %1105 = vrot.lane.b32.xlu0 %v651, 12
      %v1106 = vpop.permute.xlu0 %1105
      %1107 = vrot.lane.b32.xlu0 %v652, 12
      %v1108 = vpop.permute.xlu0 %1107
      %1109 = vrot.lane.b32.xlu0 %v653, 12
      %v1110 = vpop.permute.xlu0 %1109
      %1111 = vrot.lane.b32.xlu0 %v654, 12
      %v1112 = vpop.permute.xlu0 %1111
      %1113 = vrot.lane.b32.xlu0 %v655, 12
      %v1114 = vpop.permute.xlu0 %1113
      %1115 = vrot.lane.b32.xlu0 %v656, 12
      %v1116 = vpop.permute.xlu0 %1115
      %1117 = vrot.lane.b32.xlu0 %v657, 12
      %v1118 = vpop.permute.xlu0 %1117
      %1119 = vrot.lane.b32.xlu0 %v658, 12
      %v1120 = vpop.permute.xlu0 %1119
      %1121 = vrot.lane.b32.xlu0 %v659, 12
      %v1122 = vpop.permute.xlu0 %1121
      %1123 = vrot.lane.b32.xlu0 %v660, 12
      %v1124 = vpop.permute.xlu0 %1123
      %1125 = vrot.lane.b32.xlu0 %v661, 12
      %v1126 = vpop.permute.xlu0 %1125
      %1127 = vrot.lane.b32.xlu0 %v662, 12
      %v1128 = vpop.permute.xlu0 %1127
      %1129 = vrot.lane.b32.xlu0 %v663, 12
      %v1130 = vpop.permute.xlu0 %1129
      %1131 = vrot.lane.b32.xlu0 %v664, 12
      %v1132 = vpop.permute.xlu0 %1131
      %1133 = vrot.lane.b32.xlu0 %v665, 12
      %v1134 = vpop.permute.xlu0 %1133
      %1169 = vrot.lane.b32.xlu0 %v516, 16
      %v1170 = vpop.permute.xlu0 %1169
      %1171 = vrot.lane.b32.xlu0 %v517, 16
      %v1172 = vpop.permute.xlu0 %1171
      %1173 = vrot.lane.b32.xlu0 %v518, 16
      %v1174 = vpop.permute.xlu0 %1173
      %1175 = vrot.lane.b32.xlu0 %v519, 16
      %v1176 = vpop.permute.xlu0 %1175
      %1177 = vrot.lane.b32.xlu0 %v520, 16
      %v1178 = vpop.permute.xlu0 %1177
      %1179 = vrot.lane.b32.xlu0 %v521, 16
      %v1180 = vpop.permute.xlu0 %1179
      %1181 = vrot.lane.b32.xlu0 %v522, 16
      %v1182 = vpop.permute.xlu0 %1181
      %1183 = vrot.lane.b32.xlu0 %v523, 16
      %v1184 = vpop.permute.xlu0 %1183
      %1185 = vrot.lane.b32.xlu0 %v524, 16
      %v1186 = vpop.permute.xlu0 %1185
      %1187 = vrot.lane.b32.xlu0 %v525, 16
      %v1188 = vpop.permute.xlu0 %1187
      %1189 = vrot.lane.b32.xlu0 %v526, 16
      %v1190 = vpop.permute.xlu0 %1189
      %1191 = vrot.lane.b32.xlu0 %v527, 16
      %v1192 = vpop.permute.xlu0 %1191
      %1193 = vrot.lane.b32.xlu0 %v528, 16
      %v1194 = vpop.permute.xlu0 %1193
      %1195 = vrot.lane.b32.xlu0 %v529, 16
      %v1196 = vpop.permute.xlu0 %1195
      %1197 = vrot.lane.b32.xlu0 %v530, 16
      %v1198 = vpop.permute.xlu0 %1197
      %1199 = vrot.lane.b32.xlu0 %v531, 16
      %v1200 = vpop.permute.xlu0 %1199
      %1201 = vrot.lane.b32.xlu0 %v532, 16
      %v1202 = vpop.permute.xlu0 %1201
      %1203 = vrot.lane.b32.xlu0 %v533, 16
      %v1204 = vpop.permute.xlu0 %1203
      %1205 = vrot.lane.b32.xlu0 %v534, 16
      %v1206 = vpop.permute.xlu0 %1205
      %1207 = vrot.lane.b32.xlu0 %v535, 16
      %v1208 = vpop.permute.xlu0 %1207
      %1209 = vrot.lane.b32.xlu0 %v536, 16
      %v1210 = vpop.permute.xlu0 %1209
      %1211 = vrot.lane.b32.xlu0 %v537, 16
      %v1212 = vpop.permute.xlu0 %1211
      %1213 = vrot.lane.b32.xlu0 %v538, 16
      %v1214 = vpop.permute.xlu0 %1213
      %1215 = vrot.lane.b32.xlu0 %v539, 16
      %v1216 = vpop.permute.xlu0 %1215
      %1217 = vrot.lane.b32.xlu0 %v540, 16
      %v1218 = vpop.permute.xlu0 %1217
      %1219 = vrot.lane.b32.xlu0 %v541, 16
      %v1220 = vpop.permute.xlu0 %1219
      %1221 = vrot.lane.b32.xlu0 %v542, 16
      %v1222 = vpop.permute.xlu0 %1221
      %1223 = vrot.lane.b32.xlu0 %v543, 16
      %v1224 = vpop.permute.xlu0 %1223
      %1225 = vrot.lane.b32.xlu0 %v544, 16
      %v1226 = vpop.permute.xlu0 %1225
      %1227 = vrot.lane.b32.xlu0 %v545, 16
      %v1228 = vpop.permute.xlu0 %1227
      %1229 = vrot.lane.b32.xlu0 %v546, 16
      %v1230 = vpop.permute.xlu0 %1229
      %1231 = vrot.lane.b32.xlu0 %v547, 16
      %v1232 = vpop.permute.xlu0 %1231
      %1267 = vrot.lane.b32.xlu0 %v749, 20
      %v1268 = vpop.permute.xlu0 %1267
      %1269 = vrot.lane.b32.xlu0 %v750, 20
      %v1270 = vpop.permute.xlu0 %1269
      %1271 = vrot.lane.b32.xlu0 %v751, 20
      %v1272 = vpop.permute.xlu0 %1271
      %1273 = vrot.lane.b32.xlu0 %v752, 20
      %v1274 = vpop.permute.xlu0 %1273
      %1275 = vrot.lane.b32.xlu0 %v753, 20
      %v1276 = vpop.permute.xlu0 %1275
      %1277 = vrot.lane.b32.xlu0 %v754, 20
      %v1278 = vpop.permute.xlu0 %1277
      %1279 = vrot.lane.b32.xlu0 %v755, 20
      %v1280 = vpop.permute.xlu0 %1279
      %1281 = vrot.lane.b32.xlu0 %v756, 20
      %v1282 = vpop.permute.xlu0 %1281
      %1283 = vrot.lane.b32.xlu0 %v757, 20
      %v1284 = vpop.permute.xlu0 %1283
      %1285 = vrot.lane.b32.xlu0 %v758, 20
      %v1286 = vpop.permute.xlu0 %1285
      %1287 = vrot.lane.b32.xlu0 %v759, 20
      %v1288 = vpop.permute.xlu0 %1287
      %1289 = vrot.lane.b32.xlu0 %v760, 20
      %v1290 = vpop.permute.xlu0 %1289
      %1291 = vrot.lane.b32.xlu0 %v761, 20
      %v1292 = vpop.permute.xlu0 %1291
      %1293 = vrot.lane.b32.xlu0 %v762, 20
      %v1294 = vpop.permute.xlu0 %1293
      %1295 = vrot.lane.b32.xlu0 %v763, 20
      %v1296 = vpop.permute.xlu0 %1295
      %1297 = vrot.lane.b32.xlu0 %v764, 20
      %v1298 = vpop.permute.xlu0 %1297
      %1299 = vrot.lane.b32.xlu0 %v765, 20
      %v1300 = vpop.permute.xlu0 %1299
      %1301 = vrot.lane.b32.xlu0 %v766, 20
      %v1302 = vpop.permute.xlu0 %1301
      %1303 = vrot.lane.b32.xlu0 %v767, 20
      %v1304 = vpop.permute.xlu0 %1303
      %1305 = vrot.lane.b32.xlu0 %v768, 20
      %v1306 = vpop.permute.xlu0 %1305
      %1307 = vrot.lane.b32.xlu0 %v769, 20
      %v1308 = vpop.permute.xlu0 %1307
      %1309 = vrot.lane.b32.xlu0 %v770, 20
      %v1310 = vpop.permute.xlu0 %1309
      %1311 = vrot.lane.b32.xlu0 %v771, 20
      %v1312 = vpop.permute.xlu0 %1311
      %1313 = vrot.lane.b32.xlu0 %v772, 20
      %v1314 = vpop.permute.xlu0 %1313
      %1315 = vrot.lane.b32.xlu0 %v773, 20
      %v1316 = vpop.permute.xlu0 %1315
      %1317 = vrot.lane.b32.xlu0 %v774, 20
      %v1318 = vpop.permute.xlu0 %1317
      %1319 = vrot.lane.b32.xlu0 %v775, 20
      %v1320 = vpop.permute.xlu0 %1319
      %1321 = vrot.lane.b32.xlu0 %v776, 20
      %v1322 = vpop.permute.xlu0 %1321
      %1323 = vrot.lane.b32.xlu0 %v777, 20
      %v1324 = vpop.permute.xlu0 %1323
      %1325 = vrot.lane.b32.xlu0 %v778, 20
      %v1326 = vpop.permute.xlu0 %1325
      %1327 = vrot.lane.b32.xlu0 %v779, 20
      %v1328 = vpop.permute.xlu0 %1327
      %1329 = vrot.lane.b32.xlu0 %v780, 20
      %v1330 = vpop.permute.xlu0 %1329
      %1365 = vrot.lane.b32.xlu0 %v636, 24
      %v1366 = vpop.permute.xlu0 %1365
      %1367 = vrot.lane.b32.xlu0 %v637, 24
      %v1368 = vpop.permute.xlu0 %1367
      %1369 = vrot.lane.b32.xlu0 %v638, 24
      %v1370 = vpop.permute.xlu0 %1369
      %1371 = vrot.lane.b32.xlu0 %v639, 24
      %v1372 = vpop.permute.xlu0 %1371
      %1373 = vrot.lane.b32.xlu0 %v640, 24
      %v1374 = vpop.permute.xlu0 %1373
      %1375 = vrot.lane.b32.xlu0 %v641, 24
      %v1376 = vpop.permute.xlu0 %1375
      %1377 = vrot.lane.b32.xlu0 %v642, 24
      %v1378 = vpop.permute.xlu0 %1377
      %1379 = vrot.lane.b32.xlu0 %v643, 24
      %v1380 = vpop.permute.xlu0 %1379
      %1381 = vrot.lane.b32.xlu0 %v644, 24
      %v1382 = vpop.permute.xlu0 %1381
      %1383 = vrot.lane.b32.xlu0 %v645, 24
      %v1384 = vpop.permute.xlu0 %1383
      %1385 = vrot.lane.b32.xlu0 %v646, 24
      %v1386 = vpop.permute.xlu0 %1385
      %1387 = vrot.lane.b32.xlu0 %v647, 24
      %v1388 = vpop.permute.xlu0 %1387
      %1389 = vrot.lane.b32.xlu0 %v648, 24
      %v1390 = vpop.permute.xlu0 %1389
      %1391 = vrot.lane.b32.xlu0 %v649, 24
      %v1392 = vpop.permute.xlu0 %1391
      %1393 = vrot.lane.b32.xlu0 %v650, 24
      %v1394 = vpop.permute.xlu0 %1393
      %1395 = vrot.lane.b32.xlu0 %v651, 24
      %v1396 = vpop.permute.xlu0 %1395
      %1397 = vrot.lane.b32.xlu0 %v652, 24
      %v1398 = vpop.permute.xlu0 %1397
      %1399 = vrot.lane.b32.xlu0 %v653, 24
      %v1400 = vpop.permute.xlu0 %1399
      %1401 = vrot.lane.b32.xlu0 %v654, 24
      %v1402 = vpop.permute.xlu0 %1401
      %1403 = vrot.lane.b32.xlu0 %v655, 24
      %v1404 = vpop.permute.xlu0 %1403
      %1405 = vrot.lane.b32.xlu0 %v656, 24
      %v1406 = vpop.permute.xlu0 %1405
      %1407 = vrot.lane.b32.xlu0 %v657, 24
      %v1408 = vpop.permute.xlu0 %1407
      %1409 = vrot.lane.b32.xlu0 %v658, 24
      %v1410 = vpop.permute.xlu0 %1409
      %1411 = vrot.lane.b32.xlu0 %v659, 24
      %v1412 = vpop.permute.xlu0 %1411
      %1413 = vrot.lane.b32.xlu0 %v660, 24
      %v1414 = vpop.permute.xlu0 %1413
      %1415 = vrot.lane.b32.xlu0 %v661, 24
      %v1416 = vpop.permute.xlu0 %1415
      %1417 = vrot.lane.b32.xlu0 %v662, 24
      %v1418 = vpop.permute.xlu0 %1417
      %1419 = vrot.lane.b32.xlu0 %v663, 24
      %v1420 = vpop.permute.xlu0 %1419
      %1421 = vrot.lane.b32.xlu0 %v664, 24
      %v1422 = vpop.permute.xlu0 %1421
      %1423 = vrot.lane.b32.xlu0 %v665, 24
      %v1424 = vpop.permute.xlu0 %1423
      %1425 = vrot.lane.b32.xlu0 %v666, 24
      %v1426 = vpop.permute.xlu0 %1425
      %1427 = vrot.lane.b32.xlu0 %v667, 24
      %v1428 = vpop.permute.xlu0 %1427
      %1463 = vrot.lane.b32.xlu0 %v518, 28
      %v1464 = vpop.permute.xlu0 %1463
      %1465 = vrot.lane.b32.xlu0 %v519, 28
      %v1466 = vpop.permute.xlu0 %1465
      %1467 = vrot.lane.b32.xlu0 %v520, 28
      %v1468 = vpop.permute.xlu0 %1467
      %1469 = vrot.lane.b32.xlu0 %v521, 28
      %v1470 = vpop.permute.xlu0 %1469
      %1471 = vrot.lane.b32.xlu0 %v522, 28
      %v1472 = vpop.permute.xlu0 %1471
      %1473 = vrot.lane.b32.xlu0 %v523, 28
      %v1474 = vpop.permute.xlu0 %1473
      %1475 = vrot.lane.b32.xlu0 %v524, 28
      %v1476 = vpop.permute.xlu0 %1475
      %1477 = vrot.lane.b32.xlu0 %v525, 28
      %v1478 = vpop.permute.xlu0 %1477
      %1479 = vrot.lane.b32.xlu0 %v526, 28
      %v1480 = vpop.permute.xlu0 %1479
      %1481 = vrot.lane.b32.xlu0 %v527, 28
      %v1482 = vpop.permute.xlu0 %1481
      %1483 = vrot.lane.b32.xlu0 %v528, 28
      %v1484 = vpop.permute.xlu0 %1483
      %1485 = vrot.lane.b32.xlu0 %v529, 28
      %v1486 = vpop.permute.xlu0 %1485
      %1487 = vrot.lane.b32.xlu0 %v530, 28
      %v1488 = vpop.permute.xlu0 %1487
      %1489 = vrot.lane.b32.xlu0 %v531, 28
      %v1490 = vpop.permute.xlu0 %1489
      %1491 = vrot.lane.b32.xlu0 %v532, 28
      %v1492 = vpop.permute.xlu0 %1491
      %1493 = vrot.lane.b32.xlu0 %v533, 28
      %v1494 = vpop.permute.xlu0 %1493
      %1495 = vrot.lane.b32.xlu0 %v534, 28
      %v1496 = vpop.permute.xlu0 %1495
      %1497 = vrot.lane.b32.xlu0 %v535, 28
      %v1498 = vpop.permute.xlu0 %1497
      %1499 = vrot.lane.b32.xlu0 %v536, 28
      %v1500 = vpop.permute.xlu0 %1499
      %1501 = vrot.lane.b32.xlu0 %v537, 28
      %v1502 = vpop.permute.xlu0 %1501
      %1503 = vrot.lane.b32.xlu0 %v538, 28
      %v1504 = vpop.permute.xlu0 %1503
      %1505 = vrot.lane.b32.xlu0 %v539, 28
      %v1506 = vpop.permute.xlu0 %1505
      %1507 = vrot.lane.b32.xlu0 %v540, 28
      %v1508 = vpop.permute.xlu0 %1507
      %1509 = vrot.lane.b32.xlu0 %v541, 28
      %v1510 = vpop.permute.xlu0 %1509
      %1511 = vrot.lane.b32.xlu0 %v542, 28
      %v1512 = vpop.permute.xlu0 %1511
      %1513 = vrot.lane.b32.xlu0 %v543, 28
      %v1514 = vpop.permute.xlu0 %1513
      %1515 = vrot.lane.b32.xlu0 %v544, 28
      %v1516 = vpop.permute.xlu0 %1515
      %1517 = vrot.lane.b32.xlu0 %v545, 28
      %v1518 = vpop.permute.xlu0 %1517
      %1519 = vrot.lane.b32.xlu0 %v546, 28
      %v1520 = vpop.permute.xlu0 %1519
      %1521 = vrot.lane.b32.xlu0 %v547, 28
      %v1522 = vpop.permute.xlu0 %1521
      %1523 = vrot.lane.b32.xlu0 %v548, 28
      %v1524 = vpop.permute.xlu0 %1523
      %1525 = vrot.lane.b32.xlu0 %v549, 28
      %v1526 = vpop.permute.xlu0 %1525
      %1561 = vrot.lane.b32.xlu0 %v751, 32
      %v1562 = vpop.permute.xlu0 %1561
      %1563 = vrot.lane.b32.xlu0 %v752, 32
      %v1564 = vpop.permute.xlu0 %1563
      %1565 = vrot.lane.b32.xlu0 %v753, 32
      %v1566 = vpop.permute.xlu0 %1565
      %1567 = vrot.lane.b32.xlu0 %v754, 32
      %v1568 = vpop.permute.xlu0 %1567
      %1569 = vrot.lane.b32.xlu0 %v755, 32
      %v1570 = vpop.permute.xlu0 %1569
      %1571 = vrot.lane.b32.xlu0 %v756, 32
      %v1572 = vpop.permute.xlu0 %1571
      %1573 = vrot.lane.b32.xlu0 %v757, 32
      %v1574 = vpop.permute.xlu0 %1573
      %1575 = vrot.lane.b32.xlu0 %v758, 32
      %v1576 = vpop.permute.xlu0 %1575
      %1577 = vrot.lane.b32.xlu0 %v759, 32
      %v1578 = vpop.permute.xlu0 %1577
      %1579 = vrot.lane.b32.xlu0 %v760, 32
      %v1580 = vpop.permute.xlu0 %1579
      %1581 = vrot.lane.b32.xlu0 %v761, 32
      %v1582 = vpop.permute.xlu0 %1581
      %1583 = vrot.lane.b32.xlu0 %v762, 32
      %v1584 = vpop.permute.xlu0 %1583
      %1585 = vrot.lane.b32.xlu0 %v763, 32
      %v1586 = vpop.permute.xlu0 %1585
      %1587 = vrot.lane.b32.xlu0 %v764, 32
      %v1588 = vpop.permute.xlu0 %1587
      %1589 = vrot.lane.b32.xlu0 %v765, 32
      %v1590 = vpop.permute.xlu0 %1589
      %1591 = vrot.lane.b32.xlu0 %v766, 32
      %v1592 = vpop.permute.xlu0 %1591
      %1593 = vrot.lane.b32.xlu0 %v767, 32
      %v1594 = vpop.permute.xlu0 %1593
      %1595 = vrot.lane.b32.xlu0 %v768, 32
      %v1596 = vpop.permute.xlu0 %1595
      %1597 = vrot.lane.b32.xlu0 %v769, 32
      %v1598 = vpop.permute.xlu0 %1597
      %1599 = vrot.lane.b32.xlu0 %v770, 32
      %v1600 = vpop.permute.xlu0 %1599
      %1601 = vrot.lane.b32.xlu0 %v771, 32
      %v1602 = vpop.permute.xlu0 %1601
      %1603 = vrot.lane.b32.xlu0 %v772, 32
      %v1604 = vpop.permute.xlu0 %1603
      %1605 = vrot.lane.b32.xlu0 %v773, 32
      %v1606 = vpop.permute.xlu0 %1605
      %1607 = vrot.lane.b32.xlu0 %v774, 32
      %v1608 = vpop.permute.xlu0 %1607
      %1609 = vrot.lane.b32.xlu0 %v775, 32
      %v1610 = vpop.permute.xlu0 %1609
      %1611 = vrot.lane.b32.xlu0 %v776, 32
      %v1612 = vpop.permute.xlu0 %1611
      %1613 = vrot.lane.b32.xlu0 %v777, 32
      %v1614 = vpop.permute.xlu0 %1613
      %1615 = vrot.lane.b32.xlu0 %v778, 32
      %v1616 = vpop.permute.xlu0 %1615
      %1617 = vrot.lane.b32.xlu0 %v779, 32
      %v1618 = vpop.permute.xlu0 %1617
      %1619 = vrot.lane.b32.xlu0 %v780, 32
      %v1620 = vpop.permute.xlu0 %1619
      %1621 = vrot.lane.b32.xlu0 %v781, 32
      %v1622 = vpop.permute.xlu0 %1621
      %1623 = vrot.lane.b32.xlu0 %v782, 32
      %v1624 = vpop.permute.xlu0 %1623
      %vm1657 = vcmask 31744
      %v1658 = vsel %vm1657, %v632, %v816
      %v1659 = vsel %vm1657, %v633, %v818
      %v1660 = vsel %vm1657, %v634, %v820
      %v1661 = vsel %vm1657, %v635, %v822
      %v1662 = vsel %vm1657, %v636, %v824
      %v1663 = vsel %vm1657, %v637, %v826
      %v1664 = vsel %vm1657, %v638, %v828
      %v1665 = vsel %vm1657, %v639, %v830
      %v1666 = vsel %vm1657, %v640, %v832
      %v1667 = vsel %vm1657, %v641, %v834
      %v1668 = vsel %vm1657, %v642, %v836
      %v1669 = vsel %vm1657, %v643, %v838
      %v1670 = vsel %vm1657, %v644, %v840
      %v1671 = vsel %vm1657, %v645, %v842
      %v1672 = vsel %vm1657, %v646, %v844
      %v1673 = vsel %vm1657, %v647, %v846
      %v1674 = vsel %vm1657, %v648, %v848
      %v1675 = vsel %vm1657, %v649, %v850
      %v1676 = vsel %vm1657, %v650, %v852
      %v1677 = vsel %vm1657, %v651, %v854
      %v1678 = vsel %vm1657, %v652, %v856
      %v1679 = vsel %vm1657, %v653, %v858
      %v1680 = vsel %vm1657, %v654, %v860
      %v1681 = vsel %vm1657, %v655, %v862
      %v1682 = vsel %vm1657, %v656, %v864
      %v1683 = vsel %vm1657, %v657, %v866
      %v1684 = vsel %vm1657, %v658, %v868
      %v1685 = vsel %vm1657, %v659, %v870
      %v1686 = vsel %vm1657, %v660, %v872
      %v1687 = vsel %vm1657, %v661, %v874
      %v1688 = vsel %vm1657, %v662, %v876
      %v1689 = vsel %vm1657, %v663, %v878
      %vm1690 = vcmask 64512
      %v1691 = vsel %vm1690, %v1658, %v944
      %v1692 = vsel %vm1690, %v1659, %v946
      %v1693 = vsel %vm1690, %v1660, %v948
      %v1694 = vsel %vm1690, %v1661, %v950
      %v1695 = vsel %vm1690, %v1662, %v952
      %v1696 = vsel %vm1690, %v1663, %v954
      %v1697 = vsel %vm1690, %v1664, %v956
      %v1698 = vsel %vm1690, %v1665, %v958
      %v1699 = vsel %vm1690, %v1666, %v960
      %v1700 = vsel %vm1690, %v1667, %v962
      %v1701 = vsel %vm1690, %v1668, %v964
      %v1702 = vsel %vm1690, %v1669, %v966
      %v1703 = vsel %vm1690, %v1670, %v968
      %v1704 = vsel %vm1690, %v1671, %v970
      %v1705 = vsel %vm1690, %v1672, %v972
      %v1706 = vsel %vm1690, %v1673, %v974
      %v1707 = vsel %vm1690, %v1674, %v976
      %v1708 = vsel %vm1690, %v1675, %v978
      %v1709 = vsel %vm1690, %v1676, %v980
      %v1710 = vsel %vm1690, %v1677, %v982
      %v1711 = vsel %vm1690, %v1678, %v984
      %v1712 = vsel %vm1690, %v1679, %v986
      %v1713 = vsel %vm1690, %v1680, %v988
      %v1714 = vsel %vm1690, %v1681, %v990
      %v1715 = vsel %vm1690, %v1682, %v992
      %v1716 = vsel %vm1690, %v1683, %v994
      %v1717 = vsel %vm1690, %v1684, %v996
      %v1718 = vsel %vm1690, %v1685, %v998
      %v1719 = vsel %vm1690, %v1686, %v1000
      %v1720 = vsel %vm1690, %v1687, %v1002
      %v1721 = vsel %vm1690, %v1688, %v1004
      %v1722 = vsel %vm1690, %v1689, %v1006
      %vm1723 = vcmask 97280
      %v1724 = vsel %vm1723, %v1691, %v1072
      %v1725 = vsel %vm1723, %v1692, %v1074
      %v1726 = vsel %vm1723, %v1693, %v1076
      %v1727 = vsel %vm1723, %v1694, %v1078
      %v1728 = vsel %vm1723, %v1695, %v1080
      %v1729 = vsel %vm1723, %v1696, %v1082
      %v1730 = vsel %vm1723, %v1697, %v1084
      %v1731 = vsel %vm1723, %v1698, %v1086
      %v1732 = vsel %vm1723, %v1699, %v1088
      %v1733 = vsel %vm1723, %v1700, %v1090
      %v1734 = vsel %vm1723, %v1701, %v1092
      %v1735 = vsel %vm1723, %v1702, %v1094
      %v1736 = vsel %vm1723, %v1703, %v1096
      %v1737 = vsel %vm1723, %v1704, %v1098
      %v1738 = vsel %vm1723, %v1705, %v1100
      %v1739 = vsel %vm1723, %v1706, %v1102
      %v1740 = vsel %vm1723, %v1707, %v1104
      %v1741 = vsel %vm1723, %v1708, %v1106
      %v1742 = vsel %vm1723, %v1709, %v1108
      %v1743 = vsel %vm1723, %v1710, %v1110
      %v1744 = vsel %vm1723, %v1711, %v1112
      %v1745 = vsel %vm1723, %v1712, %v1114
      %v1746 = vsel %vm1723, %v1713, %v1116
      %v1747 = vsel %vm1723, %v1714, %v1118
      %v1748 = vsel %vm1723, %v1715, %v1120
      %v1749 = vsel %vm1723, %v1716, %v1122
      %v1750 = vsel %vm1723, %v1717, %v1124
      %v1751 = vsel %vm1723, %v1718, %v1126
      %v1752 = vsel %vm1723, %v1719, %v1128
      %v1753 = vsel %vm1723, %v1720, %v1130
      %v1754 = vsel %vm1723, %v1721, %v1132
      %v1755 = vsel %vm1723, %v1722, %v1134
      %vm1756 = vcmask 130048
      %v1757 = vsel %vm1756, %v1724, %v1170
      %v1758 = vsel %vm1756, %v1725, %v1172
      %v1759 = vsel %vm1756, %v1726, %v1174
      %v1760 = vsel %vm1756, %v1727, %v1176
      %v1761 = vsel %vm1756, %v1728, %v1178
      %v1762 = vsel %vm1756, %v1729, %v1180
      %v1763 = vsel %vm1756, %v1730, %v1182
      %v1764 = vsel %vm1756, %v1731, %v1184
      %v1765 = vsel %vm1756, %v1732, %v1186
      %v1766 = vsel %vm1756, %v1733, %v1188
      %v1767 = vsel %vm1756, %v1734, %v1190
      %v1768 = vsel %vm1756, %v1735, %v1192
      %v1769 = vsel %vm1756, %v1736, %v1194
      %v1770 = vsel %vm1756, %v1737, %v1196
      %v1771 = vsel %vm1756, %v1738, %v1198
      %v1772 = vsel %vm1756, %v1739, %v1200
      %v1773 = vsel %vm1756, %v1740, %v1202
      %v1774 = vsel %vm1756, %v1741, %v1204
      %v1775 = vsel %vm1756, %v1742, %v1206
      %v1776 = vsel %vm1756, %v1743, %v1208
      %v1777 = vsel %vm1756, %v1744, %v1210
      %v1778 = vsel %vm1756, %v1745, %v1212
      %v1779 = vsel %vm1756, %v1746, %v1214
      %v1780 = vsel %vm1756, %v1747, %v1216
      %v1781 = vsel %vm1756, %v1748, %v1218
      %v1782 = vsel %vm1756, %v1749, %v1220
      %v1783 = vsel %vm1756, %v1750, %v1222
      %v1784 = vsel %vm1756, %v1751, %v1224
      %v1785 = vsel %vm1756, %v1752, %v1226
      %v1786 = vsel %vm1756, %v1753, %v1228
      %v1787 = vsel %vm1756, %v1754, %v1230
      %v1788 = vsel %vm1756, %v1755, %v1232
      %vm1789 = vcmask 162816
      %v1790 = vsel %vm1789, %v1757, %v1268
      %v1791 = vsel %vm1789, %v1758, %v1270
      %v1792 = vsel %vm1789, %v1759, %v1272
      %v1793 = vsel %vm1789, %v1760, %v1274
      %v1794 = vsel %vm1789, %v1761, %v1276
      %v1795 = vsel %vm1789, %v1762, %v1278
      %v1796 = vsel %vm1789, %v1763, %v1280
      %v1797 = vsel %vm1789, %v1764, %v1282
      %v1798 = vsel %vm1789, %v1765, %v1284
      %v1799 = vsel %vm1789, %v1766, %v1286
      %v1800 = vsel %vm1789, %v1767, %v1288
      %v1801 = vsel %vm1789, %v1768, %v1290
      %v1802 = vsel %vm1789, %v1769, %v1292
      %v1803 = vsel %vm1789, %v1770, %v1294
      %v1804 = vsel %vm1789, %v1771, %v1296
      %v1805 = vsel %vm1789, %v1772, %v1298
      %v1806 = vsel %vm1789, %v1773, %v1300
      %v1807 = vsel %vm1789, %v1774, %v1302
      %v1808 = vsel %vm1789, %v1775, %v1304
      %v1809 = vsel %vm1789, %v1776, %v1306
      %v1810 = vsel %vm1789, %v1777, %v1308
      %v1811 = vsel %vm1789, %v1778, %v1310
      %v1812 = vsel %vm1789, %v1779, %v1312
      %v1813 = vsel %vm1789, %v1780, %v1314
      %v1814 = vsel %vm1789, %v1781, %v1316
      %v1815 = vsel %vm1789, %v1782, %v1318
      %v1816 = vsel %vm1789, %v1783, %v1320
      %v1817 = vsel %vm1789, %v1784, %v1322
      %v1818 = vsel %vm1789, %v1785, %v1324
      %v1819 = vsel %vm1789, %v1786, %v1326
      %v1820 = vsel %vm1789, %v1787, %v1328
      %v1821 = vsel %vm1789, %v1788, %v1330
      %vm1822 = vcmask 195584
      %v1823 = vsel %vm1822, %v1790, %v1366
      %v1824 = vsel %vm1822, %v1791, %v1368
      %v1825 = vsel %vm1822, %v1792, %v1370
      %v1826 = vsel %vm1822, %v1793, %v1372
      %v1827 = vsel %vm1822, %v1794, %v1374
      %v1828 = vsel %vm1822, %v1795, %v1376
      %v1829 = vsel %vm1822, %v1796, %v1378
      %v1830 = vsel %vm1822, %v1797, %v1380
      %v1831 = vsel %vm1822, %v1798, %v1382
      %v1832 = vsel %vm1822, %v1799, %v1384
      %v1833 = vsel %vm1822, %v1800, %v1386
      %v1834 = vsel %vm1822, %v1801, %v1388
      %v1835 = vsel %vm1822, %v1802, %v1390
      %v1836 = vsel %vm1822, %v1803, %v1392
      %v1837 = vsel %vm1822, %v1804, %v1394
      %v1838 = vsel %vm1822, %v1805, %v1396
      %v1839 = vsel %vm1822, %v1806, %v1398
      %v1840 = vsel %vm1822, %v1807, %v1400
      %v1841 = vsel %vm1822, %v1808, %v1402
      %v1842 = vsel %vm1822, %v1809, %v1404
      %v1843 = vsel %vm1822, %v1810, %v1406
      %v1844 = vsel %vm1822, %v1811, %v1408
      %v1845 = vsel %vm1822, %v1812, %v1410
      %v1846 = vsel %vm1822, %v1813, %v1412
      %v1847 = vsel %vm1822, %v1814, %v1414
      %v1848 = vsel %vm1822, %v1815, %v1416
      %v1849 = vsel %vm1822, %v1816, %v1418
      %v1850 = vsel %vm1822, %v1817, %v1420
      %v1851 = vsel %vm1822, %v1818, %v1422
      %v1852 = vsel %vm1822, %v1819, %v1424
      %v1853 = vsel %vm1822, %v1820, %v1426
      %v1854 = vsel %vm1822, %v1821, %v1428
      %vm1855 = vcmask 228352
      %v1856 = vsel %vm1855, %v1823, %v1464
      %v1857 = vsel %vm1855, %v1824, %v1466
      %v1858 = vsel %vm1855, %v1825, %v1468
      %v1859 = vsel %vm1855, %v1826, %v1470
      %v1860 = vsel %vm1855, %v1827, %v1472
      %v1861 = vsel %vm1855, %v1828, %v1474
      %v1862 = vsel %vm1855, %v1829, %v1476
      %v1863 = vsel %vm1855, %v1830, %v1478
      %v1864 = vsel %vm1855, %v1831, %v1480
      %v1865 = vsel %vm1855, %v1832, %v1482
      %v1866 = vsel %vm1855, %v1833, %v1484
      %v1867 = vsel %vm1855, %v1834, %v1486
      %v1868 = vsel %vm1855, %v1835, %v1488
      %v1869 = vsel %vm1855, %v1836, %v1490
      %v1870 = vsel %vm1855, %v1837, %v1492
      %v1871 = vsel %vm1855, %v1838, %v1494
      %v1872 = vsel %vm1855, %v1839, %v1496
      %v1873 = vsel %vm1855, %v1840, %v1498
      %v1874 = vsel %vm1855, %v1841, %v1500
      %v1875 = vsel %vm1855, %v1842, %v1502
      %v1876 = vsel %vm1855, %v1843, %v1504
      %v1877 = vsel %vm1855, %v1844, %v1506
      %v1878 = vsel %vm1855, %v1845, %v1508
      %v1879 = vsel %vm1855, %v1846, %v1510
      %v1880 = vsel %vm1855, %v1847, %v1512
      %v1881 = vsel %vm1855, %v1848, %v1514
      %v1882 = vsel %vm1855, %v1849, %v1516
      %v1883 = vsel %vm1855, %v1850, %v1518
      %v1884 = vsel %vm1855, %v1851, %v1520
      %v1885 = vsel %vm1855, %v1852, %v1522
      %v1886 = vsel %vm1855, %v1853, %v1524
      %v1887 = vsel %vm1855, %v1854, %v1526
      %vm1888 = vcmask 261120
      %v1889 = vsel %vm1888, %v1856, %v1562
      %v1890 = vsel %vm1888, %v1857, %v1564
      %v1891 = vsel %vm1888, %v1858, %v1566
      %v1892 = vsel %vm1888, %v1859, %v1568
      %v1893 = vsel %vm1888, %v1860, %v1570
      %v1894 = vsel %vm1888, %v1861, %v1572
      %v1895 = vsel %vm1888, %v1862, %v1574
      %v1896 = vsel %vm1888, %v1863, %v1576
      %v1897 = vsel %vm1888, %v1864, %v1578
      %v1898 = vsel %vm1888, %v1865, %v1580
      %v1899 = vsel %vm1888, %v1866, %v1582
      %v1900 = vsel %vm1888, %v1867, %v1584
      %v1901 = vsel %vm1888, %v1868, %v1586
      %v1902 = vsel %vm1888, %v1869, %v1588
      %v1903 = vsel %vm1888, %v1870, %v1590
      %v1904 = vsel %vm1888, %v1871, %v1592
      %v1905 = vsel %vm1888, %v1872, %v1594
      %v1906 = vsel %vm1888, %v1873, %v1596
      %v1907 = vsel %vm1888, %v1874, %v1598
      %v1908 = vsel %vm1888, %v1875, %v1600
      %v1909 = vsel %vm1888, %v1876, %v1602
      %v1910 = vsel %vm1888, %v1877, %v1604
      %v1911 = vsel %vm1888, %v1878, %v1606
      %v1912 = vsel %vm1888, %v1879, %v1608
      %v1913 = vsel %vm1888, %v1880, %v1610
      %v1914 = vsel %vm1888, %v1881, %v1612
      %v1915 = vsel %vm1888, %v1882, %v1614
      %v1916 = vsel %vm1888, %v1883, %v1616
      %v1917 = vsel %vm1888, %v1884, %v1618
      %v1918 = vsel %vm1888, %v1885, %v1620
      %v1919 = vsel %vm1888, %v1886, %v1622
      %v1920 = vsel %vm1888, %v1887, %v1624
      %v1921 = vld [vmem:[%s5] sm:$0xff]
      %v1922 = vld [vmem:[%s5 + $0x8] sm:$0xff]
      %v1923 = vld [vmem:[%s5 + $0x10] sm:$0xff]
      %v1924 = vld [vmem:[%s5 + $0x18] sm:$0xff]
      %v1925 = vld [vmem:[%s5 + $0x20] sm:$0xf]
      %vm1926 = vcmask 293888
      %v1928 = vsel %vm1926, %v1889, 0
      %v1931 = vsel %vm1926, %v1890, 0
      %v1934 = vsel %vm1926, %v1891, 0
      %v1937 = vsel %vm1926, %v1892, 0
      %v1940 = vsel %vm1926, %v1893, 0
      %v1943 = vsel %vm1926, %v1894, 0
      %v1946 = vsel %vm1926, %v1895, 0
      %v1949 = vsel %vm1926, %v1896, 0
      %v1952 = vsel %vm1926, %v1897, 0
      %v1955 = vsel %vm1926, %v1898, 0
      %v1958 = vsel %vm1926, %v1899, 0
      %v1961 = vsel %vm1926, %v1900, 0
      %v1964 = vsel %vm1926, %v1901, 0
      %v1967 = vsel %vm1926, %v1902, 0
      %v1970 = vsel %vm1926, %v1903, 0
      %v1973 = vsel %vm1926, %v1904, 0
      %v1976 = vsel %vm1926, %v1905, 0
      %v1979 = vsel %vm1926, %v1906, 0
      %v1982 = vsel %vm1926, %v1907, 0
      %v1985 = vsel %vm1926, %v1908, 0
      %v1988 = vsel %vm1926, %v1909, 0
      %v1991 = vsel %vm1926, %v1910, 0
      %v1994 = vsel %vm1926, %v1911, 0
      %v1997 = vsel %vm1926, %v1912, 0
      %v2000 = vsel %vm1926, %v1913, 0
      %v2003 = vsel %vm1926, %v1914, 0
      %v2006 = vsel %vm1926, %v1915, 0
      %v2009 = vsel %vm1926, %v1916, 0
      %v2012 = vsel %vm1926, %v1917, 0
      %v2015 = vsel %vm1926, %v1918, 0
      %v2018 = vsel %vm1926, %v1919, 0
      %v2021 = vsel %vm1926, %v1920, 0
      %vm2023 = vcmask 1043456
      %v2025 = vsel %vm2023, %v1925, 0
      %2027 = vmatpush.msra.mxu0 0.0
      %2028 = vmatpush.msra.mxu0 0.0
      %2029 = vmatpush.msra.mxu0 0.0
      %2030 = vmatpush.msra.mxu0 0.0
      %2031 = vmatpush.msra.mxu0 0.0
      %2032 = vmatpush.msra.mxu0 0.0
      %2033 = vmatpush.msra.mxu0 0.0
      %2034 = vmatpush.msra.mxu0 0.0
      %2035 = vmatpush.msra.mxu0 0.0
      %2036 = vmatpush.msra.mxu0 0.0
      %2037 = vmatpush.msra.mxu0 0.0
      %2038 = vmatpush.msra.mxu0 %v2025
      %2039 = vmatpush.msra.mxu0 %v1924
      %2040 = vmatpush.msra.mxu0 %v1923
      %2041 = vmatpush.msra.mxu0 %v1922
      %2042 = vmatpush.msra.mxu0 %v1921
      %2043 = vmatmul.f32.gmra.mxu0 %v1928
      %v2044 = vpop.f32.mrf.mxu0
      %v2045 = vadd.f32 0.0, %v2044
      %2046 = vmatmul.f32.gmra.mxu0 %v1931
      %v2047 = vpop.f32.mrf.mxu0
      %v2048 = vadd.f32 0.0, %v2047
      %2049 = vmatmul.f32.gmra.mxu0 %v1934
      %v2050 = vpop.f32.mrf.mxu0
      %v2051 = vadd.f32 0.0, %v2050
      %2052 = vmatmul.f32.gmra.mxu0 %v1937
      %v2053 = vpop.f32.mrf.mxu0
      %v2054 = vadd.f32 0.0, %v2053
      %2055 = vmatmul.f32.gmra.mxu0 %v1940
      %v2056 = vpop.f32.mrf.mxu0
      %v2057 = vadd.f32 0.0, %v2056
      %2058 = vmatmul.f32.gmra.mxu0 %v1943
      %v2059 = vpop.f32.mrf.mxu0
      %v2060 = vadd.f32 0.0, %v2059
      %2061 = vmatmul.f32.gmra.mxu0 %v1946
      %v2062 = vpop.f32.mrf.mxu0
      %v2063 = vadd.f32 0.0, %v2062
      %2064 = vmatmul.f32.gmra.mxu0 %v1949
      %v2065 = vpop.f32.mrf.mxu0
      %v2066 = vadd.f32 0.0, %v2065
      %2067 = vmatmul.f32.gmra.mxu0 %v1952
      %v2068 = vpop.f32.mrf.mxu0
      %v2069 = vadd.f32 0.0, %v2068
      %2070 = vmatmul.f32.gmra.mxu0 %v1955
      %v2071 = vpop.f32.mrf.mxu0
      %v2072 = vadd.f32 0.0, %v2071
      %2073 = vmatmul.f32.gmra.mxu0 %v1958
      %v2074 = vpop.f32.mrf.mxu0
      %v2075 = vadd.f32 0.0, %v2074
      %2076 = vmatmul.f32.gmra.mxu0 %v1961
      %v2077 = vpop.f32.mrf.mxu0
      %v2078 = vadd.f32 0.0, %v2077
      %2079 = vmatmul.f32.gmra.mxu0 %v1964
      %v2080 = vpop.f32.mrf.mxu0
      %v2081 = vadd.f32 0.0, %v2080
      %2082 = vmatmul.f32.gmra.mxu0 %v1967
      %v2083 = vpop.f32.mrf.mxu0
      %v2084 = vadd.f32 0.0, %v2083
      %2085 = vmatmul.f32.gmra.mxu0 %v1970
      %v2086 = vpop.f32.mrf.mxu0
      %v2087 = vadd.f32 0.0, %v2086
      %2088 = vmatmul.f32.gmra.mxu0 %v1973
      %v2089 = vpop.f32.mrf.mxu0
      %v2090 = vadd.f32 0.0, %v2089
      %2091 = vmatmul.f32.gmra.mxu0 %v1976
      %v2092 = vpop.f32.mrf.mxu0
      %v2093 = vadd.f32 0.0, %v2092
      %2094 = vmatmul.f32.gmra.mxu0 %v1979
      %v2095 = vpop.f32.mrf.mxu0
      %v2096 = vadd.f32 0.0, %v2095
      %2097 = vmatmul.f32.gmra.mxu0 %v1982
      %v2098 = vpop.f32.mrf.mxu0
      %v2099 = vadd.f32 0.0, %v2098
      %2100 = vmatmul.f32.gmra.mxu0 %v1985
      %v2101 = vpop.f32.mrf.mxu0
      %v2102 = vadd.f32 0.0, %v2101
      %2103 = vmatmul.f32.gmra.mxu0 %v1988
      %v2104 = vpop.f32.mrf.mxu0
      %v2105 = vadd.f32 0.0, %v2104
      %2106 = vmatmul.f32.gmra.mxu0 %v1991
      %v2107 = vpop.f32.mrf.mxu0
      %v2108 = vadd.f32 0.0, %v2107
      %2109 = vmatmul.f32.gmra.mxu0 %v1994
      %v2110 = vpop.f32.mrf.mxu0
      %v2111 = vadd.f32 0.0, %v2110
      %2112 = vmatmul.f32.gmra.mxu0 %v1997
      %v2113 = vpop.f32.mrf.mxu0
      %v2114 = vadd.f32 0.0, %v2113
      %2115 = vmatmul.f32.gmra.mxu0 %v2000
      %v2116 = vpop.f32.mrf.mxu0
      %v2117 = vadd.f32 0.0, %v2116
      %2118 = vmatmul.f32.gmra.mxu0 %v2003
      %v2119 = vpop.f32.mrf.mxu0
      %v2120 = vadd.f32 0.0, %v2119
      %2121 = vmatmul.f32.gmra.mxu0 %v2006
      %v2122 = vpop.f32.mrf.mxu0
      %v2123 = vadd.f32 0.0, %v2122
      %2124 = vmatmul.f32.gmra.mxu0 %v2009
      %v2125 = vpop.f32.mrf.mxu0
      %v2126 = vadd.f32 0.0, %v2125
      %2127 = vmatmul.f32.gmra.mxu0 %v2012
      %v2128 = vpop.f32.mrf.mxu0
      %v2129 = vadd.f32 0.0, %v2128
      %2130 = vmatmul.f32.gmra.mxu0 %v2015
      %v2131 = vpop.f32.mrf.mxu0
      %v2132 = vadd.f32 0.0, %v2131
      %2133 = vmatmul.f32.gmra.mxu0 %v2018
      %v2134 = vpop.f32.mrf.mxu0
      %v2135 = vadd.f32 0.0, %v2134
      %2136 = vmatmul.f32.gmra.mxu0 %v2021
      %v2137 = vpop.f32.mrf.mxu0
      %v2138 = vadd.f32 0.0, %v2137
      %2139 = vdwg.mxu0
      %2140 = vst.msk [vmem:[%s457] sm:$0xff] %vm1690, %v2045
      %2141 = vst.msk [vmem:[%s457 + $0x8] sm:$0xff] %vm1690, %v2048
      %2142 = vst.msk [vmem:[%s457 + $0x10] sm:$0xff] %vm1690, %v2051
      %2143 = vst.msk [vmem:[%s457 + $0x18] sm:$0xff] %vm1690, %v2054
      %2144 = vst.msk [vmem:[%s457 + $0x20] sm:$0xff] %vm1690, %v2057
      %2145 = vst.msk [vmem:[%s457 + $0x28] sm:$0xff] %vm1690, %v2060
      %2146 = vst.msk [vmem:[%s457 + $0x30] sm:$0xff] %vm1690, %v2063
      %2147 = vst.msk [vmem:[%s457 + $0x38] sm:$0xff] %vm1690, %v2066
      %2148 = vst.msk [vmem:[%s457 + $0x40] sm:$0xff] %vm1690, %v2069
      %2149 = vst.msk [vmem:[%s457 + $0x48] sm:$0xff] %vm1690, %v2072
      %2150 = vst.msk [vmem:[%s457 + $0x50] sm:$0xff] %vm1690, %v2075
      %2151 = vst.msk [vmem:[%s457 + $0x58] sm:$0xff] %vm1690, %v2078
      %2152 = vst.msk [vmem:[%s457 + $0x60] sm:$0xff] %vm1690, %v2081
      %2153 = vst.msk [vmem:[%s457 + $0x68] sm:$0xff] %vm1690, %v2084
      %2154 = vst.msk [vmem:[%s457 + $0x70] sm:$0xff] %vm1690, %v2087
      %2155 = vst.msk [vmem:[%s457 + $0x78] sm:$0xff] %vm1690, %v2090
      %2156 = vst.msk [vmem:[%s457 + $0x80] sm:$0xff] %vm1690, %v2093
      %2157 = vst.msk [vmem:[%s457 + $0x88] sm:$0xff] %vm1690, %v2096
      %2158 = vst.msk [vmem:[%s457 + $0x90] sm:$0xff] %vm1690, %v2099
      %2159 = vst.msk [vmem:[%s457 + $0x98] sm:$0xff] %vm1690, %v2102
      %2160 = vst.msk [vmem:[%s457 + $0xa0] sm:$0xff] %vm1690, %v2105
      %2161 = vst.msk [vmem:[%s457 + $0xa8] sm:$0xff] %vm1690, %v2108
      %2162 = vst.msk [vmem:[%s457 + $0xb0] sm:$0xff] %vm1690, %v2111
      %2163 = vst.msk [vmem:[%s457 + $0xb8] sm:$0xff] %vm1690, %v2114
      %2164 = vst.msk [vmem:[%s457 + $0xc0] sm:$0xff] %vm1690, %v2117
      %2165 = vst.msk [vmem:[%s457 + $0xc8] sm:$0xff] %vm1690, %v2120
      %2166 = vst.msk [vmem:[%s457 + $0xd0] sm:$0xff] %vm1690, %v2123
      %2167 = vst.msk [vmem:[%s457 + $0xd8] sm:$0xff] %vm1690, %v2126
      %2168 = vst.msk [vmem:[%s457 + $0xe0] sm:$0xff] %vm1690, %v2129
      %2169 = vst.msk [vmem:[%s457 + $0xe8] sm:$0xff] %vm1690, %v2132
      %2170 = vst.msk [vmem:[%s457 + $0xf0] sm:$0xff] %vm1690, %v2135
      %2171 = vst.msk [vmem:[%s457 + $0xf8] sm:$0xff] %vm1690, %v2138
      %v2172 = vsel %vm1690, %v2045, 0.0
      %v2173 = vsel %vm1690, %v2048, 0.0
      %v2174 = vadd.f32 %v2172, %v2173
      %v2175 = vsel %vm1690, %v2051, 0.0
      %v2176 = vadd.f32 %v2174, %v2175
      %v2177 = vsel %vm1690, %v2054, 0.0
      %v2178 = vadd.f32 %v2176, %v2177
      %v2179 = vsel %vm1690, %v2057, 0.0
      %v2180 = vadd.f32 %v2178, %v2179
      %v2181 = vsel %vm1690, %v2060, 0.0
      %v2182 = vadd.f32 %v2180, %v2181
      %v2183 = vsel %vm1690, %v2063, 0.0
      %v2184 = vadd.f32 %v2182, %v2183
      %v2185 = vsel %vm1690, %v2066, 0.0
      %v2186 = vadd.f32 %v2184, %v2185
      %v2187 = vsel %vm1690, %v2069, 0.0
      %v2188 = vadd.f32 %v2186, %v2187
      %v2189 = vsel %vm1690, %v2072, 0.0
      %v2190 = vadd.f32 %v2188, %v2189
      %v2191 = vsel %vm1690, %v2075, 0.0
      %v2192 = vadd.f32 %v2190, %v2191
      %v2193 = vsel %vm1690, %v2078, 0.0
      %v2194 = vadd.f32 %v2192, %v2193
      %v2195 = vsel %vm1690, %v2081, 0.0
      %v2196 = vadd.f32 %v2194, %v2195
      %v2197 = vsel %vm1690, %v2084, 0.0
      %v2198 = vadd.f32 %v2196, %v2197
      %v2199 = vsel %vm1690, %v2087, 0.0
      %v2200 = vadd.f32 %v2198, %v2199
      %v2201 = vsel %vm1690, %v2090, 0.0
      %v2202 = vadd.f32 %v2200, %v2201
      %v2203 = vsel %vm1690, %v2093, 0.0
      %v2204 = vadd.f32 %v2202, %v2203
      %v2205 = vsel %vm1690, %v2096, 0.0
      %v2206 = vadd.f32 %v2204, %v2205
      %v2207 = vsel %vm1690, %v2099, 0.0
      %v2208 = vadd.f32 %v2206, %v2207
      %v2209 = vsel %vm1690, %v2102, 0.0
      %v2210 = vadd.f32 %v2208, %v2209
      %v2211 = vsel %vm1690, %v2105, 0.0
      %v2212 = vadd.f32 %v2210, %v2211
      %v2213 = vsel %vm1690, %v2108, 0.0
      %v2214 = vadd.f32 %v2212, %v2213
      %v2215 = vsel %vm1690, %v2111, 0.0
      %v2216 = vadd.f32 %v2214, %v2215
      %v2217 = vsel %vm1690, %v2114, 0.0
      %v2218 = vadd.f32 %v2216, %v2217
      %v2219 = vsel %vm1690, %v2117, 0.0
      %v2220 = vadd.f32 %v2218, %v2219
      %v2221 = vsel %vm1690, %v2120, 0.0
      %v2222 = vadd.f32 %v2220, %v2221
      %v2223 = vsel %vm1690, %v2123, 0.0
      %v2224 = vadd.f32 %v2222, %v2223
      %v2225 = vsel %vm1690, %v2126, 0.0
      %v2226 = vadd.f32 %v2224, %v2225
      %v2227 = vsel %vm1690, %v2129, 0.0
      %v2228 = vadd.f32 %v2226, %v2227
      %v2229 = vsel %vm1690, %v2132, 0.0
      %v2230 = vadd.f32 %v2228, %v2229
      %v2231 = vsel %vm1690, %v2135, 0.0
      %v2232 = vadd.f32 %v2230, %v2231
      %v2233 = vsel %vm1690, %v2138, 0.0
      %v2234 = vadd.f32 %v2232, %v2233
      %v2235 = vrot.slane %v2234, 4
      %v2236 = vadd.f32 %v2234, %v2235
      %v2237 = vrot.slane %v2236, 2
      %v2238 = vadd.f32 %v2236, %v2237
      %v2239 = vrot.slane %v2238, 1
      %v2240 = vadd.f32 %v2238, %v2239
      %v2241 = vmul.f32 %v2045, %v2045
      %v2242 = vmul.f32 %v2048, %v2048
      %v2243 = vmul.f32 %v2051, %v2051
      %v2244 = vmul.f32 %v2054, %v2054
      %v2245 = vmul.f32 %v2057, %v2057
      %v2246 = vmul.f32 %v2060, %v2060
      %v2247 = vmul.f32 %v2063, %v2063
      %v2248 = vmul.f32 %v2066, %v2066
      %v2249 = vmul.f32 %v2069, %v2069
      %v2250 = vmul.f32 %v2072, %v2072
      %v2251 = vmul.f32 %v2075, %v2075
      %v2252 = vmul.f32 %v2078, %v2078
      %v2253 = vmul.f32 %v2081, %v2081
      %v2254 = vmul.f32 %v2084, %v2084
      %v2255 = vmul.f32 %v2087, %v2087
      %v2256 = vmul.f32 %v2090, %v2090
      %v2257 = vmul.f32 %v2093, %v2093
      %v2258 = vmul.f32 %v2096, %v2096
      %v2259 = vmul.f32 %v2099, %v2099
      %v2260 = vmul.f32 %v2102, %v2102
      %v2261 = vmul.f32 %v2105, %v2105
      %v2262 = vmul.f32 %v2108, %v2108
      %v2263 = vmul.f32 %v2111, %v2111
      %v2264 = vmul.f32 %v2114, %v2114
      %v2265 = vmul.f32 %v2117, %v2117
      %v2266 = vmul.f32 %v2120, %v2120
      %v2267 = vmul.f32 %v2123, %v2123
      %v2268 = vmul.f32 %v2126, %v2126
      %v2269 = vmul.f32 %v2129, %v2129
      %v2270 = vmul.f32 %v2132, %v2132
      %v2271 = vmul.f32 %v2135, %v2135
      %v2272 = vmul.f32 %v2138, %v2138
      %v2273 = vsel %vm1690, %v2241, 0.0
      %v2274 = vsel %vm1690, %v2242, 0.0
      %v2275 = vadd.f32 %v2273, %v2274
      %v2276 = vsel %vm1690, %v2243, 0.0
      %v2277 = vadd.f32 %v2275, %v2276
      %v2278 = vsel %vm1690, %v2244, 0.0
      %v2279 = vadd.f32 %v2277, %v2278
      %v2280 = vsel %vm1690, %v2245, 0.0
      %v2281 = vadd.f32 %v2279, %v2280
      %v2282 = vsel %vm1690, %v2246, 0.0
      %v2283 = vadd.f32 %v2281, %v2282
      %v2284 = vsel %vm1690, %v2247, 0.0
      %v2285 = vadd.f32 %v2283, %v2284
      %v2286 = vsel %vm1690, %v2248, 0.0
      %v2287 = vadd.f32 %v2285, %v2286
      %v2288 = vsel %vm1690, %v2249, 0.0
      %v2289 = vadd.f32 %v2287, %v2288
      %v2290 = vsel %vm1690, %v2250, 0.0
      %v2291 = vadd.f32 %v2289, %v2290
      %v2292 = vsel %vm1690, %v2251, 0.0
      %v2293 = vadd.f32 %v2291, %v2292
      %v2294 = vsel %vm1690, %v2252, 0.0
      %v2295 = vadd.f32 %v2293, %v2294
      %v2296 = vsel %vm1690, %v2253, 0.0
      %v2297 = vadd.f32 %v2295, %v2296
      %v2298 = vsel %vm1690, %v2254, 0.0
      %v2299 = vadd.f32 %v2297, %v2298
      %v2300 = vsel %vm1690, %v2255, 0.0
      %v2301 = vadd.f32 %v2299, %v2300
      %v2302 = vsel %vm1690, %v2256, 0.0
      %v2303 = vadd.f32 %v2301, %v2302
      %v2304 = vsel %vm1690, %v2257, 0.0
      %v2305 = vadd.f32 %v2303, %v2304
      %v2306 = vsel %vm1690, %v2258, 0.0
      %v2307 = vadd.f32 %v2305, %v2306
      %v2308 = vsel %vm1690, %v2259, 0.0
      %v2309 = vadd.f32 %v2307, %v2308
      %v2310 = vsel %vm1690, %v2260, 0.0
      %v2311 = vadd.f32 %v2309, %v2310
      %v2312 = vsel %vm1690, %v2261, 0.0
      %v2313 = vadd.f32 %v2311, %v2312
      %v2314 = vsel %vm1690, %v2262, 0.0
      %v2315 = vadd.f32 %v2313, %v2314
      %v2316 = vsel %vm1690, %v2263, 0.0
      %v2317 = vadd.f32 %v2315, %v2316
      %v2318 = vsel %vm1690, %v2264, 0.0
      %v2319 = vadd.f32 %v2317, %v2318
      %v2320 = vsel %vm1690, %v2265, 0.0
      %v2321 = vadd.f32 %v2319, %v2320
      %v2322 = vsel %vm1690, %v2266, 0.0
      %v2323 = vadd.f32 %v2321, %v2322
      %v2324 = vsel %vm1690, %v2267, 0.0
      %v2325 = vadd.f32 %v2323, %v2324
      %v2326 = vsel %vm1690, %v2268, 0.0
      %v2327 = vadd.f32 %v2325, %v2326
      %v2328 = vsel %vm1690, %v2269, 0.0
      %v2329 = vadd.f32 %v2327, %v2328
      %v2330 = vsel %vm1690, %v2270, 0.0
      %v2331 = vadd.f32 %v2329, %v2330
      %v2332 = vsel %vm1690, %v2271, 0.0
      %v2333 = vadd.f32 %v2331, %v2332
      %v2334 = vsel %vm1690, %v2272, 0.0
      %v2335 = vadd.f32 %v2333, %v2334
      %v2336 = vrot.slane %v2335, 4
      %v2337 = vadd.f32 %v2335, %v2336
      %v2338 = vrot.slane %v2337, 2
      %v2339 = vadd.f32 %v2337, %v2338
      %v2340 = vrot.slane %v2339, 1
      %v2341 = vadd.f32 %v2339, %v2340
      %vm2342 = vcmask 1040384
      %v2343 = vsel %vm2342, %v2240, %v2341
      %vm2344 = vcmask 58368
      %2345 = vst.msk [vmem:[%s465] sm:$0x3] %vm2344, %v2343
      %s2346 = smul.u32 16, %s24
      %p2347 = scmp.lt.s32.totalorder %s23, 1
      %s2348 = scalar_select %p2347, %s23, 1
      %p2349 = scmp.lt.s32.totalorder %s2346, 15
      %s2350 = scalar_select %p2349, %s2346, 15
      %s2351 = smul.addr %s2350, 2
      %s2352 = smul.addr %s2348, 32
      %s2353 = sadd.s32 %s2351, %s2352
      %s2354 = smul.addr %s2353, 8
      %s2355 = scalar_lea.vmem %s6, %s2354
      %p2356 = scmp.lt.s32.totalorder %s23, 1
      %s2357 = scalar_select %p2356, %s23, 1
      %p2358 = scmp.lt.s32.totalorder %s24, 0
      %s2359 = scalar_select %p2358, %s24, 0
      %s2360 = sadd.s32 %s2359, %s2357
      %s2361 = smul.addr %s2360, 2
      %s2362 = scalar_lea.vmem %s7, %s2361
      // Predicated region
      $region45: #{bottleneck_forward.3} parent=43 // pred_check
        %p2363 = pneg %p214
      $region46: #{bottleneck_forward.3} parent=43 // pred_check_branch
        %2365 = sbr.rel (%p2363) target = $region48
      $region47: #{bottleneck_forward.3} parent=43 // pred_region
        %s2366 = smul.u32 16, %s24
      $region48: #{bottleneck_forward.3} parent=43 // pred_fallthru
        _
      // Predicated region
      $region49: #{bottleneck_forward.3} parent=43 // pred_check
        %p2367 = pneg %p242
      $region50: #{bottleneck_forward.3} parent=43 // pred_check_branch
        %2369 = sbr.rel (%p2367) target = $region52
      $region51: #{bottleneck_forward.3} parent=43 // pred_region
        _
      $region52: #{bottleneck_forward.3} parent=43 // pred_fallthru
        _
    $region44: #{bottleneck_forward.3} parent=5 // pred_fallthru
      _
    %p2370 = scmp.le.s32.totalorder 2, %s14
    // Predicated region
    $region53: #{bottleneck_forward.3} parent=5 // pred_check
      %p2371 = pneg %p2370
    $region54: #{bottleneck_forward.3} parent=5 // pred_check_branch
      %2373 = sbr.rel (%p2371) target = $region56
    $region55: #{bottleneck_forward.3} parent=5 // pred_region
      %s2374 = ssub.s32 %s14, 2
      // Predicated region
      $region57: #{bottleneck_forward.3} parent=55 // pred_check
        %p2375 = pneg %p220
      $region58: #{bottleneck_forward.3} parent=55 // pred_check_branch
        %2377 = sbr.rel (%p2375) target = $region60
      $region59: #{bottleneck_forward.3} parent=55 // pred_region
        %s2378 = smul.u32 16, %s26
        %p2379 = scmp.lt.s32.totalorder %s25, 1
        %s2380 = scalar_select %p2379, %s25, 1
        %p2381 = scmp.lt.s32.totalorder %s2378, 15
        %s2382 = scalar_select %p2381, %s2378, 15
        %s2383 = smul.addr %s2382, 2
        %s2384 = smul.addr %s2380, 32
        %s2385 = sadd.s32 %s2383, %s2384
        %s2386 = smul.addr %s2385, 8
        %s2387 = scalar_lea.vmem %s6, %s2386
      $region60: #{bottleneck_forward.3} parent=55 // pred_fallthru
        _
      // Predicated region
      $region61: #{bottleneck_forward.3} parent=55 // pred_check
        %p2388 = pneg %p248
      $region62: #{bottleneck_forward.3} parent=55 // pred_check_branch
        %2390 = sbr.rel (%p2388) target = $region64
      $region63: #{bottleneck_forward.3} parent=55 // pred_region
        %p2391 = scmp.lt.s32.totalorder %s25, 1
        %s2392 = scalar_select %p2391, %s25, 1
        %p2393 = scmp.lt.s32.totalorder %s26, 0
        %s2394 = scalar_select %p2393, %s26, 0
        %s2395 = sadd.s32 %s2394, %s2392
        %s2396 = smul.addr %s2395, 2
        %s2397 = scalar_lea.vmem %s7, %s2396
      $region64: #{bottleneck_forward.3} parent=55 // pred_fallthru
        _
    $region56: #{bottleneck_forward.3} parent=5 // pred_fallthru
      _
  $region6: #{bottleneck_forward.3} parent=0 // loop_footer
    %s18 = sadd.s32 1, %s14
  $region7: #{bottleneck_forward.3} parent=0 // loop_footer_branch
    %13 = sbr.rel target = $region3
  $region8: #{bottleneck_forward.3} parent=0 // loop_exit
    _

// kernel: bottleneck_forward.4
$region0: #{bottleneck_forward.4}
  #allocation0 [shape = 'u32[]', space=smem, size = 0x4, offset = 0x4, fixed_abs, tag = 'smem constant byte address 0x4 - core index']
  #allocation1 [shape = 'u32[72,128]{1,0:T(1,128)}', space=vmem, size = 0x9000, scoped, tag = 'internal scratch']
  %s0 = inlined_call_operand.vmem [shape: f32[2,16,16,8], index: 0, kind: input, shape index: {}, may-alias: {0,1,2}]
  %s1 = inlined_call_operand.vmem [shape: f32[2,16,16,8], index: 1, kind: input, shape index: {}, may-alias: {0,1,2}]
  %s2 = inlined_call_operand.vmem [shape: f32[2,16,16,8], index: 2, kind: input, shape index: {}, may-alias: {0,1,2}]
  %s3 = inlined_call_operand.vmem [shape: f32[1,8], index: 3, kind: input, shape index: {}]
  %s4 = inlined_call_operand.vmem [shape: f32[1,8], index: 4, kind: input, shape index: {}]
  %s5 = inlined_call_operand.vmem [shape: f32[72,8], index: 5, kind: input, shape index: {}]
  %s6 = inlined_call_operand.vmem [shape: f32[2,16,16,8], index: 6, kind: output, shape index: {0}]
  %s7 = inlined_call_operand.vmem [shape: f32[2,1,2,8], index: 7, kind: output, shape index: {1}]
  %8 = xla_tuple %s6, %s7
  %s9 = sld [smem:[#allocation0]]
  $region65: #{bottleneck_forward.4} parent=0
    _
  %s11 = ssub.s32 1, %s9
  %s12 = scalar_select 0, %s11, %s9
  loop: start=0, step=1, limit=4
  $region2: #{bottleneck_forward.4} parent=0 // loop_pre_header
    _
  $region3: #{bottleneck_forward.4} parent=0 // loop_header
    %s14 = sphi 0, %s18
    %p15 = scmp.ge.s32.totalorder %s14, 4
    %s21 = sphi 0, %s33
    %s22 = sphi 0, %s29
    %s23 = sphi 0, %s21
    %s24 = sphi 0, %s22
    %s25 = sphi 0, %s23
    %s26 = sphi 0, %s24
    %s38 = sphi 0, %s40
    %s41 = sphi 0, %s38
    %s42 = sphi 0, %s41
    %s58 = sphi 0, %s42
    %s74 = sphi 0, %s76
    %s77 = sphi 0, %s74
    %s78 = sphi 0, %s77
    %s94 = sphi 0, %s78
    %s110 = sphi 0, %s112
    %s113 = sphi 0, %s110
    %s114 = sphi 0, %s113
    %s130 = sphi 0, %s114
    %s134 = sphi 0, %s134
    %s136 = sphi 0, %s134
    %s137 = sphi 0, %s136
    %s151 = sphi 0, %s137
    %s155 = sphi 0, %s155
    %s157 = sphi 0, %s155
    %s158 = sphi 0, %s157
    %s172 = sphi 0, %s158
    %s176 = sphi 0, %s176
    %s178 = sphi 0, %s176
    %s179 = sphi 0, %s178
    %s193 = sphi 0, %s179
    %s201 = sphi 0, %s203
    %s204 = sphi 0, %s201
    %s205 = sphi 0, %s204
    %s221 = sphi 0, %s205
    %s229 = sphi 0, %s231
    %s232 = sphi 0, %s229
    %s233 = sphi 0, %s232
    %s249 = sphi 0, %s233
  $region4: #{bottleneck_forward.4} parent=0 // loop_header_branch
    %17 = sbr.rel (%p15) target = $region8
  $region5: #{bottleneck_forward.4} parent=0 // loop_body
    %s19 = ssub.s32 %s14, 1
    %s20 = ssub.s32 %s14, 2
    %s27 = sadd.s32 1, %s22
    %p28 = scmp.ge.s32.totalorder %s27, 1
    %s29 = scalar_select %p28, 0, %s27
    %s30 = sadd.s32 1, %s21
    %s31 = scalar_select %p28, %s30, %s21
    %p32 = scmp.ge.s32.totalorder %s31, 2
    %s33 = scalar_select %p32, 0, %s31
    %s34 = ssub.s32 %s21, %s33
    %s35 = ssub.s32 %s22, %s29
    %s36 = sor.u32 %s34, %s35
    %p37 = scmp.eq.s32.totalorder %s36, 0
    %s39 = sadd.s32 %s38, 1
    %s40 = scalar_select %p37, %s38, %s39
    %p43 = pneg %p37
    %p44 = scmp.eq.s32.totalorder %s14, 1
    %p45 = por %p43, %p44
    %p46 = scmp.ne.s32.totalorder %s38, %s41
    %p47 = scmp.eq.s32.totalorder %s14, 0
    %p48 = por %p46, %p47
    %p49 = scmp.ne.s32.totalorder %s38, %s41
    %p50 = scmp.eq.s32.totalorder %s19, 1
    %p51 = por %p49, %p50
    %p52 = scmp.ne.s32.totalorder %s41, %s42
    %p53 = scmp.eq.s32.totalorder %s19, 0
    %p54 = por %p52, %p53
    %p55 = scmp.ne.s32.totalorder %s41, %s42
    %p56 = scmp.eq.s32.totalorder %s20, 1
    %p57 = por %p55, %p56
    %p59 = scmp.ne.s32.totalorder %s42, %s58
    %p60 = scmp.eq.s32.totalorder %s20, 0
    %p61 = por %p59, %p60
    %s62 = smul.u32 %s22, 16
    %s63 = ssub.s32 %s62, 1
    %p64 = scmp.gt.s32.totalorder %s63, 0
    %s65 = scalar_select %p64, %s63, 0
    %s66 = smul.u32 %s29, 16
    %s67 = ssub.s32 %s66, 1
    %p68 = scmp.gt.s32.totalorder %s67, 0
    %s69 = scalar_select %p68, %s67, 0
    %s70 = ssub.s32 %s21, %s33
    %s71 = ssub.s32 %s65, %s69
    %s72 = sor.u32 %s70, %s71
    %p73 = scmp.eq.s32.totalorder %s72, 0
    %s75 = sadd.s32 %s74, 1
    %s76 = scalar_select %p73, %s74, %s75
    %p79 = pneg %p73
    %p80 = scmp.eq.s32.totalorder %s14, 1
    %p81 = por %p79, %p80
    %p82 = scmp.ne.s32.totalorder %s74, %s77
    %p83 = scmp.eq.s32.totalorder %s14, 0
    %p84 = por %p82, %p83
    %p85 = scmp.ne.s32.totalorder %s74, %s77
    %p86 = scmp.eq.s32.totalorder %s19, 1
    %p87 = por %p85, %p86
    %p88 = scmp.ne.s32.totalorder %s77, %s78
    %p89 = scmp.eq.s32.totalorder %s19, 0
    %p90 = por %p88, %p89
    %p91 = scmp.ne.s32.totalorder %s77, %s78
    %p92 = scmp.eq.s32.totalorder %s20, 1
    %p93 = por %p91, %p92
    %p95 = scmp.ne.s32.totalorder %s78, %s94
    %p96 = scmp.eq.s32.totalorder %s20, 0
    %p97 = por %p95, %p96
    %s98 = smul.u32 %s22, 16
    %s99 = sadd.s32 %s98, 16
    %p100 = scmp.lt.s32.totalorder %s99, 15
    %s101 = scalar_select %p100, %s99, 15
    %s102 = smul.u32 %s29, 16
    %s103 = sadd.s32 %s102, 16
    %p104 = scmp.lt.s32.totalorder %s103, 15
    %s105 = scalar_select %p104, %s103, 15
    %s106 = ssub.s32 %s21, %s33
    %s107 = ssub.s32 %s101, %s105
    %s108 = sor.u32 %s106, %s107
    %p109 = scmp.eq.s32.totalorder %s108, 0
    %s111 = sadd.s32 %s110, 1
    %s112 = scalar_select %p109, %s110, %s111
    %p115 = pneg %p109
    %p116 = scmp.eq.s32.totalorder %s14, 1
    %p117 = por %p115, %p116
    %p118 = scmp.ne.s32.totalorder %s110, %s113
    %p119 = scmp.eq.s32.totalorder %s14, 0
    %p120 = por %p118, %p119
    %p121 = scmp.ne.s32.totalorder %s110, %s113
    %p122 = scmp.eq.s32.totalorder %s19, 1
    %p123 = por %p121, %p122
    %p124 = scmp.ne.s32.totalorder %s113, %s114
    %p125 = scmp.eq.s32.totalorder %s19, 0
    %p126 = por %p124, %p125
    %p127 = scmp.ne.s32.totalorder %s113, %s114
    %p128 = scmp.eq.s32.totalorder %s20, 1
    %p129 = por %p127, %p128
    %p131 = scmp.ne.s32.totalorder %s114, %s130
    %p132 = scmp.eq.s32.totalorder %s20, 0
    %p133 = por %p131, %p132
    %s135 = sadd.s32 %s134, 1
    %p138 = scmp.eq.s32.totalorder %s14, 1
    %p139 = scmp.ne.s32.totalorder %s134, %s136
    %p140 = scmp.eq.s32.totalorder %s14, 0
    %p141 = por %p139, %p140
    %p142 = scmp.ne.s32.totalorder %s134, %s136
    %p143 = scmp.eq.s32.totalorder %s19, 1
    %p144 = por %p142, %p143
    %p145 = scmp.ne.s32.totalorder %s136, %s137
    %p146 = scmp.eq.s32.totalorder %s19, 0
    %p147 = por %p145, %p146
    %p148 = scmp.ne.s32.totalorder %s136, %s137
    %p149 = scmp.eq.s32.totalorder %s20, 1
    %p150 = por %p148, %p149
    %p152 = scmp.ne.s32.totalorder %s137, %s151
    %p153 = scmp.eq.s32.totalorder %s20, 0
    %p154 = por %p152, %p153
    %s156 = sadd.s32 %s155, 1
    %p159 = scmp.eq.s32.totalorder %s14, 1
    %p160 = scmp.ne.s32.totalorder %s155, %s157
    %p161 = scmp.eq.s32.totalorder %s14, 0
    %p162 = por %p160, %p161
    %p163 = scmp.ne.s32.totalorder %s155, %s157
    %p164 = scmp.eq.s32.totalorder %s19, 1
    %p165 = por %p163, %p164
    %p166 = scmp.ne.s32.totalorder %s157, %s158
    %p167 = scmp.eq.s32.totalorder %s19, 0
    %p168 = por %p166, %p167
    %p169 = scmp.ne.s32.totalorder %s157, %s158
    %p170 = scmp.eq.s32.totalorder %s20, 1
    %p171 = por %p169, %p170
    %p173 = scmp.ne.s32.totalorder %s158, %s172
    %p174 = scmp.eq.s32.totalorder %s20, 0
    %p175 = por %p173, %p174
    %s177 = sadd.s32 %s176, 1
    %p180 = scmp.eq.s32.totalorder %s14, 1
    %p181 = scmp.ne.s32.totalorder %s176, %s178
    %p182 = scmp.eq.s32.totalorder %s14, 0
    %p183 = por %p181, %p182
    %p184 = scmp.ne.s32.totalorder %s176, %s178
    %p185 = scmp.eq.s32.totalorder %s19, 1
    %p186 = por %p184, %p185
    %p187 = scmp.ne.s32.totalorder %s178, %s179
    %p188 = scmp.eq.s32.totalorder %s19, 0
    %p189 = por %p187, %p188
    %p190 = scmp.ne.s32.totalorder %s178, %s179
    %p191 = scmp.eq.s32.totalorder %s20, 1
    %p192 = por %p190, %p191
    %p194 = scmp.ne.s32.totalorder %s179, %s193
    %p195 = scmp.eq.s32.totalorder %s20, 0
    %p196 = por %p194, %p195
    %s197 = ssub.s32 %s21, %s33
    %s198 = ssub.s32 %s22, %s29
    %s199 = sor.u32 %s197, %s198
    %p200 = scmp.eq.s32.totalorder %s199, 0
    %s202 = sadd.s32 %s201, 1
    %s203 = scalar_select %p200, %s201, %s202
    %p206 = pneg %p200
    %p207 = scmp.eq.s32.totalorder %s14, 1
    %p208 = por %p206, %p207
    %p209 = scmp.ne.s32.totalorder %s201, %s204
    %p210 = scmp.eq.s32.totalorder %s14, 0
    %p211 = por %p209, %p210
    %p212 = scmp.ne.s32.totalorder %s201, %s204
    %p213 = scmp.eq.s32.totalorder %s19, 1
    %p214 = por %p212, %p213
    %p215 = scmp.ne.s32.totalorder %s204, %s205
    %p216 = scmp.eq.s32.totalorder %s19, 0
    %p217 = por %p215, %p216
    %p218 = scmp.ne.s32.totalorder %s204, %s205
    %p219 = scmp.eq.s32.totalorder %s20, 1
    %p220 = por %p218, %p219
    %p222 = scmp.ne.s32.totalorder %s205, %s221
    %p223 = scmp.eq.s32.totalorder %s20, 0
    %p224 = por %p222, %p223
    %s225 = ssub.s32 %s21, %s33
    %s226 = ssub.s32 %s22, %s29
    %s227 = sor.u32 %s225, %s226
    %p228 = scmp.eq.s32.totalorder %s227, 0
    %s230 = sadd.s32 %s229, 1
    %s231 = scalar_select %p228, %s229, %s230
    %p234 = pneg %p228
    %p235 = scmp.eq.s32.totalorder %s14, 1
    %p236 = por %p234, %p235
    %p237 = scmp.ne.s32.totalorder %s229, %s232
    %p238 = scmp.eq.s32.totalorder %s14, 0
    %p239 = por %p237, %p238
    %p240 = scmp.ne.s32.totalorder %s229, %s232
    %p241 = scmp.eq.s32.totalorder %s19, 1
    %p242 = por %p240, %p241
    %p243 = scmp.ne.s32.totalorder %s232, %s233
    %p244 = scmp.eq.s32.totalorder %s19, 0
    %p245 = por %p243, %p244
    %p246 = scmp.ne.s32.totalorder %s232, %s233
    %p247 = scmp.eq.s32.totalorder %s20, 1
    %p248 = por %p246, %p247
    %p250 = scmp.ne.s32.totalorder %s233, %s249
    %p251 = scmp.eq.s32.totalorder %s20, 0
    %p252 = por %p250, %p251
    %p253 = scmp.le.s32.totalorder 1, %s14
    %p254 = scmp.lt.s32.totalorder %s14, 3
    %p255 = pnand %p253, %p254
    %p256 = pneg %p255
    // Predicated region
    $region9: #{bottleneck_forward.4} parent=5 // pred_check
      _
    $region10: #{bottleneck_forward.4} parent=5 // pred_check_branch
      %258 = sbr.rel (%p255) target = $region12
    $region11: #{bottleneck_forward.4} parent=5 // pred_region
      %s259 = ssub.s32 %s14, 1
      // Predicated region
      $region13: #{bottleneck_forward.4} parent=11 // pred_check
        %p260 = pneg %p147
      $region14: #{bottleneck_forward.4} parent=11 // pred_check_branch
        %262 = sbr.rel (%p260) target = $region16
      $region15: #{bottleneck_forward.4} parent=11 // pred_region
        _
      $region16: #{bottleneck_forward.4} parent=11 // pred_fallthru
        _
      // Predicated region
      $region17: #{bottleneck_forward.4} parent=11 // pred_check
        %p263 = pneg %p168
      $region18: #{bottleneck_forward.4} parent=11 // pred_check_branch
        %265 = sbr.rel (%p263) target = $region20
      $region19: #{bottleneck_forward.4} parent=11 // pred_region
        _
      $region20: #{bottleneck_forward.4} parent=11 // pred_fallthru
        _
      // Predicated region
      $region21: #{bottleneck_forward.4} parent=11 // pred_check
        %p266 = pneg %p189
      $region22: #{bottleneck_forward.4} parent=11 // pred_check_branch
        %268 = sbr.rel (%p266) target = $region24
      $region23: #{bottleneck_forward.4} parent=11 // pred_region
        _
      $region24: #{bottleneck_forward.4} parent=11 // pred_fallthru
        _
    $region12: #{bottleneck_forward.4} parent=5 // pred_fallthru
      _
    %p269 = scmp.lt.s32.totalorder %s14, 2
    // Predicated region
    $region25: #{bottleneck_forward.4} parent=5 // pred_check
      %p270 = pneg %p269
    $region26: #{bottleneck_forward.4} parent=5 // pred_check_branch
      %272 = sbr.rel (%p270) target = $region28
    $region27: #{bottleneck_forward.4} parent=5 // pred_region
      // Predicated region
      $region29: #{bottleneck_forward.4} parent=27 // pred_check
        %p273 = pneg %p48
      $region30: #{bottleneck_forward.4} parent=27 // pred_check_branch
        %275 = sbr.rel (%p273) target = $region32
      $region31: #{bottleneck_forward.4} parent=27 // pred_region
        %s276 = smul.u32 16, %s22
        %p277 = scmp.lt.s32.totalorder %s21, 1
        %s278 = scalar_select %p277, %s21, 1
        %p279 = scmp.lt.s32.totalorder %s276, 15
        %s280 = scalar_select %p279, %s276, 15
        %s281 = smul.addr %s280, 2
        %s282 = smul.addr %s278, 32
        %s283 = sadd.s32 %s281, %s282
        %s284 = smul.addr %s283, 8
        %s285 = scalar_lea.vmem %s0, %s284
        %s286 = smul.u32 16, %s22
      $region32: #{bottleneck_forward.4} parent=27 // pred_fallthru
        _
      // Predicated region
      $region33: #{bottleneck_forward.4} parent=27 // pred_check
        %p287 = pneg %p84
      $region34: #{bottleneck_forward.4} parent=27 // pred_check_branch
        %289 = sbr.rel (%p287) target = $region36
      $region35: #{bottleneck_forward.4} parent=27 // pred_region
        %s290 = smul.u32 %s22, 16
        %s291 = ssub.s32 %s290, 1
        %p292 = scmp.gt.s32.totalorder %s291, 0
        %s293 = scalar_select %p292, %s291, 0
        %p294 = scmp.lt.s32.totalorder %s21, 1
        %s295 = scalar_select %p294, %s21, 1
        %p296 = scmp.lt.s32.totalorder %s293, 15
        %s297 = scalar_select %p296, %s293, 15
        %s298 = smul.addr %s297, 2
        %s299 = smul.addr %s295, 32
        %s300 = sadd.s32 %s298, %s299
        %s301 = smul.addr %s300, 8
        %s302 = scalar_lea.vmem %s1, %s301
        %s303 = smul.u32 %s22, 16
        %s304 = ssub.s32 %s303, 1
        %p305 = scmp.gt.s32.totalorder %s304, 0
        %s306 = scalar_select %p305, %s304, 0
      $region36: #{bottleneck_forward.4} parent=27 // pred_fallthru
        _
      // Predicated region
      $region37: #{bottleneck_forward.4} parent=27 // pred_check
        %p307 = pneg %p120
      $region38: #{bottleneck_forward.4} parent=27 // pred_check_branch
        %309 = sbr.rel (%p307) target = $region40
      $region39: #{bottleneck_forward.4} parent=27 // pred_region
        %s310 = smul.u32 %s22, 16
        %s311 = sadd.s32 %s310, 16
        %p312 = scmp.lt.s32.totalorder %s311, 15
        %s313 = scalar_select %p312, %s311, 15
        %p314 = scmp.lt.s32.totalorder %s21, 1
        %s315 = scalar_select %p314, %s21, 1
        %p316 = scmp.lt.s32.totalorder %s313, 15
        %s317 = scalar_select %p316, %s313, 15
        %s318 = smul.addr %s317, 2
        %s319 = smul.addr %s315, 32
        %s320 = sadd.s32 %s318, %s319
        %s321 = smul.addr %s320, 8
        %s322 = scalar_lea.vmem %s2, %s321
        %s323 = smul.u32 %s22, 16
        %s324 = sadd.s32 %s323, 16
        %p325 = scmp.lt.s32.totalorder %s324, 15
        %s326 = scalar_select %p325, %s324, 15
      $region40: #{bottleneck_forward.4} parent=27 // pred_fallthru
        _
    $region28: #{bottleneck_forward.4} parent=5 // pred_fallthru
      _
    %p327 = scmp.le.s32.totalorder 1, %s14
    %p328 = scmp.lt.s32.totalorder %s14, 3
    %p329 = pnand %p327, %p328
    %p330 = pneg %p329
    // Predicated region
    $region41: #{bottleneck_forward.4} parent=5 // pred_check
      _
    $region42: #{bottleneck_forward.4} parent=5 // pred_check_branch
      %332 = sbr.rel (%p329) target = $region44
    $region43: #{bottleneck_forward.4} parent=5 // pred_region
      %s333 = ssub.s32 %s14, 1
      %s334 = smul.u32 16, %s24
      %p335 = scmp.lt.s32.totalorder %s23, 1
      %s336 = scalar_select %p335, %s23, 1
      %p337 = scmp.lt.s32.totalorder %s334, 15
      %s338 = scalar_select %p337, %s334, 15
      %s339 = smul.addr %s338, 2
      %s340 = smul.addr %s336, 32
      %s341 = sadd.s32 %s339, %s340
      %s342 = smul.addr %s341, 8
      %s343 = scalar_lea.vmem %s0, %s342
      %p344 = pneg %p54
      %p345 = pneg %p51
      %s346 = smul.u32 %s24, 16
      %s347 = ssub.s32 %s346, 1
      %p348 = scmp.gt.s32.totalorder %s347, 0
      %s349 = scalar_select %p348, %s347, 0
      %p350 = scmp.lt.s32.totalorder %s23, 1
      %s351 = scalar_select %p350, %s23, 1
      %p352 = scmp.lt.s32.totalorder %s349, 15
      %s353 = scalar_select %p352, %s349, 15
      %s354 = smul.addr %s353, 2
      %s355 = smul.addr %s351, 32
      %s356 = sadd.s32 %s354, %s355
      %s357 = smul.addr %s356, 8
      %s358 = scalar_lea.vmem %s1, %s357
      %p359 = pneg %p90
      %p360 = pneg %p87
      %s361 = smul.u32 %s24, 16
      %s362 = sadd.s32 %s361, 16
      %p363 = scmp.lt.s32.totalorder %s362, 15
      %s364 = scalar_select %p363, %s362, 15
      %p365 = scmp.lt.s32.totalorder %s23, 1
      %s366 = scalar_select %p365, %s23, 1
      %p367 = scmp.lt.s32.totalorder %s364, 15
      %s368 = scalar_select %p367, %s364, 15
      %s369 = smul.addr %s368, 2
      %s370 = smul.addr %s366, 32
      %s371 = sadd.s32 %s369, %s370
      %s372 = smul.addr %s371, 8
      %s373 = scalar_lea.vmem %s2, %s372
      %p374 = pneg %p126
      %p375 = pneg %p123
      %p376 = pneg %p147
      %p377 = pneg %p144
      %p378 = pneg %p168
      %p379 = pneg %p165
      %p380 = pneg %p189
      %p381 = pneg %p186
      %p382 = pneg %p217
      %p383 = pneg %p214
      %s384 = smul.u32 16, %s24
      %p385 = scmp.lt.s32.totalorder %s23, 1
      %s386 = scalar_select %p385, %s23, 1
      %p387 = scmp.lt.s32.totalorder %s384, 15
      %s388 = scalar_select %p387, %s384, 15
      %s389 = smul.addr %s388, 2
      %s390 = smul.addr %s386, 32
      %s391 = sadd.s32 %s389, %s390
      %s392 = smul.addr %s391, 8
      %s393 = scalar_lea.vmem %s6, %s392
      %p394 = pneg %p245
      %p395 = pneg %p242
      %p396 = scmp.lt.s32.totalorder %s23, 1
      %s397 = scalar_select %p396, %s23, 1
      %p398 = scmp.lt.s32.totalorder %s24, 0
      %s399 = scalar_select %p398, %s24, 0
      %s400 = sadd.s32 %s399, %s397
      %s401 = smul.addr %s400, 2
      %s402 = scalar_lea.vmem %s7, %s401
      %s403 = smul.u32 16, %s24
      %p404 = scmp.lt.s32.totalorder %s23, 1
      %s405 = scalar_select %p404, %s23, 1
      %p406 = scmp.lt.s32.totalorder %s403, 15
      %s407 = scalar_select %p406, %s403, 15
      %s408 = smul.addr %s407, 2
      %s409 = smul.addr %s405, 32
      %s410 = sadd.s32 %s408, %s409
      %s411 = smul.addr %s410, 8
      %s412 = scalar_lea.vmem %s0, %s411
      %s413 = smul.u32 16, %s24
      %s414 = smul.u32 %s24, 16
      %s415 = ssub.s32 %s414, 1
      %p416 = scmp.gt.s32.totalorder %s415, 0
      %s417 = scalar_select %p416, %s415, 0
      %p418 = scmp.lt.s32.totalorder %s23, 1
      %s419 = scalar_select %p418, %s23, 1
      %p420 = scmp.lt.s32.totalorder %s417, 15
      %s421 = scalar_select %p420, %s417, 15
      %s422 = smul.addr %s421, 2
      %s423 = smul.addr %s419, 32
      %s424 = sadd.s32 %s422, %s423
      %s425 = smul.addr %s424, 8
      %s426 = scalar_lea.vmem %s1, %s425
      %s427 = smul.u32 %s24, 16
      %s428 = ssub.s32 %s427, 1
      %p429 = scmp.gt.s32.totalorder %s428, 0
      %s430 = scalar_select %p429, %s428, 0
      %s431 = smul.u32 %s24, 16
      %s432 = sadd.s32 %s431, 16
      %p433 = scmp.lt.s32.totalorder %s432, 15
      %s434 = scalar_select %p433, %s432, 15
      %p435 = scmp.lt.s32.totalorder %s23, 1
      %s436 = scalar_select %p435, %s23, 1
      %p437 = scmp.lt.s32.totalorder %s434, 15
      %s438 = scalar_select %p437, %s434, 15
      %s439 = smul.addr %s438, 2
      %s440 = smul.addr %s436, 32
      %s441 = sadd.s32 %s439, %s440
      %s442 = smul.addr %s441, 8
      %s443 = scalar_lea.vmem %s2, %s442
      %s444 = smul.u32 %s24, 16
      %s445 = sadd.s32 %s444, 16
      %p446 = scmp.lt.s32.totalorder %s445, 15
      %s447 = scalar_select %p446, %s445, 15
      %s448 = smul.u32 16, %s24
      %p449 = scmp.lt.s32.totalorder %s23, 1
      %s450 = scalar_select %p449, %s23, 1
      %p451 = scmp.lt.s32.totalorder %s448, 15
      %s452 = scalar_select %p451, %s448, 15
      %s453 = smul.addr %s452, 2
      %s454 = smul.addr %s450, 32
      %s455 = sadd.s32 %s453, %s454
      %s456 = smul.addr %s455, 8
      %s457 = scalar_lea.vmem %s6, %s456
      %s458 = smul.u32 16, %s24
      %p459 = scmp.lt.s32.totalorder %s23, 1
      %s460 = scalar_select %p459, %s23, 1
      %p461 = scmp.lt.s32.totalorder %s24, 0
      %s462 = scalar_select %p461, %s24, 0
      %s463 = sadd.s32 %s462, %s460
      %s464 = smul.addr %s463, 2
      %s465 = scalar_lea.vmem %s7, %s464
      %v466 = vld [vmem:[%s426] sm:$0xff]
      %v467 = vld [vmem:[%s426 + $0x8] sm:$0xff]
      %v468 = vld [vmem:[%s412] sm:$0xff]
      %v469 = vld [vmem:[%s412 + $0x8] sm:$0xff]
      %v470 = vld [vmem:[%s412 + $0x10] sm:$0xff]
      %v471 = vld [vmem:[%s412 + $0x18] sm:$0xff]
      %v472 = vld [vmem:[%s412 + $0x20] sm:$0xff]
      %v473 = vld [vmem:[%s412 + $0x28] sm:$0xff]
      %v474 = vld [vmem:[%s412 + $0x30] sm:$0xff]
      %v475 = vld [vmem:[%s412 + $0x38] sm:$0xff]
      %v476 = vld [vmem:[%s412 + $0x40] sm:$0xff]
      %v477 = vld [vmem:[%s412 + $0x48] sm:$0xff]
      %v478 = vld [vmem:[%s412 + $0x50] sm:$0xff]
      %v479 = vld [vmem:[%s412 + $0x58] sm:$0xff]
      %v480 = vld [vmem:[%s412 + $0x60] sm:$0xff]
      %v481 = vld [vmem:[%s412 + $0x68] sm:$0xff]
      %v482 = vld [vmem:[%s412 + $0x70] sm:$0xff]
      %v483 = vld [vmem:[%s412 + $0x78] sm:$0xff]
      %v484 = vld [vmem:[%s412 + $0x80] sm:$0xff]
      %v485 = vld [vmem:[%s412 + $0x88] sm:$0xff]
      %v486 = vld [vmem:[%s412 + $0x90] sm:$0xff]
      %v487 = vld [vmem:[%s412 + $0x98] sm:$0xff]
      %v488 = vld [vmem:[%s412 + $0xa0] sm:$0xff]
      %v489 = vld [vmem:[%s412 + $0xa8] sm:$0xff]
      %v490 = vld [vmem:[%s412 + $0xb0] sm:$0xff]
      %v491 = vld [vmem:[%s412 + $0xb8] sm:$0xff]
      %v492 = vld [vmem:[%s412 + $0xc0] sm:$0xff]
      %v493 = vld [vmem:[%s412 + $0xc8] sm:$0xff]
      %v494 = vld [vmem:[%s412 + $0xd0] sm:$0xff]
      %v495 = vld [vmem:[%s412 + $0xd8] sm:$0xff]
      %v496 = vld [vmem:[%s412 + $0xe0] sm:$0xff]
      %v497 = vld [vmem:[%s412 + $0xe8] sm:$0xff]
      %v498 = vld [vmem:[%s412 + $0xf0] sm:$0xff]
      %v499 = vld [vmem:[%s412 + $0xf8] sm:$0xff]
      %v500 = vld [vmem:[%s443] sm:$0xff]
      %v501 = vld [vmem:[%s443 + $0x8] sm:$0xff]
      %v502 = vld [vmem:[%s3] sm:$0x1]
      %v504 = vperm.slane %v502, 0
      %v506 = vmul.f32 %v466, %v504
      %v507 = vmul.f32 %v467, %v504
      %v508 = vmul.f32 %v468, %v504
      %v509 = vmul.f32 %v469, %v504
      %v510 = vmul.f32 %v470, %v504
      %v511 = vmul.f32 %v471, %v504
      %v512 = vmul.f32 %v472, %v504
      %v513 = vmul.f32 %v473, %v504
      %v514 = vmul.f32 %v474, %v504
      %v515 = vmul.f32 %v475, %v504
      %v516 = vmul.f32 %v476, %v504
      %v517 = vmul.f32 %v477, %v504
      %v518 = vmul.f32 %v478, %v504
      %v519 = vmul.f32 %v479, %v504
      %v520 = vmul.f32 %v480, %v504
      %v521 = vmul.f32 %v481, %v504
      %v522 = vmul.f32 %v482, %v504
      %v523 = vmul.f32 %v483, %v504
      %v524 = vmul.f32 %v484, %v504
      %v525 = vmul.f32 %v485, %v504
      %v526 = vmul.f32 %v486, %v504
      %v527 = vmul.f32 %v487, %v504
      %v528 = vmul.f32 %v488, %v504
      %v529 = vmul.f32 %v489, %v504
      %v530 = vmul.f32 %v490, %v504
      %v531 = vmul.f32 %v491, %v504
      %v532 = vmul.f32 %v492, %v504
      %v533 = vmul.f32 %v493, %v504
      %v534 = vmul.f32 %v494, %v504
      %v535 = vmul.f32 %v495, %v504
      %v536 = vmul.f32 %v496, %v504
      %v537 = vmul.f32 %v497, %v504
      %v538 = vmul.f32 %v498, %v504
      %v539 = vmul.f32 %v499, %v504
      %v540 = vmul.f32 %v500, %v504
      %v541 = vmul.f32 %v501, %v504
      %v542 = vld [vmem:[%s4] sm:$0x1]
      %v544 = vperm.slane %v542, 0
      %v546 = vadd.f32 %v506, %v544
      %v547 = vadd.f32 %v507, %v544
      %v548 = vadd.f32 %v508, %v544
      %v549 = vadd.f32 %v509, %v544
      %v550 = vadd.f32 %v510, %v544
      %v551 = vadd.f32 %v511, %v544
      %v552 = vadd.f32 %v512, %v544
      %v553 = vadd.f32 %v513, %v544
      %v554 = vadd.f32 %v514, %v544
      %v555 = vadd.f32 %v515, %v544
      %v556 = vadd.f32 %v516, %v544
      %v557 = vadd.f32 %v517, %v544
      %v558 = vadd.f32 %v518, %v544
      %v559 = vadd.f32 %v519, %v544
      %v560 = vadd.f32 %v520, %v544
      %v561 = vadd.f32 %v521, %v544
      %v562 = vadd.f32 %v522, %v544
      %v563 = vadd.f32 %v523, %v544
      %v564 = vadd.f32 %v524, %v544
      %v565 = vadd.f32 %v525, %v544
      %v566 = vadd.f32 %v526, %v544
      %v567 = vadd.f32 %v527, %v544
      %v568 = vadd.f32 %v528, %v544
      %v569 = vadd.f32 %v529, %v544
      %v570 = vadd.f32 %v530, %v544
      %v571 = vadd.f32 %v531, %v544
      %v572 = vadd.f32 %v532, %v544
      %v573 = vadd.f32 %v533, %v544
      %v574 = vadd.f32 %v534, %v544
      %v575 = vadd.f32 %v535, %v544
      %v576 = vadd.f32 %v536, %v544
      %v577 = vadd.f32 %v537, %v544
      %v578 = vadd.f32 %v538, %v544
      %v579 = vadd.f32 %v539, %v544
      %v580 = vadd.f32 %v540, %v544
      %v581 = vadd.f32 %v541, %v544
      %v582 = vmax.f32 %v546, 0.0
      %v583 = vmax.f32 %v547, 0.0
      %v584 = vmax.f32 %v548, 0.0
      %v585 = vmax.f32 %v549, 0.0
      %v586 = vmax.f32 %v550, 0.0
      %v587 = vmax.f32 %v551, 0.0
      %v588 = vmax.f32 %v552, 0.0
      %v589 = vmax.f32 %v553, 0.0
      %v590 = vmax.f32 %v554, 0.0
      %v591 = vmax.f32 %v555, 0.0
      %v592 = vmax.f32 %v556, 0.0
      %v593 = vmax.f32 %v557, 0.0
      %v594 = vmax.f32 %v558, 0.0
      %v595 = vmax.f32 %v559, 0.0
      %v596 = vmax.f32 %v560, 0.0
      %v597 = vmax.f32 %v561, 0.0
      %v598 = vmax.f32 %v562, 0.0
      %v599 = vmax.f32 %v563, 0.0
      %v600 = vmax.f32 %v564, 0.0
      %v601 = vmax.f32 %v565, 0.0
      %v602 = vmax.f32 %v566, 0.0
      %v603 = vmax.f32 %v567, 0.0
      %v604 = vmax.f32 %v568, 0.0
      %v605 = vmax.f32 %v569, 0.0
      %v606 = vmax.f32 %v570, 0.0
      %v607 = vmax.f32 %v571, 0.0
      %v608 = vmax.f32 %v572, 0.0
      %v609 = vmax.f32 %v573, 0.0
      %v610 = vmax.f32 %v574, 0.0
      %v611 = vmax.f32 %v575, 0.0
      %v612 = vmax.f32 %v576, 0.0
      %v613 = vmax.f32 %v577, 0.0
      %v614 = vmax.f32 %v578, 0.0
      %v615 = vmax.f32 %v579, 0.0
      %v616 = vmax.f32 %v580, 0.0
      %v617 = vmax.f32 %v581, 0.0
      %p618 = scmp.gt.s32.totalorder %s24, 0
      %s619 = scalar_select %p618, 1, 0
      %v620 = vstv %s619
      %vm621 = vcmp.eq.s32.totalorder %v620, 1
      %p622 = scmp.lt.s32.totalorder %s24, 0
      %s623 = scalar_select %p622, 1, 0
      %v624 = vstv %s623
      %vm625 = vcmp.eq.s32.totalorder %v624, 1
      %v626 = vsel %vm621, 1, 0
      %v627 = vsel %vm625, 1, 0
      %vm628 = vcmp.eq.s32.totalorder %v626, 1
      %vm629 = vcmp.eq.s32.totalorder %v627, 1
      %v630 = vsel %vm628, %v582, 0.0
      %v631 = vsel %vm628, %v583, 0.0
      %v632 = vsel 1, %v584, 0.0
      %v633 = vsel 1, %v585, 0.0
      %v634 = vsel 1, %v586, 0.0
      %v635 = vsel 1, %v587, 0.0
      %v636 = vsel 1, %v588, 0.0
      %v637 = vsel 1, %v589, 0.0
      %v638 = vsel 1, %v590, 0.0
      %v639 = vsel 1, %v591, 0.0
      %v640 = vsel 1, %v592, 0.0
      %v641 = vsel 1, %v593, 0.0
      %v642 = vsel 1, %v594, 0.0
      %v643 = vsel 1, %v595, 0.0
      %v644 = vsel 1, %v596, 0.0
      %v645 = vsel 1, %v597, 0.0
      %v646 = vsel 1, %v598, 0.0
      %v647 = vsel 1, %v599, 0.0
      %v648 = vsel 1, %v600, 0.0
      %v649 = vsel 1, %v601, 0.0
      %v650 = vsel 1, %v602, 0.0
      %v651 = vsel 1, %v603, 0.0
      %v652 = vsel 1, %v604, 0.0
      %v653 = vsel 1, %v605, 0.0
      %v654 = vsel 1, %v606, 0.0
      %v655 = vsel 1, %v607, 0.0
      %v656 = vsel 1, %v608, 0.0
      %v657 = vsel 1, %v609, 0.0
      %v658 = vsel 1, %v610, 0.0
      %v659 = vsel 1, %v611, 0.0
      %v660 = vsel 1, %v612, 0.0
      %v661 = vsel 1, %v613, 0.0
      %v662 = vsel 1, %v614, 0.0
      %v663 = vsel 1, %v615, 0.0
      %v664 = vsel %vm629, %v616, 0.0
      %v665 = vsel %vm629, %v617, 0.0
      %v666 = vlaneseq
      %v667 = vshrl.u32 %v666, 7
      %v668 = vadd.s32 %v667, 8
      %vm669 = vcmp.ge.s32.totalorder %v667, 1
      %vm670 = vcmp.ge.s32.totalorder %v668, 1
      %v671 = vrot.slane %v630, 7
      %v672 = vrot.slane %v632, 7
      %v673 = vrot.slane %v634, 7
      %v674 = vrot.slane %v636, 7
      %v675 = vrot.slane %v638, 7
      %v676 = vrot.slane %v640, 7
      %v677 = vrot.slane %v642, 7
      %v678 = vrot.slane %v644, 7
      %v679 = vrot.slane %v646, 7
      %v680 = vrot.slane %v648, 7
      %v681 = vrot.slane %v650, 7
      %v682 = vrot.slane %v652, 7
      %v683 = vrot.slane %v654, 7
      %v684 = vrot.slane %v656, 7
      %v685 = vrot.slane %v658, 7
      %v686 = vrot.slane %v660, 7
      %v687 = vrot.slane %v662, 7
      %v688 = vrot.slane %v664, 7
      %v689 = vrot.slane %v631, 7
      %v690 = vrot.slane %v633, 7
      %v691 = vrot.slane %v635, 7
      %v692 = vrot.slane %v637, 7
      %v693 = vrot.slane %v639, 7
      %v694 = vrot.slane %v641, 7
      %v695 = vrot.slane %v643, 7
      %v696 = vrot.slane %v645, 7
      %v697 = vrot.slane %v647, 7
      %v698 = vrot.slane %v649, 7
      %v699 = vrot.slane %v651, 7
      %v700 = vrot.slane %v653, 7
      %v701 = vrot.slane %v655, 7
      %v702 = vrot.slane %v657, 7
      %v703 = vrot.slane %v659, 7
      %v704 = vrot.slane %v661, 7
      %v705 = vrot.slane %v663, 7
      %v706 = vrot.slane %v665, 7
      %vm707 = vcmp.lt.s32.totalorder %v667, 1
      %v708 = vsel %vm707, %v671, %v689
      %v709 = vsel %vm707, %v672, %v690
      %v710 = vsel %vm707, %v673, %v691
      %v711 = vsel %vm707, %v674, %v692
      %v712 = vsel %vm707, %v675, %v693
      %v713 = vsel %vm707, %v676, %v694
      %v714 = vsel %vm707, %v677, %v695
      %v715 = vsel %vm707, %v678, %v696
      %v716 = vsel %vm707, %v679, %v697
      %v717 = vsel %vm707, %v680, %v698
      %v718 = vsel %vm707, %v681, %v699
      %v719 = vsel %vm707, %v682, %v700
      %v720 = vsel %vm707, %v683, %v701
      %v721 = vsel %vm707, %v684, %v702
      %v722 = vsel %vm707, %v685, %v703
      %v723 = vsel %vm707, %v686, %v704
      %v724 = vsel %vm707, %v687, %v705
      %v725 = vsel %vm707, %v688, %v706
      %v726 = vsel %vm707, %v689, %v671
      %v727 = vsel %vm707, %v690, %v672
      %v728 = vsel %vm707, %v691, %v673
      %v729 = vsel %vm707, %v692, %v674
      %v730 = vsel %vm707, %v693, %v675
      %v731 = vsel %vm707, %v694, %v676
      %v732 = vsel %vm707, %v695, %v677
      %v733 = vsel %vm707, %v696, %v678
      %v734 = vsel %vm707, %v697, %v679
      %v735 = vsel %vm707, %v698, %v680
      %v736 = vsel %vm707, %v699, %v681
      %v737 = vsel %vm707, %v700, %v682
      %v738 = vsel %vm707, %v701, %v683
      %v739 = vsel %vm707, %v702, %v684
      %v740 = vsel %vm707, %v703, %v685
      %v741 = vsel %vm707, %v704, %v686
      %v742 = vsel %vm707, %v705, %v687
      %v743 = vsel %vm707, %v706, %v688
      %v744 = vsel %vm669, 1, 0
      %v745 = vsel %vm670, 1, 0
      %vm746 = vcmp.eq.s32.totalorder %v744, 1
      %vm747 = vcmp.eq.s32.totalorder %v745, 1
      %v748 = vsel %vm746, %v726, 0.0
      %v749 = vsel %vm747, %v708, 0.0
      %v750 = vsel %vm746, %v727, 0.0
      %v751 = vsel %vm747, %v709, 0.0
      %v752 = vsel %vm746, %v728, 0.0
      %v753 = vsel %vm747, %v710, 0.0
      %v754 = vsel %vm746, %v729, 0.0
      %v755 = vsel %vm747, %v711, 0.0
      %v756 = vsel %vm746, %v730, 0.0
      %v757 = vsel %vm747, %v712, 0.0
      %v758 = vsel %vm746, %v731, 0.0
      %v759 = vsel %vm747, %v713, 0.0
      %v760 = vsel %vm746, %v732, 0.0
      %v761 = vsel %vm747, %v714, 0.0
      %v762 = vsel %vm746, %v733, 0.0
      %v763 = vsel %vm747, %v715, 0.0
      %v764 = vsel %vm746, %v734, 0.0
      %v765 = vsel %vm747, %v716, 0.0
      %v766 = vsel %vm746, %v735, 0.0
      %v767 = vsel %vm747, %v717, 0.0
      %v768 = vsel %vm746, %v736, 0.0
      %v769 = vsel %vm747, %v718, 0.0
      %v770 = vsel %vm746, %v737, 0.0
      %v771 = vsel %vm747, %v719, 0.0
      %v772 = vsel %vm746, %v738, 0.0
      %v773 = vsel %vm747, %v720, 0.0
      %v774 = vsel %vm746, %v739, 0.0
      %v775 = vsel %vm747, %v721, 0.0
      %v776 = vsel %vm746, %v740, 0.0
      %v777 = vsel %vm747, %v722, 0.0
      %v778 = vsel %vm746, %v741, 0.0
      %v779 = vsel %vm747, %v723, 0.0
      %v780 = vsel %vm746, %v742, 0.0
      %v781 = vsel %vm747, %v724, 0.0
      %v782 = vsel %vm746, %v743, 0.0
      %v783 = vsel %vm747, %v725, 0.0
      %vm784 = vcmp.le.s32.totalorder %v667, 14
      %vm785 = vcmp.le.s32.totalorder %v668, 14
      %v786 = vrot.slane %v630, 1
      %v787 = vrot.slane %v632, 1
      %v788 = vrot.slane %v634, 1
      %v789 = vrot.slane %v636, 1
      %v790 = vrot.slane %v638, 1
      %v791 = vrot.slane %v640, 1
      %v792 = vrot.slane %v642, 1
      %v793 = vrot.slane %v644, 1
      %v794 = vrot.slane %v646, 1
      %v795 = vrot.slane %v648, 1
      %v796 = vrot.slane %v650, 1
      %v797 = vrot.slane %v652, 1
      %v798 = vrot.slane %v654, 1
      %v799 = vrot.slane %v656, 1
      %v800 = vrot.slane %v658, 1
      %v801 = vrot.slane %v660, 1
      %v802 = vrot.slane %v662, 1
      %v803 = vrot.slane %v664, 1
      %v804 = vrot.slane %v631, 1
      %v805 = vrot.slane %v633, 1
      %v806 = vrot.slane %v635, 1
      %v807 = vrot.slane %v637, 1
      %v808 = vrot.slane %v639, 1
      %v809 = vrot.slane %v641, 1
      %v810 = vrot.slane %v643, 1
      %v811 = vrot.slane %v645, 1
      %v812 = vrot.slane %v647, 1
      %v813 = vrot.slane %v649, 1
      %v814 = vrot.slane %v651, 1
      %v815 = vrot.slane %v653, 1
      %v816 = vrot.slane %v655, 1
      %v817 = vrot.slane %v657, 1
      %v818 = vrot.slane %v659, 1
      %v819 = vrot.slane %v661, 1
      %v820 = vrot.slane %v663, 1
      %v821 = vrot.slane %v665, 1
      %vm822 = vcmp.lt.s32.totalorder %v667, 7
      %v823 = vsel %vm822, %v786, %v804
      %v824 = vsel %vm822, %v787, %v805
      %v825 = vsel %vm822, %v788, %v806
      %v826 = vsel %vm822, %v789, %v807
      %v827 = vsel %vm822, %v790, %v808
      %v828 = vsel %vm822, %v791, %v809
      %v829 = vsel %vm822, %v792, %v810
      %v830 = vsel %vm822, %v793, %v811
      %v831 = vsel %vm822, %v794, %v812
      %v832 = vsel %vm822, %v795, %v813
      %v833 = vsel %vm822, %v796, %v814
      %v834 = vsel %vm822, %v797, %v815
      %v835 = vsel %vm822, %v798, %v816
      %v836 = vsel %vm822, %v799, %v817
      %v837 = vsel %vm822, %v800, %v818
      %v838 = vsel %vm822, %v801, %v819
      %v839 = vsel %vm822, %v802, %v820
      %v840 = vsel %vm822, %v803, %v821
      %v841 = vsel %vm822, %v804, %v786
      %v842 = vsel %vm822, %v805, %v787
      %v843 = vsel %vm822, %v806, %v788
      %v844 = vsel %vm822, %v807, %v789
      %v845 = vsel %vm822, %v808, %v790
      %v846 = vsel %vm822, %v809, %v791
      %v847 = vsel %vm822, %v810, %v792
      %v848 = vsel %vm822, %v811, %v793
      %v849 = vsel %vm822, %v812, %v794
      %v850 = vsel %vm822, %v813, %v795
      %v851 = vsel %vm822, %v814, %v796
      %v852 = vsel %vm822, %v815, %v797
      %v853 = vsel %vm822, %v816, %v798
      %v854 = vsel %vm822, %v817, %v799
      %v855 = vsel %vm822, %v818, %v800
      %v856 = vsel %vm822, %v819, %v801
      %v857 = vsel %vm822, %v820, %v802
      %v858 = vsel %vm822, %v821, %v803
      %v859 = vsel %vm784, 1, 0
      %v860 = vsel %vm785, 1, 0
      %vm861 = vcmp.eq.s32.totalorder %v859, 1
      %vm862 = vcmp.eq.s32.totalorder %v860, 1
      %v863 = vsel %vm861, %v823, 0.0
      %v864 = vsel %vm862, %v841, 0.0
      %v865 = vsel %vm861, %v824, 0.0
      %v866 = vsel %vm862, %v842, 0.0
      %v867 = vsel %vm861, %v825, 0.0
      %v868 = vsel %vm862, %v843, 0.0
      %v869 = vsel %vm861, %v826, 0.0
      %v870 = vsel %vm862, %v844, 0.0
      %v871 = vsel %vm861, %v827, 0.0
      %v872 = vsel %vm862, %v845, 0.0
      %v873 = vsel %vm861, %v828, 0.0
      %v874 = vsel %vm862, %v846, 0.0
      %v875 = vsel %vm861, %v829, 0.0
      %v876 = vsel %vm862, %v847, 0.0
      %v877 = vsel %vm861, %v830, 0.0
      %v878 = vsel %vm862, %v848, 0.0
      %v879 = vsel %vm861, %v831, 0.0
      %v880 = vsel %vm862, %v849, 0.0
      %v881 = vsel %vm861, %v832, 0.0
      %v882 = vsel %vm862, %v850, 0.0
      %v883 = vsel %vm861, %v833, 0.0
      %v884 = vsel %vm862, %v851, 0.0
      %v885 = vsel %vm861, %v834, 0.0
      %v886 = vsel %vm862, %v852, 0.0
      %v887 = vsel %vm861, %v835, 0.0
      %v888 = vsel %vm862, %v853, 0.0
      %v889 = vsel %vm861, %v836, 0.0
      %v890 = vsel %vm862, %v854, 0.0
      %v891 = vsel %vm861, %v837, 0.0
      %v892 = vsel %vm862, %v855, 0.0
      %v893 = vsel %vm861, %v838, 0.0
      %v894 = vsel %vm862, %v856, 0.0
      %v895 = vsel %vm861, %v839, 0.0
      %v896 = vsel %vm862, %v857, 0.0
      %v897 = vsel %vm861, %v840, 0.0
      %v898 = vsel %vm862, %v858, 0.0
      %931 = vrot.lane.b32.xlu0 %v630, 8
      %v932 = vpop.permute.xlu0 %931
      %933 = vrot.lane.b32.xlu0 %v631, 8
      %v934 = vpop.permute.xlu0 %933
      %935 = vrot.lane.b32.xlu0 %v632, 8
      %v936 = vpop.permute.xlu0 %935
      %937 = vrot.lane.b32.xlu0 %v633, 8
      %v938 = vpop.permute.xlu0 %937
      %939 = vrot.lane.b32.xlu0 %v634, 8
      %v940 = vpop.permute.xlu0 %939
      %941 = vrot.lane.b32.xlu0 %v635, 8
      %v942 = vpop.permute.xlu0 %941
      %943 = vrot.lane.b32.xlu0 %v636, 8
      %v944 = vpop.permute.xlu0 %943
      %945 = vrot.lane.b32.xlu0 %v637, 8
      %v946 = vpop.permute.xlu0 %945
      %947 = vrot.lane.b32.xlu0 %v638, 8
      %v948 = vpop.permute.xlu0 %947
      %949 = vrot.lane.b32.xlu0 %v639, 8
      %v950 = vpop.permute.xlu0 %949
      %951 = vrot.lane.b32.xlu0 %v640, 8
      %v952 = vpop.permute.xlu0 %951
      %953 = vrot.lane.b32.xlu0 %v641, 8
      %v954 = vpop.permute.xlu0 %953
      %955 = vrot.lane.b32.xlu0 %v642, 8
      %v956 = vpop.permute.xlu0 %955
      %957 = vrot.lane.b32.xlu0 %v643, 8
      %v958 = vpop.permute.xlu0 %957
      %959 = vrot.lane.b32.xlu0 %v644, 8
      %v960 = vpop.permute.xlu0 %959
      %961 = vrot.lane.b32.xlu0 %v645, 8
      %v962 = vpop.permute.xlu0 %961
      %963 = vrot.lane.b32.xlu0 %v646, 8
      %v964 = vpop.permute.xlu0 %963
      %965 = vrot.lane.b32.xlu0 %v647, 8
      %v966 = vpop.permute.xlu0 %965
      %967 = vrot.lane.b32.xlu0 %v648, 8
      %v968 = vpop.permute.xlu0 %967
      %969 = vrot.lane.b32.xlu0 %v649, 8
      %v970 = vpop.permute.xlu0 %969
      %971 = vrot.lane.b32.xlu0 %v650, 8
      %v972 = vpop.permute.xlu0 %971
      %973 = vrot.lane.b32.xlu0 %v651, 8
      %v974 = vpop.permute.xlu0 %973
      %975 = vrot.lane.b32.xlu0 %v652, 8
      %v976 = vpop.permute.xlu0 %975
      %977 = vrot.lane.b32.xlu0 %v653, 8
      %v978 = vpop.permute.xlu0 %977
      %979 = vrot.lane.b32.xlu0 %v654, 8
      %v980 = vpop.permute.xlu0 %979
      %981 = vrot.lane.b32.xlu0 %v655, 8
      %v982 = vpop.permute.xlu0 %981
      %983 = vrot.lane.b32.xlu0 %v656, 8
      %v984 = vpop.permute.xlu0 %983
      %985 = vrot.lane.b32.xlu0 %v657, 8
      %v986 = vpop.permute.xlu0 %985
      %987 = vrot.lane.b32.xlu0 %v658, 8
      %v988 = vpop.permute.xlu0 %987
      %989 = vrot.lane.b32.xlu0 %v659, 8
      %v990 = vpop.permute.xlu0 %989
      %991 = vrot.lane.b32.xlu0 %v660, 8
      %v992 = vpop.permute.xlu0 %991
      %993 = vrot.lane.b32.xlu0 %v661, 8
      %v994 = vpop.permute.xlu0 %993
      %1059 = vrot.lane.b32.xlu0 %v863, 16
      %v1060 = vpop.permute.xlu0 %1059
      %1061 = vrot.lane.b32.xlu0 %v864, 16
      %v1062 = vpop.permute.xlu0 %1061
      %1063 = vrot.lane.b32.xlu0 %v865, 16
      %v1064 = vpop.permute.xlu0 %1063
      %1065 = vrot.lane.b32.xlu0 %v866, 16
      %v1066 = vpop.permute.xlu0 %1065
      %1067 = vrot.lane.b32.xlu0 %v867, 16
      %v1068 = vpop.permute.xlu0 %1067
      %1069 = vrot.lane.b32.xlu0 %v868, 16
      %v1070 = vpop.permute.xlu0 %1069
      %1071 = vrot.lane.b32.xlu0 %v869, 16
      %v1072 = vpop.permute.xlu0 %1071
      %1073 = vrot.lane.b32.xlu0 %v870, 16
      %v1074 = vpop.permute.xlu0 %1073
      %1075 = vrot.lane.b32.xlu0 %v871, 16
      %v1076 = vpop.permute.xlu0 %1075
      %1077 = vrot.lane.b32.xlu0 %v872, 16
      %v1078 = vpop.permute.xlu0 %1077
      %1079 = vrot.lane.b32.xlu0 %v873, 16
      %v1080 = vpop.permute.xlu0 %1079
      %1081 = vrot.lane.b32.xlu0 %v874, 16
      %v1082 = vpop.permute.xlu0 %1081
      %1083 = vrot.lane.b32.xlu0 %v875, 16
      %v1084 = vpop.permute.xlu0 %1083
      %1085 = vrot.lane.b32.xlu0 %v876, 16
      %v1086 = vpop.permute.xlu0 %1085
      %1087 = vrot.lane.b32.xlu0 %v877, 16
      %v1088 = vpop.permute.xlu0 %1087
      %1089 = vrot.lane.b32.xlu0 %v878, 16
      %v1090 = vpop.permute.xlu0 %1089
      %1091 = vrot.lane.b32.xlu0 %v879, 16
      %v1092 = vpop.permute.xlu0 %1091
      %1093 = vrot.lane.b32.xlu0 %v880, 16
      %v1094 = vpop.permute.xlu0 %1093
      %1095 = vrot.lane.b32.xlu0 %v881, 16
      %v1096 = vpop.permute.xlu0 %1095
      %1097 = vrot.lane.b32.xlu0 %v882, 16
      %v1098 = vpop.permute.xlu0 %1097
      %1099 = vrot.lane.b32.xlu0 %v883, 16
      %v1100 = vpop.permute.xlu0 %1099
      %1101 = vrot.lane.b32.xlu0 %v884, 16
      %v1102 = vpop.permute.xlu0 %1101
      %1103 = vrot.lane.b32.xlu0 %v885, 16
      %v1104 = vpop.permute.xlu0 %1103
      %1105 = vrot.lane.b32.xlu0 %v886, 16
      %v1106 = vpop.permute.xlu0 %1105
      %1107 = vrot.lane.b32.xlu0 %v887, 16
      %v1108 = vpop.permute.xlu0 %1107
      %1109 = vrot.lane.b32.xlu0 %v888, 16
      %v1110 = vpop.permute.xlu0 %1109
      %1111 = vrot.lane.b32.xlu0 %v889, 16
      %v1112 = vpop.permute.xlu0 %1111
      %1113 = vrot.lane.b32.xlu0 %v890, 16
      %v1114 = vpop.permute.xlu0 %1113
      %1115 = vrot.lane.b32.xlu0 %v891, 16
      %v1116 = vpop.permute.xlu0 %1115
      %1117 = vrot.lane.b32.xlu0 %v892, 16
      %v1118 = vpop.permute.xlu0 %1117
      %1119 = vrot.lane.b32.xlu0 %v893, 16
      %v1120 = vpop.permute.xlu0 %1119
      %1121 = vrot.lane.b32.xlu0 %v894, 16
      %v1122 = vpop.permute.xlu0 %1121
      %1187 = vrot.lane.b32.xlu0 %v750, 24
      %v1188 = vpop.permute.xlu0 %1187
      %1189 = vrot.lane.b32.xlu0 %v751, 24
      %v1190 = vpop.permute.xlu0 %1189
      %1191 = vrot.lane.b32.xlu0 %v752, 24
      %v1192 = vpop.permute.xlu0 %1191
      %1193 = vrot.lane.b32.xlu0 %v753, 24
      %v1194 = vpop.permute.xlu0 %1193
      %1195 = vrot.lane.b32.xlu0 %v754, 24
      %v1196 = vpop.permute.xlu0 %1195
      %1197 = vrot.lane.b32.xlu0 %v755, 24
      %v1198 = vpop.permute.xlu0 %1197
      %1199 = vrot.lane.b32.xlu0 %v756, 24
      %v1200 = vpop.permute.xlu0 %1199
      %1201 = vrot.lane.b32.xlu0 %v757, 24
      %v1202 = vpop.permute.xlu0 %1201
      %1203 = vrot.lane.b32.xlu0 %v758, 24
      %v1204 = vpop.permute.xlu0 %1203
      %1205 = vrot.lane.b32.xlu0 %v759, 24
      %v1206 = vpop.permute.xlu0 %1205
      %1207 = vrot.lane.b32.xlu0 %v760, 24
      %v1208 = vpop.permute.xlu0 %1207
      %1209 = vrot.lane.b32.xlu0 %v761, 24
      %v1210 = vpop.permute.xlu0 %1209
      %1211 = vrot.lane.b32.xlu0 %v762, 24
      %v1212 = vpop.permute.xlu0 %1211
      %1213 = vrot.lane.b32.xlu0 %v763, 24
      %v1214 = vpop.permute.xlu0 %1213
      %1215 = vrot.lane.b32.xlu0 %v764, 24
      %v1216 = vpop.permute.xlu0 %1215
      %1217 = vrot.lane.b32.xlu0 %v765, 24
      %v1218 = vpop.permute.xlu0 %1217
      %1219 = vrot.lane.b32.xlu0 %v766, 24
      %v1220 = vpop.permute.xlu0 %1219
      %1221 = vrot.lane.b32.xlu0 %v767, 24
      %v1222 = vpop.permute.xlu0 %1221
      %1223 = vrot.lane.b32.xlu0 %v768, 24
      %v1224 = vpop.permute.xlu0 %1223
      %1225 = vrot.lane.b32.xlu0 %v769, 24
      %v1226 = vpop.permute.xlu0 %1225
      %1227 = vrot.lane.b32.xlu0 %v770, 24
      %v1228 = vpop.permute.xlu0 %1227
      %1229 = vrot.lane.b32.xlu0 %v771, 24
      %v1230 = vpop.permute.xlu0 %1229
      %1231 = vrot.lane.b32.xlu0 %v772, 24
      %v1232 = vpop.permute.xlu0 %1231
      %1233 = vrot.lane.b32.xlu0 %v773, 24
      %v1234 = vpop.permute.xlu0 %1233
      %1235 = vrot.lane.b32.xlu0 %v774, 24
      %v1236 = vpop.permute.xlu0 %1235
      %1237 = vrot.lane.b32.xlu0 %v775, 24
      %v1238 = vpop.permute.xlu0 %1237
      %1239 = vrot.lane.b32.xlu0 %v776, 24
      %v1240 = vpop.permute.xlu0 %1239
      %1241 = vrot.lane.b32.xlu0 %v777, 24
      %v1242 = vpop.permute.xlu0 %1241
      %1243 = vrot.lane.b32.xlu0 %v778, 24
      %v1244 = vpop.permute.xlu0 %1243
      %1245 = vrot.lane.b32.xlu0 %v779, 24
      %v1246 = vpop.permute.xlu0 %1245
      %1247 = vrot.lane.b32.xlu0 %v780, 24
      %v1248 = vpop.permute.xlu0 %1247
      %1249 = vrot.lane.b32.xlu0 %v781, 24
      %v1250 = vpop.permute.xlu0 %1249
      %1285 = vrot.lane.b32.xlu0 %v632, 32
      %v1286 = vpop.permute.xlu0 %1285
      %1287 = vrot.lane.b32.xlu0 %v633, 32
      %v1288 = vpop.permute.xlu0 %1287
      %1289 = vrot.lane.b32.xlu0 %v634, 32
      %v1290 = vpop.permute.xlu0 %1289
      %1291 = vrot.lane.b32.xlu0 %v635, 32
      %v1292 = vpop.permute.xlu0 %1291
      %1293 = vrot.lane.b32.xlu0 %v636, 32
      %v1294 = vpop.permute.xlu0 %1293
      %1295 = vrot.lane.b32.xlu0 %v637, 32
      %v1296 = vpop.permute.xlu0 %1295
      %1297 = vrot.lane.b32.xlu0 %v638, 32
      %v1298 = vpop.permute.xlu0 %1297
      %1299 = vrot.lane.b32.xlu0 %v639, 32
      %v1300 = vpop.permute.xlu0 %1299
      %1301 = vrot.lane.b32.xlu0 %v640, 32
      %v1302 = vpop.permute.xlu0 %1301
      %1303 = vrot.lane.b32.xlu0 %v641, 32
      %v1304 = vpop.permute.xlu0 %1303
      %1305 = vrot.lane.b32.xlu0 %v642, 32
      %v1306 = vpop.permute.xlu0 %1305
      %1307 = vrot.lane.b32.xlu0 %v643, 32
      %v1308 = vpop.permute.xlu0 %1307
      %1309 = vrot.lane.b32.xlu0 %v644, 32
      %v1310 = vpop.permute.xlu0 %1309
      %1311 = vrot.lane.b32.xlu0 %v645, 32
      %v1312 = vpop.permute.xlu0 %1311
      %1313 = vrot.lane.b32.xlu0 %v646, 32
      %v1314 = vpop.permute.xlu0 %1313
      %1315 = vrot.lane.b32.xlu0 %v647, 32
      %v1316 = vpop.permute.xlu0 %1315
      %1317 = vrot.lane.b32.xlu0 %v648, 32
      %v1318 = vpop.permute.xlu0 %1317
      %1319 = vrot.lane.b32.xlu0 %v649, 32
      %v1320 = vpop.permute.xlu0 %1319
      %1321 = vrot.lane.b32.xlu0 %v650, 32
      %v1322 = vpop.permute.xlu0 %1321
      %1323 = vrot.lane.b32.xlu0 %v651, 32
      %v1324 = vpop.permute.xlu0 %1323
      %1325 = vrot.lane.b32.xlu0 %v652, 32
      %v1326 = vpop.permute.xlu0 %1325
      %1327 = vrot.lane.b32.xlu0 %v653, 32
      %v1328 = vpop.permute.xlu0 %1327
      %1329 = vrot.lane.b32.xlu0 %v654, 32
      %v1330 = vpop.permute.xlu0 %1329
      %1331 = vrot.lane.b32.xlu0 %v655, 32
      %v1332 = vpop.permute.xlu0 %1331
      %1333 = vrot.lane.b32.xlu0 %v656, 32
      %v1334 = vpop.permute.xlu0 %1333
      %1335 = vrot.lane.b32.xlu0 %v657, 32
      %v1336 = vpop.permute.xlu0 %1335
      %1337 = vrot.lane.b32.xlu0 %v658, 32
      %v1338 = vpop.permute.xlu0 %1337
      %1339 = vrot.lane.b32.xlu0 %v659, 32
      %v1340 = vpop.permute.xlu0 %1339
      %1341 = vrot.lane.b32.xlu0 %v660, 32
      %v1342 = vpop.permute.xlu0 %1341
      %1343 = vrot.lane.b32.xlu0 %v661, 32
      %v1344 = vpop.permute.xlu0 %1343
      %1345 = vrot.lane.b32.xlu0 %v662, 32
      %v1346 = vpop.permute.xlu0 %1345
      %1347 = vrot.lane.b32.xlu0 %v663, 32
      %v1348 = vpop.permute.xlu0 %1347
      %1383 = vrot.lane.b32.xlu0 %v865, 40
      %v1384 = vpop.permute.xlu0 %1383
      %1385 = vrot.lane.b32.xlu0 %v866, 40
      %v1386 = vpop.permute.xlu0 %1385
      %1387 = vrot.lane.b32.xlu0 %v867, 40
      %v1388 = vpop.permute.xlu0 %1387
      %1389 = vrot.lane.b32.xlu0 %v868, 40
      %v1390 = vpop.permute.xlu0 %1389
      %1391 = vrot.lane.b32.xlu0 %v869, 40
      %v1392 = vpop.permute.xlu0 %1391
      %1393 = vrot.lane.b32.xlu0 %v870, 40
      %v1394 = vpop.permute.xlu0 %1393
      %1395 = vrot.lane.b32.xlu0 %v871, 40
      %v1396 = vpop.permute.xlu0 %1395
      %1397 = vrot.lane.b32.xlu0 %v872, 40
      %v1398 = vpop.permute.xlu0 %1397
      %1399 = vrot.lane.b32.xlu0 %v873, 40
      %v1400 = vpop.permute.xlu0 %1399
      %1401 = vrot.lane.b32.xlu0 %v874, 40
      %v1402 = vpop.permute.xlu0 %1401
      %1403 = vrot.lane.b32.xlu0 %v875, 40
      %v1404 = vpop.permute.xlu0 %1403
      %1405 = vrot.lane.b32.xlu0 %v876, 40
      %v1406 = vpop.permute.xlu0 %1405
      %1407 = vrot.lane.b32.xlu0 %v877, 40
      %v1408 = vpop.permute.xlu0 %1407
      %1409 = vrot.lane.b32.xlu0 %v878, 40
      %v1410 = vpop.permute.xlu0 %1409
      %1411 = vrot.lane.b32.xlu0 %v879, 40
      %v1412 = vpop.permute.xlu0 %1411
      %1413 = vrot.lane.b32.xlu0 %v880, 40
      %v1414 = vpop.permute.xlu0 %1413
      %1415 = vrot.lane.b32.xlu0 %v881, 40
      %v1416 = vpop.permute.xlu0 %1415
      %1417 = vrot.lane.b32.xlu0 %v882, 40
      %v1418 = vpop.permute.xlu0 %1417
      %1419 = vrot.lane.b32.xlu0 %v883, 40
      %v1420 = vpop.permute.xlu0 %1419
      %1421 = vrot.lane.b32.xlu0 %v884, 40
      %v1422 = vpop.permute.xlu0 %1421
      %1423 = vrot.lane.b32.xlu0 %v885, 40
      %v1424 = vpop.permute.xlu0 %1423
      %1425 = vrot.lane.b32.xlu0 %v886, 40
      %v1426 = vpop.permute.xlu0 %1425
      %1427 = vrot.lane.b32.xlu0 %v887, 40
      %v1428 = vpop.permute.xlu0 %1427
      %1429 = vrot.lane.b32.xlu0 %v888, 40
      %v1430 = vpop.permute.xlu0 %1429
      %1431 = vrot.lane.b32.xlu0 %v889, 40
      %v1432 = vpop.permute.xlu0 %1431
      %1433 = vrot.lane.b32.xlu0 %v890, 40
      %v1434 = vpop.permute.xlu0 %1433
      %1435 = vrot.lane.b32.xlu0 %v891, 40
      %v1436 = vpop.permute.xlu0 %1435
      %1437 = vrot.lane.b32.xlu0 %v892, 40
      %v1438 = vpop.permute.xlu0 %1437
      %1439 = vrot.lane.b32.xlu0 %v893, 40
      %v1440 = vpop.permute.xlu0 %1439
      %1441 = vrot.lane.b32.xlu0 %v894, 40
      %v1442 = vpop.permute.xlu0 %1441
      %1443 = vrot.lane.b32.xlu0 %v895, 40
      %v1444 = vpop.permute.xlu0 %1443
      %1445 = vrot.lane.b32.xlu0 %v896, 40
      %v1446 = vpop.permute.xlu0 %1445
      %1481 = vrot.lane.b32.xlu0 %v752, 48
      %v1482 = vpop.permute.xlu0 %1481
      %1483 = vrot.lane.b32.xlu0 %v753, 48
      %v1484 = vpop.permute.xlu0 %1483
      %1485 = vrot.lane.b32.xlu0 %v754, 48
      %v1486 = vpop.permute.xlu0 %1485
      %1487 = vrot.lane.b32.xlu0 %v755, 48
      %v1488 = vpop.permute.xlu0 %1487
      %1489 = vrot.lane.b32.xlu0 %v756, 48
      %v1490 = vpop.permute.xlu0 %1489
      %1491 = vrot.lane.b32.xlu0 %v757, 48
      %v1492 = vpop.permute.xlu0 %1491
      %1493 = vrot.lane.b32.xlu0 %v758, 48
      %v1494 = vpop.permute.xlu0 %1493
      %1495 = vrot.lane.b32.xlu0 %v759, 48
      %v1496 = vpop.permute.xlu0 %1495
      %1497 = vrot.lane.b32.xlu0 %v760, 48
      %v1498 = vpop.permute.xlu0 %1497
      %1499 = vrot.lane.b32.xlu0 %v761, 48
      %v1500 = vpop.permute.xlu0 %1499
      %1501 = vrot.lane.b32.xlu0 %v762, 48
      %v1502 = vpop.permute.xlu0 %1501
      %1503 = vrot.lane.b32.xlu0 %v763, 48
      %v1504 = vpop.permute.xlu0 %1503
      %1505 = vrot.lane.b32.xlu0 %v764, 48
      %v1506 = vpop.permute.xlu0 %1505
      %1507 = vrot.lane.b32.xlu0 %v765, 48
      %v1508 = vpop.permute.xlu0 %1507
      %1509 = vrot.lane.b32.xlu0 %v766, 48
      %v1510 = vpop.permute.xlu0 %1509
      %1511 = vrot.lane.b32.xlu0 %v767, 48
      %v1512 = vpop.permute.xlu0 %1511
      %1513 = vrot.lane.b32.xlu0 %v768, 48
      %v1514 = vpop.permute.xlu0 %1513
      %1515 = vrot.lane.b32.xlu0 %v769, 48
      %v1516 = vpop.permute.xlu0 %1515
      %1517 = vrot.lane.b32.xlu0 %v770, 48
      %v1518 = vpop.permute.xlu0 %1517
      %1519 = vrot.lane.b32.xlu0 %v771, 48
      %v1520 = vpop.permute.xlu0 %1519
      %1521 = vrot.lane.b32.xlu0 %v772, 48
      %v1522 = vpop.permute.xlu0 %1521
      %1523 = vrot.lane.b32.xlu0 %v773, 48
      %v1524 = vpop.permute.xlu0 %1523
      %1525 = vrot.lane.b32.xlu0 %v774, 48
      %v1526 = vpop.permute.xlu0 %1525
      %1527 = vrot.lane.b32.xlu0 %v775, 48
      %v1528 = vpop.permute.xlu0 %1527
      %1529 = vrot.lane.b32.xlu0 %v776, 48
      %v1530 = vpop.permute.xlu0 %1529
      %1531 = vrot.lane.b32.xlu0 %v777, 48
      %v1532 = vpop.permute.xlu0 %1531
      %1533 = vrot.lane.b32.xlu0 %v778, 48
      %v1534 = vpop.permute.xlu0 %1533
      %1535 = vrot.lane.b32.xlu0 %v779, 48
      %v1536 = vpop.permute.xlu0 %1535
      %1537 = vrot.lane.b32.xlu0 %v780, 48
      %v1538 = vpop.permute.xlu0 %1537
      %1539 = vrot.lane.b32.xlu0 %v781, 48
      %v1540 = vpop.permute.xlu0 %1539
      %1541 = vrot.lane.b32.xlu0 %v782, 48
      %v1542 = vpop.permute.xlu0 %1541
      %1543 = vrot.lane.b32.xlu0 %v783, 48
      %v1544 = vpop.permute.xlu0 %1543
      %1579 = vrot.lane.b32.xlu0 %v634, 56
      %v1580 = vpop.permute.xlu0 %1579
      %1581 = vrot.lane.b32.xlu0 %v635, 56
      %v1582 = vpop.permute.xlu0 %1581
      %1583 = vrot.lane.b32.xlu0 %v636, 56
      %v1584 = vpop.permute.xlu0 %1583
      %1585 = vrot.lane.b32.xlu0 %v637, 56
      %v1586 = vpop.permute.xlu0 %1585
      %1587 = vrot.lane.b32.xlu0 %v638, 56
      %v1588 = vpop.permute.xlu0 %1587
      %1589 = vrot.lane.b32.xlu0 %v639, 56
      %v1590 = vpop.permute.xlu0 %1589
      %1591 = vrot.lane.b32.xlu0 %v640, 56
      %v1592 = vpop.permute.xlu0 %1591
      %1593 = vrot.lane.b32.xlu0 %v641, 56
      %v1594 = vpop.permute.xlu0 %1593
      %1595 = vrot.lane.b32.xlu0 %v642, 56
      %v1596 = vpop.permute.xlu0 %1595
      %1597 = vrot.lane.b32.xlu0 %v643, 56
      %v1598 = vpop.permute.xlu0 %1597
      %1599 = vrot.lane.b32.xlu0 %v644, 56
      %v1600 = vpop.permute.xlu0 %1599
      %1601 = vrot.lane.b32.xlu0 %v645, 56
      %v1602 = vpop.permute.xlu0 %1601
      %1603 = vrot.lane.b32.xlu0 %v646, 56
      %v1604 = vpop.permute.xlu0 %1603
      %1605 = vrot.lane.b32.xlu0 %v647, 56
      %v1606 = vpop.permute.xlu0 %1605
      %1607 = vrot.lane.b32.xlu0 %v648, 56
      %v1608 = vpop.permute.xlu0 %1607
      %1609 = vrot.lane.b32.xlu0 %v649, 56
      %v1610 = vpop.permute.xlu0 %1609
      %1611 = vrot.lane.b32.xlu0 %v650, 56
      %v1612 = vpop.permute.xlu0 %1611
      %1613 = vrot.lane.b32.xlu0 %v651, 56
      %v1614 = vpop.permute.xlu0 %1613
      %1615 = vrot.lane.b32.xlu0 %v652, 56
      %v1616 = vpop.permute.xlu0 %1615
      %1617 = vrot.lane.b32.xlu0 %v653, 56
      %v1618 = vpop.permute.xlu0 %1617
      %1619 = vrot.lane.b32.xlu0 %v654, 56
      %v1620 = vpop.permute.xlu0 %1619
      %1621 = vrot.lane.b32.xlu0 %v655, 56
      %v1622 = vpop.permute.xlu0 %1621
      %1623 = vrot.lane.b32.xlu0 %v656, 56
      %v1624 = vpop.permute.xlu0 %1623
      %1625 = vrot.lane.b32.xlu0 %v657, 56
      %v1626 = vpop.permute.xlu0 %1625
      %1627 = vrot.lane.b32.xlu0 %v658, 56
      %v1628 = vpop.permute.xlu0 %1627
      %1629 = vrot.lane.b32.xlu0 %v659, 56
      %v1630 = vpop.permute.xlu0 %1629
      %1631 = vrot.lane.b32.xlu0 %v660, 56
      %v1632 = vpop.permute.xlu0 %1631
      %1633 = vrot.lane.b32.xlu0 %v661, 56
      %v1634 = vpop.permute.xlu0 %1633
      %1635 = vrot.lane.b32.xlu0 %v662, 56
      %v1636 = vpop.permute.xlu0 %1635
      %1637 = vrot.lane.b32.xlu0 %v663, 56
      %v1638 = vpop.permute.xlu0 %1637
      %1639 = vrot.lane.b32.xlu0 %v664, 56
      %v1640 = vpop.permute.xlu0 %1639
      %1641 = vrot.lane.b32.xlu0 %v665, 56
      %v1642 = vpop.permute.xlu0 %1641
      %1677 = vrot.lane.b32.xlu0 %v867, 64
      %v1678 = vpop.permute.xlu0 %1677
      %1679 = vrot.lane.b32.xlu0 %v868, 64
      %v1680 = vpop.permute.xlu0 %1679
      %1681 = vrot.lane.b32.xlu0 %v869, 64
      %v1682 = vpop.permute.xlu0 %1681
      %1683 = vrot.lane.b32.xlu0 %v870, 64
      %v1684 = vpop.permute.xlu0 %1683
      %1685 = vrot.lane.b32.xlu0 %v871, 64
      %v1686 = vpop.permute.xlu0 %1685
      %1687 = vrot.lane.b32.xlu0 %v872, 64
      %v1688 = vpop.permute.xlu0 %1687
      %1689 = vrot.lane.b32.xlu0 %v873, 64
      %v1690 = vpop.permute.xlu0 %1689
      %1691 = vrot.lane.b32.xlu0 %v874, 64
      %v1692 = vpop.permute.xlu0 %1691
      %1693 = vrot.lane.b32.xlu0 %v875, 64
      %v1694 = vpop.permute.xlu0 %1693
      %1695 = vrot.lane.b32.xlu0 %v876, 64
      %v1696 = vpop.permute.xlu0 %1695
      %1697 = vrot.lane.b32.xlu0 %v877, 64
      %v1698 = vpop.permute.xlu0 %1697
      %1699 = vrot.lane.b32.xlu0 %v878, 64
      %v1700 = vpop.permute.xlu0 %1699
      %1701 = vrot.lane.b32.xlu0 %v879, 64
      %v1702 = vpop.permute.xlu0 %1701
      %1703 = vrot.lane.b32.xlu0 %v880, 64
      %v1704 = vpop.permute.xlu0 %1703
      %1705 = vrot.lane.b32.xlu0 %v881, 64
      %v1706 = vpop.permute.xlu0 %1705
      %1707 = vrot.lane.b32.xlu0 %v882, 64
      %v1708 = vpop.permute.xlu0 %1707
      %1709 = vrot.lane.b32.xlu0 %v883, 64
      %v1710 = vpop.permute.xlu0 %1709
      %1711 = vrot.lane.b32.xlu0 %v884, 64
      %v1712 = vpop.permute.xlu0 %1711
      %1713 = vrot.lane.b32.xlu0 %v885, 64
      %v1714 = vpop.permute.xlu0 %1713
      %1715 = vrot.lane.b32.xlu0 %v886, 64
      %v1716 = vpop.permute.xlu0 %1715
      %1717 = vrot.lane.b32.xlu0 %v887, 64
      %v1718 = vpop.permute.xlu0 %1717
      %1719 = vrot.lane.b32.xlu0 %v888, 64
      %v1720 = vpop.permute.xlu0 %1719
      %1721 = vrot.lane.b32.xlu0 %v889, 64
      %v1722 = vpop.permute.xlu0 %1721
      %1723 = vrot.lane.b32.xlu0 %v890, 64
      %v1724 = vpop.permute.xlu0 %1723
      %1725 = vrot.lane.b32.xlu0 %v891, 64
      %v1726 = vpop.permute.xlu0 %1725
      %1727 = vrot.lane.b32.xlu0 %v892, 64
      %v1728 = vpop.permute.xlu0 %1727
      %1729 = vrot.lane.b32.xlu0 %v893, 64
      %v1730 = vpop.permute.xlu0 %1729
      %1731 = vrot.lane.b32.xlu0 %v894, 64
      %v1732 = vpop.permute.xlu0 %1731
      %1733 = vrot.lane.b32.xlu0 %v895, 64
      %v1734 = vpop.permute.xlu0 %1733
      %1735 = vrot.lane.b32.xlu0 %v896, 64
      %v1736 = vpop.permute.xlu0 %1735
      %1737 = vrot.lane.b32.xlu0 %v897, 64
      %v1738 = vpop.permute.xlu0 %1737
      %1739 = vrot.lane.b32.xlu0 %v898, 64
      %v1740 = vpop.permute.xlu0 %1739
      %vm1773 = vcmask 64512
      %v1774 = vsel %vm1773, %v748, %v932
      %v1775 = vsel %vm1773, %v749, %v934
      %v1776 = vsel %vm1773, %v750, %v936
      %v1777 = vsel %vm1773, %v751, %v938
      %v1778 = vsel %vm1773, %v752, %v940
      %v1779 = vsel %vm1773, %v753, %v942
      %v1780 = vsel %vm1773, %v754, %v944
      %v1781 = vsel %vm1773, %v755, %v946
      %v1782 = vsel %vm1773, %v756, %v948
      %v1783 = vsel %vm1773, %v757, %v950
      %v1784 = vsel %vm1773, %v758, %v952
      %v1785 = vsel %vm1773, %v759, %v954
      %v1786 = vsel %vm1773, %v760, %v956
      %v1787 = vsel %vm1773, %v761, %v958
      %v1788 = vsel %vm1773, %v762, %v960
      %v1789 = vsel %vm1773, %v763, %v962
      %v1790 = vsel %vm1773, %v764, %v964
      %v1791 = vsel %vm1773, %v765, %v966
      %v1792 = vsel %vm1773, %v766, %v968
      %v1793 = vsel %vm1773, %v767, %v970
      %v1794 = vsel %vm1773, %v768, %v972
      %v1795 = vsel %vm1773, %v769, %v974
      %v1796 = vsel %vm1773, %v770, %v976
      %v1797 = vsel %vm1773, %v771, %v978
      %v1798 = vsel %vm1773, %v772, %v980
      %v1799 = vsel %vm1773, %v773, %v982
      %v1800 = vsel %vm1773, %v774, %v984
      %v1801 = vsel %vm1773, %v775, %v986
      %v1802 = vsel %vm1773, %v776, %v988
      %v1803 = vsel %vm1773, %v777, %v990
      %v1804 = vsel %vm1773, %v778, %v992
      %v1805 = vsel %vm1773, %v779, %v994
      %vm1806 = vcmask 130048
      %v1807 = vsel %vm1806, %v1774, %v1060
      %v1808 = vsel %vm1806, %v1775, %v1062
      %v1809 = vsel %vm1806, %v1776, %v1064
      %v1810 = vsel %vm1806, %v1777, %v1066
      %v1811 = vsel %vm1806, %v1778, %v1068
      %v1812 = vsel %vm1806, %v1779, %v1070
      %v1813 = vsel %vm1806, %v1780, %v1072
      %v1814 = vsel %vm1806, %v1781, %v1074
      %v1815 = vsel %vm1806, %v1782, %v1076
      %v1816 = vsel %vm1806, %v1783, %v1078
      %v1817 = vsel %vm1806, %v1784, %v1080
      %v1818 = vsel %vm1806, %v1785, %v1082
      %v1819 = vsel %vm1806, %v1786, %v1084
      %v1820 = vsel %vm1806, %v1787, %v1086
      %v1821 = vsel %vm1806, %v1788, %v1088
      %v1822 = vsel %vm1806, %v1789, %v1090
      %v1823 = vsel %vm1806, %v1790, %v1092
      %v1824 = vsel %vm1806, %v1791, %v1094
      %v1825 = vsel %vm1806, %v1792, %v1096
      %v1826 = vsel %vm1806, %v1793, %v1098
      %v1827 = vsel %vm1806, %v1794, %v1100
      %v1828 = vsel %vm1806, %v1795, %v1102
      %v1829 = vsel %vm1806, %v1796, %v1104
      %v1830 = vsel %vm1806, %v1797, %v1106
      %v1831 = vsel %vm1806, %v1798, %v1108
      %v1832 = vsel %vm1806, %v1799, %v1110
      %v1833 = vsel %vm1806, %v1800, %v1112
      %v1834 = vsel %vm1806, %v1801, %v1114
      %v1835 = vsel %vm1806, %v1802, %v1116
      %v1836 = vsel %vm1806, %v1803, %v1118
      %v1837 = vsel %vm1806, %v1804, %v1120
      %v1838 = vsel %vm1806, %v1805, %v1122
      %vm1839 = vcmask 195584
      %v1840 = vsel %vm1839, %v1807, %v1188
      %v1841 = vsel %vm1839, %v1808, %v1190
      %v1842 = vsel %vm1839, %v1809, %v1192
      %v1843 = vsel %vm1839, %v1810, %v1194
      %v1844 = vsel %vm1839, %v1811, %v1196
      %v1845 = vsel %vm1839, %v1812, %v1198
      %v1846 = vsel %vm1839, %v1813, %v1200
      %v1847 = vsel %vm1839, %v1814, %v1202
      %v1848 = vsel %vm1839, %v1815, %v1204
      %v1849 = vsel %vm1839, %v1816, %v1206
      %v1850 = vsel %vm1839, %v1817, %v1208
      %v1851 = vsel %vm1839, %v1818, %v1210
      %v1852 = vsel %vm1839, %v1819, %v1212
      %v1853 = vsel %vm1839, %v1820, %v1214
      %v1854 = vsel %vm1839, %v1821, %v1216
      %v1855 = vsel %vm1839, %v1822, %v1218
      %v1856 = vsel %vm1839, %v1823, %v1220
      %v1857 = vsel %vm1839, %v1824, %v1222
      %v1858 = vsel %vm1839, %v1825, %v1224
      %v1859 = vsel %vm1839, %v1826, %v1226
      %v1860 = vsel %vm1839, %v1827, %v1228
      %v1861 = vsel %vm1839, %v1828, %v1230
      %v1862 = vsel %vm1839, %v1829, %v1232
      %v1863 = vsel %vm1839, %v1830, %v1234
      %v1864 = vsel %vm1839, %v1831, %v1236
      %v1865 = vsel %vm1839, %v1832, %v1238
      %v1866 = vsel %vm1839, %v1833, %v1240
      %v1867 = vsel %vm1839, %v1834, %v1242
      %v1868 = vsel %vm1839, %v1835, %v1244
      %v1869 = vsel %vm1839, %v1836, %v1246
      %v1870 = vsel %vm1839, %v1837, %v1248
      %v1871 = vsel %vm1839, %v1838, %v1250
      %vm1872 = vcmask 261120
      %v1873 = vsel %vm1872, %v1840, %v1286
      %v1874 = vsel %vm1872, %v1841, %v1288
      %v1875 = vsel %vm1872, %v1842, %v1290
      %v1876 = vsel %vm1872, %v1843, %v1292
      %v1877 = vsel %vm1872, %v1844, %v1294
      %v1878 = vsel %vm1872, %v1845, %v1296
      %v1879 = vsel %vm1872, %v1846, %v1298
      %v1880 = vsel %vm1872, %v1847, %v1300
      %v1881 = vsel %vm1872, %v1848, %v1302
      %v1882 = vsel %vm1872, %v1849, %v1304
      %v1883 = vsel %vm1872, %v1850, %v1306
      %v1884 = vsel %vm1872, %v1851, %v1308
      %v1885 = vsel %vm1872, %v1852, %v1310
      %v1886 = vsel %vm1872, %v1853, %v1312
      %v1887 = vsel %vm1872, %v1854, %v1314
      %v1888 = vsel %vm1872, %v1855, %v1316
      %v1889 = vsel %vm1872, %v1856, %v1318
      %v1890 = vsel %vm1872, %v1857, %v1320
      %v1891 = vsel %vm1872, %v1858, %v1322
      %v1892 = vsel %vm1872, %v1859, %v1324
      %v1893 = vsel %vm1872, %v1860, %v1326
      %v1894 = vsel %vm1872, %v1861, %v1328
      %v1895 = vsel %vm1872, %v1862, %v1330
      %v1896 = vsel %vm1872, %v1863, %v1332
      %v1897 = vsel %vm1872, %v1864, %v1334
      %v1898 = vsel %vm1872, %v1865, %v1336
      %v1899 = vsel %vm1872, %v1866, %v1338
      %v1900 = vsel %vm1872, %v1867, %v1340
      %v1901 = vsel %vm1872, %v1868, %v1342
      %v1902 = vsel %vm1872, %v1869, %v1344
      %v1903 = vsel %vm1872, %v1870, %v1346
      %v1904 = vsel %vm1872, %v1871, %v1348
      %vm1905 = vcmask 326656
      %v1906 = vsel %vm1905, %v1873, %v1384
      %v1907 = vsel %vm1905, %v1874, %v1386
      %v1908 = vsel %vm1905, %v1875, %v1388
      %v1909 = vsel %vm1905, %v1876, %v1390
      %v1910 = vsel %vm1905, %v1877, %v1392
      %v1911 = vsel %vm1905, %v1878, %v1394
      %v1912 = vsel %vm1905, %v1879, %v1396
      %v1913 = vsel %vm1905, %v1880, %v1398
      %v1914 = vsel %vm1905, %v1881, %v1400
      %v1915 = vsel %vm1905, %v1882, %v1402
      %v1916 = vsel %vm1905, %v1883, %v1404
      %v1917 = vsel %vm1905, %v1884, %v1406
      %v1918 = vsel %vm1905, %v1885, %v1408
      %v1919 = vsel %vm1905, %v1886, %v1410
      %v1920 = vsel %vm1905, %v1887, %v1412
      %v1921 = vsel %vm1905, %v1888, %v1414
      %v1922 = vsel %vm1905, %v1889, %v1416
      %v1923 = vsel %vm1905, %v1890, %v1418
      %v1924 = vsel %vm1905, %v1891, %v1420
      %v1925 = vsel %vm1905, %v1892, %v1422
      %v1926 = vsel %vm1905, %v1893, %v1424
      %v1927 = vsel %vm1905, %v1894, %v1426
      %v1928 = vsel %vm1905, %v1895, %v1428
      %v1929 = vsel %vm1905, %v1896, %v1430
      %v1930 = vsel %vm1905, %v1897, %v1432
      %v1931 = vsel %vm1905, %v1898, %v1434
      %v1932 = vsel %vm1905, %v1899, %v1436
      %v1933 = vsel %vm1905, %v1900, %v1438
      %v1934 = vsel %vm1905, %v1901, %v1440
      %v1935 = vsel %vm1905, %v1902, %v1442
      %v1936 = vsel %vm1905, %v1903, %v1444
      %v1937 = vsel %vm1905, %v1904, %v1446
      %vm1938 = vcmask 392192
      %v1939 = vsel %vm1938, %v1906, %v1482
      %v1940 = vsel %vm1938, %v1907, %v1484
      %v1941 = vsel %vm1938, %v1908, %v1486
      %v1942 = vsel %vm1938, %v1909, %v1488
      %v1943 = vsel %vm1938, %v1910, %v1490
      %v1944 = vsel %vm1938, %v1911, %v1492
      %v1945 = vsel %vm1938, %v1912, %v1494
      %v1946 = vsel %vm1938, %v1913, %v1496
      %v1947 = vsel %vm1938, %v1914, %v1498
      %v1948 = vsel %vm1938, %v1915, %v1500
      %v1949 = vsel %vm1938, %v1916, %v1502
      %v1950 = vsel %vm1938, %v1917, %v1504
      %v1951 = vsel %vm1938, %v1918, %v1506
      %v1952 = vsel %vm1938, %v1919, %v1508
      %v1953 = vsel %vm1938, %v1920, %v1510
      %v1954 = vsel %vm1938, %v1921, %v1512
      %v1955 = vsel %vm1938, %v1922, %v1514
      %v1956 = vsel %vm1938, %v1923, %v1516
      %v1957 = vsel %vm1938, %v1924, %v1518
      %v1958 = vsel %vm1938, %v1925, %v1520
      %v1959 = vsel %vm1938, %v1926, %v1522
      %v1960 = vsel %vm1938, %v1927, %v1524
      %v1961 = vsel %vm1938, %v1928, %v1526
      %v1962 = vsel %vm1938, %v1929, %v1528
      %v1963 = vsel %vm1938, %v1930, %v1530
      %v1964 = vsel %vm1938, %v1931, %v1532
      %v1965 = vsel %vm1938, %v1932, %v1534
      %v1966 = vsel %vm1938, %v1933, %v1536
      %v1967 = vsel %vm1938, %v1934, %v1538
      %v1968 = vsel %vm1938, %v1935, %v1540
      %v1969 = vsel %vm1938, %v1936, %v1542
      %v1970 = vsel %vm1938, %v1937, %v1544
      %vm1971 = vcmask 457728
      %v1972 = vsel %vm1971, %v1939, %v1580
      %v1973 = vsel %vm1971, %v1940, %v1582
      %v1974 = vsel %vm1971, %v1941, %v1584
      %v1975 = vsel %vm1971, %v1942, %v1586
      %v1976 = vsel %vm1971, %v1943, %v1588
      %v1977 = vsel %vm1971, %v1944, %v1590
      %v1978 = vsel %vm1971, %v1945, %v1592
      %v1979 = vsel %vm1971, %v1946, %v1594
      %v1980 = vsel %vm1971, %v1947, %v1596
      %v1981 = vsel %vm1971, %v1948, %v1598
      %v1982 = vsel %vm1971, %v1949, %v1600
      %v1983 = vsel %vm1971, %v1950, %v1602
      %v1984 = vsel %vm1971, %v1951, %v1604
      %v1985 = vsel %vm1971, %v1952, %v1606
      %v1986 = vsel %vm1971, %v1953, %v1608
      %v1987 = vsel %vm1971, %v1954, %v1610
      %v1988 = vsel %vm1971, %v1955, %v1612
      %v1989 = vsel %vm1971, %v1956, %v1614
      %v1990 = vsel %vm1971, %v1957, %v1616
      %v1991 = vsel %vm1971, %v1958, %v1618
      %v1992 = vsel %vm1971, %v1959, %v1620
      %v1993 = vsel %vm1971, %v1960, %v1622
      %v1994 = vsel %vm1971, %v1961, %v1624
      %v1995 = vsel %vm1971, %v1962, %v1626
      %v1996 = vsel %vm1971, %v1963, %v1628
      %v1997 = vsel %vm1971, %v1964, %v1630
      %v1998 = vsel %vm1971, %v1965, %v1632
      %v1999 = vsel %vm1971, %v1966, %v1634
      %v2000 = vsel %vm1971, %v1967, %v1636
      %v2001 = vsel %vm1971, %v1968, %v1638
      %v2002 = vsel %vm1971, %v1969, %v1640
      %v2003 = vsel %vm1971, %v1970, %v1642
      %vm2004 = vcmask 523264
      %v2005 = vsel %vm2004, %v1972, %v1678
      %v2006 = vsel %vm2004, %v1973, %v1680
      %v2007 = vsel %vm2004, %v1974, %v1682
      %v2008 = vsel %vm2004, %v1975, %v1684
      %v2009 = vsel %vm2004, %v1976, %v1686
      %v2010 = vsel %vm2004, %v1977, %v1688
      %v2011 = vsel %vm2004, %v1978, %v1690
      %v2012 = vsel %vm2004, %v1979, %v1692
      %v2013 = vsel %vm2004, %v1980, %v1694
      %v2014 = vsel %vm2004, %v1981, %v1696
      %v2015 = vsel %vm2004, %v1982, %v1698
      %v2016 = vsel %vm2004, %v1983, %v1700
      %v2017 = vsel %vm2004, %v1984, %v1702
      %v2018 = vsel %vm2004, %v1985, %v1704
      %v2019 = vsel %vm2004, %v1986, %v1706
      %v2020 = vsel %vm2004, %v1987, %v1708
      %v2021 = vsel %vm2004, %v1988, %v1710
      %v2022 = vsel %vm2004, %v1989, %v1712
      %v2023 = vsel %vm2004, %v1990, %v1714
      %v2024 = vsel %vm2004, %v1991, %v1716
      %v2025 = vsel %vm2004, %v1992, %v1718
      %v2026 = vsel %vm2004, %v1993, %v1720
      %v2027 = vsel %vm2004, %v1994, %v1722
      %v2028 = vsel %vm2004, %v1995, %v1724
      %v2029 = vsel %vm2004, %v1996, %v1726
      %v2030 = vsel %vm2004, %v1997, %v1728
      %v2031 = vsel %vm2004, %v1998, %v1730
      %v2032 = vsel %vm2004, %v1999, %v1732
      %v2033 = vsel %vm2004, %v2000, %v1734
      %v2034 = vsel %vm2004, %v2001, %v1736
      %v2035 = vsel %vm2004, %v2002, %v1738
      %v2036 = vsel %vm2004, %v2003, %v1740
      %v2037 = vld [vmem:[%s5] sm:$0xff]
      %v2038 = vld [vmem:[%s5 + $0x8] sm:$0xff]
      %v2039 = vld [vmem:[%s5 + $0x10] sm:$0xff]
      %v2040 = vld [vmem:[%s5 + $0x18] sm:$0xff]
      %v2041 = vld [vmem:[%s5 + $0x20] sm:$0xff]
      %v2042 = vld [vmem:[%s5 + $0x28] sm:$0xff]
      %v2043 = vld [vmem:[%s5 + $0x30] sm:$0xff]
      %v2044 = vld [vmem:[%s5 + $0x38] sm:$0xff]
      %v2045 = vld [vmem:[%s5 + $0x40] sm:$0xff]
      %vm2046 = vcmask 588800
      %v2048 = vsel %vm2046, %v2005, 0
      %v2051 = vsel %vm2046, %v2006, 0
      %v2054 = vsel %vm2046, %v2007, 0
      %v2057 = vsel %vm2046, %v2008, 0
      %v2060 = vsel %vm2046, %v2009, 0
      %v2063 = vsel %vm2046, %v2010, 0
      %v2066 = vsel %vm2046, %v2011, 0
      %v2069 = vsel %vm2046, %v2012, 0
      %v2072 = vsel %vm2046, %v2013, 0
      %v2075 = vsel %vm2046, %v2014, 0
      %v2078 = vsel %vm2046, %v2015, 0
      %v2081 = vsel %vm2046, %v2016, 0
      %v2084 = vsel %vm2046, %v2017, 0
      %v2087 = vsel %vm2046, %v2018, 0
      %v2090 = vsel %vm2046, %v2019, 0
      %v2093 = vsel %vm2046, %v2020, 0
      %v2096 = vsel %vm2046, %v2021, 0
      %v2099 = vsel %vm2046, %v2022, 0
      %v2102 = vsel %vm2046, %v2023, 0
      %v2105 = vsel %vm2046, %v2024, 0
      %v2108 = vsel %vm2046, %v2025, 0
      %v2111 = vsel %vm2046, %v2026, 0
      %v2114 = vsel %vm2046, %v2027, 0
      %v2117 = vsel %vm2046, %v2028, 0
      %v2120 = vsel %vm2046, %v2029, 0
      %v2123 = vsel %vm2046, %v2030, 0
      %v2126 = vsel %vm2046, %v2031, 0
      %v2129 = vsel %vm2046, %v2032, 0
      %v2132 = vsel %vm2046, %v2033, 0
      %v2135 = vsel %vm2046, %v2034, 0
      %v2138 = vsel %vm2046, %v2035, 0
      %v2141 = vsel %vm2046, %v2036, 0
      %2143 = vmatpush.msra.mxu0 0.0
      %2144 = vmatpush.msra.mxu0 0.0
      %2145 = vmatpush.msra.mxu0 0.0
      %2146 = vmatpush.msra.mxu0 0.0
      %2147 = vmatpush.msra.mxu0 0.0
      %2148 = vmatpush.msra.mxu0 0.0
      %2149 = vmatpush.msra.mxu0 0.0
      %2150 = vmatpush.msra.mxu0 %v2045
      %2151 = vmatpush.msra.mxu0 %v2044
      %2152 = vmatpush.msra.mxu0 %v2043
      %2153 = vmatpush.msra.mxu0 %v2042
      %2154 = vmatpush.msra.mxu0 %v2041
      %2155 = vmatpush.msra.mxu0 %v2040
      %2156 = vmatpush.msra.mxu0 %v2039
      %2157 = vmatpush.msra.mxu0 %v2038
      %2158 = vmatpush.msra.mxu0 %v2037
      %2159 = vmatmul.f32.gmra.mxu0 %v2048
      %v2160 = vpop.f32.mrf.mxu0
      %v2161 = vadd.f32 0.0, %v2160
      %2162 = vmatmul.f32.gmra.mxu0 %v2051
      %v2163 = vpop.f32.mrf.mxu0
      %v2164 = vadd.f32 0.0, %v2163
      %2165 = vmatmul.f32.gmra.mxu0 %v2054
      %v2166 = vpop.f32.mrf.mxu0
      %v2167 = vadd.f32 0.0, %v2166
      %2168 = vmatmul.f32.gmra.mxu0 %v2057
      %v2169 = vpop.f32.mrf.mxu0
      %v2170 = vadd.f32 0.0, %v2169
      %2171 = vmatmul.f32.gmra.mxu0 %v2060
      %v2172 = vpop.f32.mrf.mxu0
      %v2173 = vadd.f32 0.0, %v2172
      %2174 = vmatmul.f32.gmra.mxu0 %v2063
      %v2175 = vpop.f32.mrf.mxu0
      %v2176 = vadd.f32 0.0, %v2175
      %2177 = vmatmul.f32.gmra.mxu0 %v2066
      %v2178 = vpop.f32.mrf.mxu0
      %v2179 = vadd.f32 0.0, %v2178
      %2180 = vmatmul.f32.gmra.mxu0 %v2069
      %v2181 = vpop.f32.mrf.mxu0
      %v2182 = vadd.f32 0.0, %v2181
      %2183 = vmatmul.f32.gmra.mxu0 %v2072
      %v2184 = vpop.f32.mrf.mxu0
      %v2185 = vadd.f32 0.0, %v2184
      %2186 = vmatmul.f32.gmra.mxu0 %v2075
      %v2187 = vpop.f32.mrf.mxu0
      %v2188 = vadd.f32 0.0, %v2187
      %2189 = vmatmul.f32.gmra.mxu0 %v2078
      %v2190 = vpop.f32.mrf.mxu0
      %v2191 = vadd.f32 0.0, %v2190
      %2192 = vmatmul.f32.gmra.mxu0 %v2081
      %v2193 = vpop.f32.mrf.mxu0
      %v2194 = vadd.f32 0.0, %v2193
      %2195 = vmatmul.f32.gmra.mxu0 %v2084
      %v2196 = vpop.f32.mrf.mxu0
      %v2197 = vadd.f32 0.0, %v2196
      %2198 = vmatmul.f32.gmra.mxu0 %v2087
      %v2199 = vpop.f32.mrf.mxu0
      %v2200 = vadd.f32 0.0, %v2199
      %2201 = vmatmul.f32.gmra.mxu0 %v2090
      %v2202 = vpop.f32.mrf.mxu0
      %v2203 = vadd.f32 0.0, %v2202
      %2204 = vmatmul.f32.gmra.mxu0 %v2093
      %v2205 = vpop.f32.mrf.mxu0
      %v2206 = vadd.f32 0.0, %v2205
      %2207 = vmatmul.f32.gmra.mxu0 %v2096
      %v2208 = vpop.f32.mrf.mxu0
      %v2209 = vadd.f32 0.0, %v2208
      %2210 = vmatmul.f32.gmra.mxu0 %v2099
      %v2211 = vpop.f32.mrf.mxu0
      %v2212 = vadd.f32 0.0, %v2211
      %2213 = vmatmul.f32.gmra.mxu0 %v2102
      %v2214 = vpop.f32.mrf.mxu0
      %v2215 = vadd.f32 0.0, %v2214
      %2216 = vmatmul.f32.gmra.mxu0 %v2105
      %v2217 = vpop.f32.mrf.mxu0
      %v2218 = vadd.f32 0.0, %v2217
      %2219 = vmatmul.f32.gmra.mxu0 %v2108
      %v2220 = vpop.f32.mrf.mxu0
      %v2221 = vadd.f32 0.0, %v2220
      %2222 = vmatmul.f32.gmra.mxu0 %v2111
      %v2223 = vpop.f32.mrf.mxu0
      %v2224 = vadd.f32 0.0, %v2223
      %2225 = vmatmul.f32.gmra.mxu0 %v2114
      %v2226 = vpop.f32.mrf.mxu0
      %v2227 = vadd.f32 0.0, %v2226
      %2228 = vmatmul.f32.gmra.mxu0 %v2117
      %v2229 = vpop.f32.mrf.mxu0
      %v2230 = vadd.f32 0.0, %v2229
      %2231 = vmatmul.f32.gmra.mxu0 %v2120
      %v2232 = vpop.f32.mrf.mxu0
      %v2233 = vadd.f32 0.0, %v2232
      %2234 = vmatmul.f32.gmra.mxu0 %v2123
      %v2235 = vpop.f32.mrf.mxu0
      %v2236 = vadd.f32 0.0, %v2235
      %2237 = vmatmul.f32.gmra.mxu0 %v2126
      %v2238 = vpop.f32.mrf.mxu0
      %v2239 = vadd.f32 0.0, %v2238
      %2240 = vmatmul.f32.gmra.mxu0 %v2129
      %v2241 = vpop.f32.mrf.mxu0
      %v2242 = vadd.f32 0.0, %v2241
      %2243 = vmatmul.f32.gmra.mxu0 %v2132
      %v2244 = vpop.f32.mrf.mxu0
      %v2245 = vadd.f32 0.0, %v2244
      %2246 = vmatmul.f32.gmra.mxu0 %v2135
      %v2247 = vpop.f32.mrf.mxu0
      %v2248 = vadd.f32 0.0, %v2247
      %2249 = vmatmul.f32.gmra.mxu0 %v2138
      %v2250 = vpop.f32.mrf.mxu0
      %v2251 = vadd.f32 0.0, %v2250
      %2252 = vmatmul.f32.gmra.mxu0 %v2141
      %v2253 = vpop.f32.mrf.mxu0
      %v2254 = vadd.f32 0.0, %v2253
      %2255 = vdwg.mxu0
      %2256 = vst.msk [vmem:[%s457] sm:$0xff] %vm1773, %v2161
      %2257 = vst.msk [vmem:[%s457 + $0x8] sm:$0xff] %vm1773, %v2164
      %2258 = vst.msk [vmem:[%s457 + $0x10] sm:$0xff] %vm1773, %v2167
      %2259 = vst.msk [vmem:[%s457 + $0x18] sm:$0xff] %vm1773, %v2170
      %2260 = vst.msk [vmem:[%s457 + $0x20] sm:$0xff] %vm1773, %v2173
      %2261 = vst.msk [vmem:[%s457 + $0x28] sm:$0xff] %vm1773, %v2176
      %2262 = vst.msk [vmem:[%s457 + $0x30] sm:$0xff] %vm1773, %v2179
      %2263 = vst.msk [vmem:[%s457 + $0x38] sm:$0xff] %vm1773, %v2182
      %2264 = vst.msk [vmem:[%s457 + $0x40] sm:$0xff] %vm1773, %v2185
      %2265 = vst.msk [vmem:[%s457 + $0x48] sm:$0xff] %vm1773, %v2188
      %2266 = vst.msk [vmem:[%s457 + $0x50] sm:$0xff] %vm1773, %v2191
      %2267 = vst.msk [vmem:[%s457 + $0x58] sm:$0xff] %vm1773, %v2194
      %2268 = vst.msk [vmem:[%s457 + $0x60] sm:$0xff] %vm1773, %v2197
      %2269 = vst.msk [vmem:[%s457 + $0x68] sm:$0xff] %vm1773, %v2200
      %2270 = vst.msk [vmem:[%s457 + $0x70] sm:$0xff] %vm1773, %v2203
      %2271 = vst.msk [vmem:[%s457 + $0x78] sm:$0xff] %vm1773, %v2206
      %2272 = vst.msk [vmem:[%s457 + $0x80] sm:$0xff] %vm1773, %v2209
      %2273 = vst.msk [vmem:[%s457 + $0x88] sm:$0xff] %vm1773, %v2212
      %2274 = vst.msk [vmem:[%s457 + $0x90] sm:$0xff] %vm1773, %v2215
      %2275 = vst.msk [vmem:[%s457 + $0x98] sm:$0xff] %vm1773, %v2218
      %2276 = vst.msk [vmem:[%s457 + $0xa0] sm:$0xff] %vm1773, %v2221
      %2277 = vst.msk [vmem:[%s457 + $0xa8] sm:$0xff] %vm1773, %v2224
      %2278 = vst.msk [vmem:[%s457 + $0xb0] sm:$0xff] %vm1773, %v2227
      %2279 = vst.msk [vmem:[%s457 + $0xb8] sm:$0xff] %vm1773, %v2230
      %2280 = vst.msk [vmem:[%s457 + $0xc0] sm:$0xff] %vm1773, %v2233
      %2281 = vst.msk [vmem:[%s457 + $0xc8] sm:$0xff] %vm1773, %v2236
      %2282 = vst.msk [vmem:[%s457 + $0xd0] sm:$0xff] %vm1773, %v2239
      %2283 = vst.msk [vmem:[%s457 + $0xd8] sm:$0xff] %vm1773, %v2242
      %2284 = vst.msk [vmem:[%s457 + $0xe0] sm:$0xff] %vm1773, %v2245
      %2285 = vst.msk [vmem:[%s457 + $0xe8] sm:$0xff] %vm1773, %v2248
      %2286 = vst.msk [vmem:[%s457 + $0xf0] sm:$0xff] %vm1773, %v2251
      %2287 = vst.msk [vmem:[%s457 + $0xf8] sm:$0xff] %vm1773, %v2254
      %v2288 = vsel %vm1773, %v2161, 0.0
      %v2289 = vsel %vm1773, %v2164, 0.0
      %v2290 = vadd.f32 %v2288, %v2289
      %v2291 = vsel %vm1773, %v2167, 0.0
      %v2292 = vadd.f32 %v2290, %v2291
      %v2293 = vsel %vm1773, %v2170, 0.0
      %v2294 = vadd.f32 %v2292, %v2293
      %v2295 = vsel %vm1773, %v2173, 0.0
      %v2296 = vadd.f32 %v2294, %v2295
      %v2297 = vsel %vm1773, %v2176, 0.0
      %v2298 = vadd.f32 %v2296, %v2297
      %v2299 = vsel %vm1773, %v2179, 0.0
      %v2300 = vadd.f32 %v2298, %v2299
      %v2301 = vsel %vm1773, %v2182, 0.0
      %v2302 = vadd.f32 %v2300, %v2301
      %v2303 = vsel %vm1773, %v2185, 0.0
      %v2304 = vadd.f32 %v2302, %v2303
      %v2305 = vsel %vm1773, %v2188, 0.0
      %v2306 = vadd.f32 %v2304, %v2305
      %v2307 = vsel %vm1773, %v2191, 0.0
      %v2308 = vadd.f32 %v2306, %v2307
      %v2309 = vsel %vm1773, %v2194, 0.0
      %v2310 = vadd.f32 %v2308, %v2309
      %v2311 = vsel %vm1773, %v2197, 0.0
      %v2312 = vadd.f32 %v2310, %v2311
      %v2313 = vsel %vm1773, %v2200, 0.0
      %v2314 = vadd.f32 %v2312, %v2313
      %v2315 = vsel %vm1773, %v2203, 0.0
      %v2316 = vadd.f32 %v2314, %v2315
      %v2317 = vsel %vm1773, %v2206, 0.0
      %v2318 = vadd.f32 %v2316, %v2317
      %v2319 = vsel %vm1773, %v2209, 0.0
      %v2320 = vadd.f32 %v2318, %v2319
      %v2321 = vsel %vm1773, %v2212, 0.0
      %v2322 = vadd.f32 %v2320, %v2321
      %v2323 = vsel %vm1773, %v2215, 0.0
      %v2324 = vadd.f32 %v2322, %v2323
      %v2325 = vsel %vm1773, %v2218, 0.0
      %v2326 = vadd.f32 %v2324, %v2325
      %v2327 = vsel %vm1773, %v2221, 0.0
      %v2328 = vadd.f32 %v2326, %v2327
      %v2329 = vsel %vm1773, %v2224, 0.0
      %v2330 = vadd.f32 %v2328, %v2329
      %v2331 = vsel %vm1773, %v2227, 0.0
      %v2332 = vadd.f32 %v2330, %v2331
      %v2333 = vsel %vm1773, %v2230, 0.0
      %v2334 = vadd.f32 %v2332, %v2333
      %v2335 = vsel %vm1773, %v2233, 0.0
      %v2336 = vadd.f32 %v2334, %v2335
      %v2337 = vsel %vm1773, %v2236, 0.0
      %v2338 = vadd.f32 %v2336, %v2337
      %v2339 = vsel %vm1773, %v2239, 0.0
      %v2340 = vadd.f32 %v2338, %v2339
      %v2341 = vsel %vm1773, %v2242, 0.0
      %v2342 = vadd.f32 %v2340, %v2341
      %v2343 = vsel %vm1773, %v2245, 0.0
      %v2344 = vadd.f32 %v2342, %v2343
      %v2345 = vsel %vm1773, %v2248, 0.0
      %v2346 = vadd.f32 %v2344, %v2345
      %v2347 = vsel %vm1773, %v2251, 0.0
      %v2348 = vadd.f32 %v2346, %v2347
      %v2349 = vsel %vm1773, %v2254, 0.0
      %v2350 = vadd.f32 %v2348, %v2349
      %v2351 = vrot.slane %v2350, 4
      %v2352 = vadd.f32 %v2350, %v2351
      %v2353 = vrot.slane %v2352, 2
      %v2354 = vadd.f32 %v2352, %v2353
      %v2355 = vrot.slane %v2354, 1
      %v2356 = vadd.f32 %v2354, %v2355
      %v2357 = vmul.f32 %v2161, %v2161
      %v2358 = vmul.f32 %v2164, %v2164
      %v2359 = vmul.f32 %v2167, %v2167
      %v2360 = vmul.f32 %v2170, %v2170
      %v2361 = vmul.f32 %v2173, %v2173
      %v2362 = vmul.f32 %v2176, %v2176
      %v2363 = vmul.f32 %v2179, %v2179
      %v2364 = vmul.f32 %v2182, %v2182
      %v2365 = vmul.f32 %v2185, %v2185
      %v2366 = vmul.f32 %v2188, %v2188
      %v2367 = vmul.f32 %v2191, %v2191
      %v2368 = vmul.f32 %v2194, %v2194
      %v2369 = vmul.f32 %v2197, %v2197
      %v2370 = vmul.f32 %v2200, %v2200
      %v2371 = vmul.f32 %v2203, %v2203
      %v2372 = vmul.f32 %v2206, %v2206
      %v2373 = vmul.f32 %v2209, %v2209
      %v2374 = vmul.f32 %v2212, %v2212
      %v2375 = vmul.f32 %v2215, %v2215
      %v2376 = vmul.f32 %v2218, %v2218
      %v2377 = vmul.f32 %v2221, %v2221
      %v2378 = vmul.f32 %v2224, %v2224
      %v2379 = vmul.f32 %v2227, %v2227
      %v2380 = vmul.f32 %v2230, %v2230
      %v2381 = vmul.f32 %v2233, %v2233
      %v2382 = vmul.f32 %v2236, %v2236
      %v2383 = vmul.f32 %v2239, %v2239
      %v2384 = vmul.f32 %v2242, %v2242
      %v2385 = vmul.f32 %v2245, %v2245
      %v2386 = vmul.f32 %v2248, %v2248
      %v2387 = vmul.f32 %v2251, %v2251
      %v2388 = vmul.f32 %v2254, %v2254
      %v2389 = vsel %vm1773, %v2357, 0.0
      %v2390 = vsel %vm1773, %v2358, 0.0
      %v2391 = vadd.f32 %v2389, %v2390
      %v2392 = vsel %vm1773, %v2359, 0.0
      %v2393 = vadd.f32 %v2391, %v2392
      %v2394 = vsel %vm1773, %v2360, 0.0
      %v2395 = vadd.f32 %v2393, %v2394
      %v2396 = vsel %vm1773, %v2361, 0.0
      %v2397 = vadd.f32 %v2395, %v2396
      %v2398 = vsel %vm1773, %v2362, 0.0
      %v2399 = vadd.f32 %v2397, %v2398
      %v2400 = vsel %vm1773, %v2363, 0.0
      %v2401 = vadd.f32 %v2399, %v2400
      %v2402 = vsel %vm1773, %v2364, 0.0
      %v2403 = vadd.f32 %v2401, %v2402
      %v2404 = vsel %vm1773, %v2365, 0.0
      %v2405 = vadd.f32 %v2403, %v2404
      %v2406 = vsel %vm1773, %v2366, 0.0
      %v2407 = vadd.f32 %v2405, %v2406
      %v2408 = vsel %vm1773, %v2367, 0.0
      %v2409 = vadd.f32 %v2407, %v2408
      %v2410 = vsel %vm1773, %v2368, 0.0
      %v2411 = vadd.f32 %v2409, %v2410
      %v2412 = vsel %vm1773, %v2369, 0.0
      %v2413 = vadd.f32 %v2411, %v2412
      %v2414 = vsel %vm1773, %v2370, 0.0
      %v2415 = vadd.f32 %v2413, %v2414
      %v2416 = vsel %vm1773, %v2371, 0.0
      %v2417 = vadd.f32 %v2415, %v2416
      %v2418 = vsel %vm1773, %v2372, 0.0
      %v2419 = vadd.f32 %v2417, %v2418
      %v2420 = vsel %vm1773, %v2373, 0.0
      %v2421 = vadd.f32 %v2419, %v2420
      %v2422 = vsel %vm1773, %v2374, 0.0
      %v2423 = vadd.f32 %v2421, %v2422
      %v2424 = vsel %vm1773, %v2375, 0.0
      %v2425 = vadd.f32 %v2423, %v2424
      %v2426 = vsel %vm1773, %v2376, 0.0
      %v2427 = vadd.f32 %v2425, %v2426
      %v2428 = vsel %vm1773, %v2377, 0.0
      %v2429 = vadd.f32 %v2427, %v2428
      %v2430 = vsel %vm1773, %v2378, 0.0
      %v2431 = vadd.f32 %v2429, %v2430
      %v2432 = vsel %vm1773, %v2379, 0.0
      %v2433 = vadd.f32 %v2431, %v2432
      %v2434 = vsel %vm1773, %v2380, 0.0
      %v2435 = vadd.f32 %v2433, %v2434
      %v2436 = vsel %vm1773, %v2381, 0.0
      %v2437 = vadd.f32 %v2435, %v2436
      %v2438 = vsel %vm1773, %v2382, 0.0
      %v2439 = vadd.f32 %v2437, %v2438
      %v2440 = vsel %vm1773, %v2383, 0.0
      %v2441 = vadd.f32 %v2439, %v2440
      %v2442 = vsel %vm1773, %v2384, 0.0
      %v2443 = vadd.f32 %v2441, %v2442
      %v2444 = vsel %vm1773, %v2385, 0.0
      %v2445 = vadd.f32 %v2443, %v2444
      %v2446 = vsel %vm1773, %v2386, 0.0
      %v2447 = vadd.f32 %v2445, %v2446
      %v2448 = vsel %vm1773, %v2387, 0.0
      %v2449 = vadd.f32 %v2447, %v2448
      %v2450 = vsel %vm1773, %v2388, 0.0
      %v2451 = vadd.f32 %v2449, %v2450
      %v2452 = vrot.slane %v2451, 4
      %v2453 = vadd.f32 %v2451, %v2452
      %v2454 = vrot.slane %v2453, 2
      %v2455 = vadd.f32 %v2453, %v2454
      %v2456 = vrot.slane %v2455, 1
      %v2457 = vadd.f32 %v2455, %v2456
      %vm2458 = vcmask 1040384
      %v2459 = vsel %vm2458, %v2356, %v2457
      %vm2460 = vcmask 58368
      %2461 = vst.msk [vmem:[%s465] sm:$0x3] %vm2460, %v2459
      %s2462 = smul.u32 16, %s24
      %p2463 = scmp.lt.s32.totalorder %s23, 1
      %s2464 = scalar_select %p2463, %s23, 1
      %p2465 = scmp.lt.s32.totalorder %s2462, 15
      %s2466 = scalar_select %p2465, %s2462, 15
      %s2467 = smul.addr %s2466, 2
      %s2468 = smul.addr %s2464, 32
      %s2469 = sadd.s32 %s2467, %s2468
      %s2470 = smul.addr %s2469, 8
      %s2471 = scalar_lea.vmem %s6, %s2470
      %p2472 = scmp.lt.s32.totalorder %s23, 1
      %s2473 = scalar_select %p2472, %s23, 1
      %p2474 = scmp.lt.s32.totalorder %s24, 0
      %s2475 = scalar_select %p2474, %s24, 0
      %s2476 = sadd.s32 %s2475, %s2473
      %s2477 = smul.addr %s2476, 2
      %s2478 = scalar_lea.vmem %s7, %s2477
      // Predicated region
      $region45: #{bottleneck_forward.4} parent=43 // pred_check
        %p2479 = pneg %p214
      $region46: #{bottleneck_forward.4} parent=43 // pred_check_branch
        %2481 = sbr.rel (%p2479) target = $region48
      $region47: #{bottleneck_forward.4} parent=43 // pred_region
        %s2482 = smul.u32 16, %s24
      $region48: #{bottleneck_forward.4} parent=43 // pred_fallthru
        _
      // Predicated region
      $region49: #{bottleneck_forward.4} parent=43 // pred_check
        %p2483 = pneg %p242
      $region50: #{bottleneck_forward.4} parent=43 // pred_check_branch
        %2485 = sbr.rel (%p2483) target = $region52
      $region51: #{bottleneck_forward.4} parent=43 // pred_region
        _
      $region52: #{bottleneck_forward.4} parent=43 // pred_fallthru
        _
    $region44: #{bottleneck_forward.4} parent=5 // pred_fallthru
      _
    %p2486 = scmp.le.s32.totalorder 2, %s14
    // Predicated region
    $region53: #{bottleneck_forward.4} parent=5 // pred_check
      %p2487 = pneg %p2486
    $region54: #{bottleneck_forward.4} parent=5 // pred_check_branch
      %2489 = sbr.rel (%p2487) target = $region56
    $region55: #{bottleneck_forward.4} parent=5 // pred_region
      %s2490 = ssub.s32 %s14, 2
      // Predicated region
      $region57: #{bottleneck_forward.4} parent=55 // pred_check
        %p2491 = pneg %p220
      $region58: #{bottleneck_forward.4} parent=55 // pred_check_branch
        %2493 = sbr.rel (%p2491) target = $region60
      $region59: #{bottleneck_forward.4} parent=55 // pred_region
        %s2494 = smul.u32 16, %s26
        %p2495 = scmp.lt.s32.totalorder %s25, 1
        %s2496 = scalar_select %p2495, %s25, 1
        %p2497 = scmp.lt.s32.totalorder %s2494, 15
        %s2498 = scalar_select %p2497, %s2494, 15
        %s2499 = smul.addr %s2498, 2
        %s2500 = smul.addr %s2496, 32
        %s2501 = sadd.s32 %s2499, %s2500
        %s2502 = smul.addr %s2501, 8
        %s2503 = scalar_lea.vmem %s6, %s2502
      $region60: #{bottleneck_forward.4} parent=55 // pred_fallthru
        _
      // Predicated region
      $region61: #{bottleneck_forward.4} parent=55 // pred_check
        %p2504 = pneg %p248
      $region62: #{bottleneck_forward.4} parent=55 // pred_check_branch
        %2506 = sbr.rel (%p2504) target = $region64
      $region63: #{bottleneck_forward.4} parent=55 // pred_region
        %p2507 = scmp.lt.s32.totalorder %s25, 1
        %s2508 = scalar_select %p2507, %s25, 1
        %p2509 = scmp.lt.s32.totalorder %s26, 0
        %s2510 = scalar_select %p2509, %s26, 0
        %s2511 = sadd.s32 %s2510, %s2508
        %s2512 = smul.addr %s2511, 2
        %s2513 = scalar_lea.vmem %s7, %s2512
      $region64: #{bottleneck_forward.4} parent=55 // pred_fallthru
        _
    $region56: #{bottleneck_forward.4} parent=5 // pred_fallthru
      _
  $region6: #{bottleneck_forward.4} parent=0 // loop_footer
    %s18 = sadd.s32 1, %s14
  $region7: #{bottleneck_forward.4} parent=0 // loop_footer_branch
    %13 = sbr.rel target = $region3
  $region8: #{bottleneck_forward.4} parent=0 // loop_exit
    _

</llo_original>
